<compile_context>
chip_gen: v7x
topology: tpu7x:2x2x1
jax: 0.10.0
libtpu: 0.0.40
codegen_flags: <defaults>
</compile_context>

<pallas_src>
import functools

import jax
import jax.numpy as jnp
import numpy as np
from jax import lax
from jax.experimental import pallas as pl
from jax.experimental.pallas import tpu as pltpu

# ---------------------------------------------------------------- config -----
NUM_CLASSES = 2          # EResFD face detector: background + face
CONF_THRESH = 0.05
NMS_THRESH = 0.3
TOP_K = 5
VARIANCE = (0.1, 0.2)
N_CANDIDATES = 128       # lane-aligned top-N pre-selection for NMS
                         # TODO(synk): replaces the reference nms_top_k cap.

_LANES = 128
_VMEM_LIMIT = 32 * 1024 * 1024  # safe on v7x (64 MiB physical) as well


def _round_up(x, m):
    return ((x + m - 1) // m) * m


# ------------------------------------------------ kernel 1: SSD box decode ---
# Interleaved layout: lane l of a row holds coord (l % 4) of prior (l // 4)
# of that row; a row of 128 lanes == 32 complete priors.
#   A (prior)  : (cx, cy,  w,  h)      per prior
#   B (coeff)  : (v0*w, v0*h, v1, v1)  per prior  (precomputed in the wrapper)
#   loc        : (dx, dy, dw, dh)      per prior
# Decoded (center-size) box, per lane:
#   xy lanes : A + loc * B   = pcx + dx*v0*pw          (cx', cy')
#   wh lanes : A * exp(loc*B)= pw * exp(dw*v1)         (w',  h')
def _decode_kernel(loc_ref, a_ref, b_ref, out_ref):
    loc = loc_ref[0]        # [St, 128]
    a = a_ref[...]          # [St, 128]
    b = b_ref[...]          # [St, 128]

    st, ln = loc.shape
    lane = lax.broadcasted_iota(jnp.int32, (st, ln), 1)
    is_xy = (lane % 4) < 2                       # lanes holding cx/cy

    lb = loc * b
    out_ref[0] = jnp.where(is_xy, a + lb, a * jnp.exp(lb))


def _run_decode_kernel(loc_i, prior_a, prior_b, *, sub_tile):
    """loc_i:[num,S,128]  prior_a/b:[S,128]  ->  boxes_i:[num,S,128] (cx,cy,w,h)."""
    num, S, _ = loc_i.shape
    St = sub_tile
    return pl.pallas_call(
        _decode_kernel,
        grid=(num, S // St),
        in_specs=[
            pl.BlockSpec((1, St, _LANES), lambda i, j: (i, j, 0)),
            pl.BlockSpec((St, _LANES), lambda i, j: (j, 0)),
            pl.BlockSpec((St, _LANES), lambda i, j: (j, 0)),
        ],
        out_specs=pl.BlockSpec((1, St, _LANES), lambda i, j: (i, j, 0)),
        out_shape=jax.ShapeDtypeStruct((num, S, _LANES), jnp.float32),
        compiler_params=pltpu.CompilerParams(
            dimension_semantics=("parallel", "parallel"),
            vmem_limit_bytes=_VMEM_LIMIT),
    )(loc_i, prior_a, prior_b)


# --------------------------------------------- kernel 2: fused greedy NMS ----
# Per (image, foreground-class) group: N candidate boxes in (cx,cy,w,h) row
# layout + their (thresholded) scores.  top_k static steps of
# argmax -> IoU row -> suppress, emitting only the [top_k, 5] detection rows.
def _nms_kernel(conf_thresh, nms_thresh, top_k,
                scores_ref, boxes_ref, out_ref):
    scores = scores_ref[:, 0, :]                 # [Gb, N]
    cx = boxes_ref[:, 0, :]
    cy = boxes_ref[:, 1, :]
    w = boxes_ref[:, 2, :]
    h = boxes_ref[:, 3, :]

    # center-size -> corners (same op order as the reference decode)
    xmin = cx - 0.5 * w
    ymin = cy - 0.5 * h
    xmax = xmin + w
    ymax = ymin + h
    areas = (xmax - xmin) * (ymax - ymin)

    gb, n = scores.shape
    lane = lax.broadcasted_iota(jnp.int32, (gb, n), 1).astype(jnp.float32)
    out_lane = lax.broadcasted_iota(jnp.int32, (gb, 5), 1)

    for s in range(top_k):                       # static unroll (top_k small)
        max_sc = jnp.max(scores, axis=-1, keepdims=True)             # [Gb,1]
        # lowest-index tie-break, like the reference argmax
        idx = jnp.min(jnp.where(scores >= max_sc, lane, float(n)),
                      axis=-1, keepdims=True)                        # [Gb,1]
        onehot = lane == idx                                         # [Gb,N]

        def pick(v):
            return jnp.sum(jnp.where(onehot, v, 0.0), axis=-1, keepdims=True)
        bxmin, bymin = pick(xmin), pick(ymin)
        bxmax, bymax = pick(xmax), pick(ymax)
        barea = (bxmax - bxmin) * (bymax - bymin)

        iw = jnp.maximum(jnp.minimum(xmax, bxmax) - jnp.maximum(xmin, bxmin), 0.0)
        ih = jnp.maximum(jnp.minimum(ymax, bymax) - jnp.maximum(ymin, bymin), 0.0)
        inter = iw * ih
        union = jnp.maximum(areas + barea - inter, 1e-12)
        iou = inter * pl.reciprocal(union, approx=True)              # EUP slot

        valid = max_sc > conf_thresh                                 # [Gb,1]
        # build (score, xmin, ymin, xmax, ymax) via lane selects (no concat)
        row = (jnp.where(out_lane == 0, max_sc, 0.0)
               + jnp.where(out_lane == 1, bxmin, 0.0)
               + jnp.where(out_lane == 2, bymin, 0.0)
               + jnp.where(out_lane == 3, bxmax, 0.0)
               + jnp.where(out_lane == 4, bymax, 0.0))
        out_ref[:, s, :] = jnp.where(valid, row, 0.0)

        suppress = onehot | (iou > nms_thresh)
        scores = jnp.where(valid & suppress, 0.0, scores)


def _run_nms_kernel(scores, boxes, *, conf_thresh, nms_thresh, top_k, group_block):
    """scores:[G,1,N]  boxes:[G,4,N] (cx,cy,w,h rows)  ->  dets:[G,top_k,5]."""
    G, _, N = scores.shape
    Gb = group_block
    kernel = functools.partial(_nms_kernel, float(conf_thresh),
                               float(nms_thresh), int(top_k))
    return pl.pallas_call(
        kernel,
        grid=(G // Gb,),
        in_specs=[
            pl.BlockSpec((Gb, 1, N), lambda g: (g, 0, 0)),
            pl.BlockSpec((Gb, 4, N), lambda g: (g, 0, 0)),
        ],
        out_specs=pl.BlockSpec((Gb, top_k, 5), lambda g: (g, 0, 0)),
        out_shape=jax.ShapeDtypeStruct((G, top_k, 5), jnp.float32),
        compiler_params=pltpu.CompilerParams(
            dimension_semantics=("parallel",),
            vmem_limit_bytes=_VMEM_LIMIT),
    )(scores, boxes)


# ----------------------------------------------------------------- forward ---
def detect_forward(loc_data, conf_data, prior_data, *,
                   num_classes=NUM_CLASSES, conf_thresh=CONF_THRESH,
                   nms_thresh=NMS_THRESH, top_k=TOP_K, variance=VARIANCE,
                   n_candidates=N_CANDIDATES, return_aux=False):
    """loc_data:[num, P*4]  conf_data:[num*P, C]  prior_data:[P, 4] (or [1,P,4])
       returns [num, num_classes, top_k, 5] rows = (score, xmin, ymin, xmax, ymax)."""
    if prior_data.ndim == 3:
        prior_data = prior_data.reshape(-1, 4)
    P = prior_data.shape[0]
    num = loc_data.shape[0]
    Cf = num_classes - 1
    v0, v1 = float(variance[0]), float(variance[1])

    loc_flat = loc_data.reshape(num, P * 4).astype(jnp.float32)
    conf = conf_data.reshape(num, P, num_classes).astype(jnp.float32)
    prior = prior_data.astype(jnp.float32)

    # ---- pad the prior axis so the interleaved view tiles as (St, 128) -----
    if P <= 2048:
        P_pad = _round_up(P, 256)       # S multiple of 8, single tile per image
    else:
        P_pad = _round_up(P, 2048)      # S multiple of 64
    S = (P_pad * 4) // _LANES
    St = S if S <= 64 else 64

    if P_pad > P:
        loc_flat = jnp.pad(loc_flat, ((0, 0), (0, 4 * (P_pad - P))))
        pad_prior = jnp.tile(jnp.array([[0.5, 0.5, 1e-4, 1e-4]], jnp.float32),
                             (P_pad - P, 1))
        prior = jnp.concatenate([prior, pad_prior], axis=0)

    loc_i = loc_flat.reshape(num, S, _LANES)
    prior_a = prior.reshape(S, _LANES)                                   # (cx,cy,w,h)
    prior_b = jnp.concatenate(
        [prior[:, 2:4] * v0, jnp.full((P_pad, 2), v1, jnp.float32)],
        axis=1).reshape(S, _LANES)                                       # (v0*w,v0*h,v1,v1)

    # ---- kernel 1: decode all boxes (center-size, interleaved layout) ------
    boxes_i = _run_decode_kernel(loc_i, prior_a, prior_b, sub_tile=St)
    boxes_dec = boxes_i.reshape(num, P_pad, 4)                           # (cx,cy,w,h)

    # ---- foreground scores + top-N candidate pre-selection -----------------
    if num_classes == 2:
        fg_scores = conf[:, :, 1][:, None, :]            # [num, 1, P]  no transpose
    else:
        # TODO(synk): multi-class path needs one small transpose of conf.
        fg_scores = jnp.moveaxis(conf[:, :, 1:], -1, 1)  # [num, Cf, P]

    N = int(min(n_candidates, P))
    top_scores, top_idx = lax.approx_max_k(fg_scores, N)       # [num, Cf, N]
    top_scores = jnp.where(top_scores > conf_thresh, top_scores, 0.0)

    cand = jnp.take_along_axis(boxes_dec[:, None, :, :],
                               top_idx[:, :, :, None], axis=2,
                               mode="clip")                     # [num, Cf, N, 4]
    cand_r = jnp.swapaxes(cand, 2, 3)                           # [num, Cf, 4, N]

    # ---- group-batch + lane padding for the NMS kernel ----------------------
    G = num * Cf
    N_pad = _round_up(N, _LANES)
    Gb = min(8, max(1, G // 2)) if G > 1 else 1    # >=2 grid steps (v7x megacore)
    G_pad = _round_up(G, Gb)

    cand_scores = top_scores.reshape(G, 1, N)
    cand_boxes = cand_r.reshape(G, 4, N)
    if N_pad > N:
        cand_scores = jnp.pad(cand_scores, ((0, 0), (0, 0), (0, N_pad - N)))
        cand_boxes = jnp.pad(cand_boxes, ((0, 0), (0, 0), (0, N_pad - N)))
    if G_pad > G:
        cand_scores = jnp.pad(cand_scores, ((0, G_pad - G), (0, 0), (0, 0)))
        cand_boxes = jnp.pad(cand_boxes, ((0, G_pad - G), (0, 0), (0, 0)))

    # ---- kernel 2: fused greedy NMS (no [N,N] IoU materialization) ----------
    dets = _run_nms_kernel(cand_scores, cand_boxes,
                           conf_thresh=conf_thresh, nms_thresh=nms_thresh,
                           top_k=top_k, group_block=Gb)         # [G_pad, top_k, 5]

    fg = dets[:G].reshape(num, Cf, top_k, 5)
    bg = jnp.zeros((num, 1, top_k, 5), jnp.float32)
    out = jnp.concatenate([bg, fg], axis=1)                     # [num, C, top_k, 5]
    if return_aux:
        return out, boxes_dec, cand_scores, cand_boxes, dets
    return out


# --------------------------------------------------------------------- main --
if __name__ == "__main__":
    key = jax.random.PRNGKey(0)
    num = 2
    num_priors = 256
    k1, k2, k3, k4 = jax.random.split(key, 4)

    loc_data = 0.5 * jax.random.normal(k1, (num, num_priors * 4), jnp.float32)
    conf_data = jax.nn.softmax(
        jax.random.normal(k2, (num * num_priors, NUM_CLASSES), jnp.float32), axis=-1)
    centers = jax.random.uniform(k3, (num_priors, 2), jnp.float32, 0.1, 0.9)
    sizes = jax.random.uniform(k4, (num_priors, 2), jnp.float32, 0.05, 0.3)
    prior_data = jnp.concatenate([centers, sizes], axis=1)

    fwd = jax.jit(functools.partial(detect_forward, return_aux=True))
    out, boxes_dec, cand_scores, cand_boxes, dets = jax.block_until_ready(
        fwd(loc_data, conf_data, prior_data))

    assert out.shape == (num, NUM_CLASSES, TOP_K, 5)
    assert bool(jnp.all(jnp.isfinite(out)))

    # ---- reference check 1: SSD decode (kernel 1), center-size form --------
    v0, v1 = VARIANCE
    loc_np = np.asarray(loc_data, np.float32).reshape(num, num_priors, 4)
    pr_np = np.asarray(prior_data, np.float32)
    ref_cx = pr_np[:, 0] + loc_np[..., 0] * (v0 * pr_np[:, 2])
    ref_cy = pr_np[:, 1] + loc_np[..., 1] * (v0 * pr_np[:, 3])
    ref_w = pr_np[:, 2] * np.exp(loc_np[..., 2] * v1)
    ref_h = pr_np[:, 3] * np.exp(loc_np[..., 3] * v1)
    ref_cs = np.stack([ref_cx, ref_cy, ref_w, ref_h], axis=-1)
    np.testing.assert_allclose(np.asarray(boxes_dec)[:, :num_priors, :],
                               ref_cs, rtol=1e-3, atol=1e-5)

    # ---- reference check 2: fused greedy NMS (kernel 2) ---------------------
    sc_np = np.asarray(cand_scores)[:, 0, :]
    bx_np = np.asarray(cand_boxes)
    det_np = np.asarray(dets)
    for g in range(sc_np.shape[0]):
        s = sc_np[g].copy()
        cxv, cyv, wv, hv = bx_np[g]
        x1 = cxv - 0.5 * wv
        y1 = cyv - 0.5 * hv
        x2 = x1 + wv
        y2 = y1 + hv
        areas = (x2 - x1) * (y2 - y1)
        ref = np.zeros((TOP_K, 5), np.float32)
        for t in range(TOP_K):
            i = int(np.argmax(s))
            if s[i] <= CONF_THRESH:
                break
            ref[t] = [s[i], x1[i], y1[i], x2[i], y2[i]]
            iw = np.maximum(np.minimum(x2, x2[i]) - np.maximum(x1, x1[i]), 0.0)
            ih = np.maximum(np.minimum(y2, y2[i]) - np.maximum(y1, y1[i]), 0.0)
            inter = iw * ih
            iou = inter / np.maximum(areas + areas[i] - inter, 1e-12)
            s = np.where((iou > NMS_THRESH) | (np.arange(s.shape[0]) == i), 0.0, s)
        np.testing.assert_allclose(det_np[g], ref, rtol=1e-4, atol=1e-5)

    print("KERNEL_OK")
</pallas_src>

<mosaic_0001>
module attributes {stable_mosaic.version = 11 : i64} {
  func.func @_decode_kernel(%arg0: i32, %arg1: i32, %arg2: memref<1x8x128xf32, #tpu.memory_space<vmem>>, %arg3: memref<8x128xf32, #tpu.memory_space<vmem>>, %arg4: memref<8x128xf32, #tpu.memory_space<vmem>>, %arg5: memref<1x8x128xf32, #tpu.memory_space<vmem>>) attributes {dimension_semantics = [#tpu.dimension_semantics<parallel>, #tpu.dimension_semantics<parallel>], iteration_bounds = array<i64: 2, 1>, scalar_prefetch = 0 : i64, scratch_operands = 0 : i64, tpu.core_type = #tpu.core_type<tc>, window_params = [{transform_indices = @transform_0, window_bounds = array<i64: 1, 8, 128>}, {transform_indices = @transform_1, window_bounds = array<i64: 8, 128>}, {transform_indices = @transform_2, window_bounds = array<i64: 8, 128>}, {transform_indices = @transform_3, window_bounds = array<i64: 1, 8, 128>}]} {
    %c0 = arith.constant 0 : index
    %c0_0 = arith.constant 0 : index
    %c0_1 = arith.constant 0 : index
    %0 = vector.load %arg2[%c0, %c0_0, %c0_1] : memref<1x8x128xf32, #tpu.memory_space<vmem>>, vector<1x8x128xf32>
    %1 = vector.shape_cast %0 : vector<1x8x128xf32> to vector<8x128xf32>
    %c0_2 = arith.constant 0 : index
    %c0_3 = arith.constant 0 : index
    %2 = vector.load %arg3[%c0_2, %c0_3] : memref<8x128xf32, #tpu.memory_space<vmem>>, vector<8x128xf32>
    %c0_4 = arith.constant 0 : index
    %c0_5 = arith.constant 0 : index
    %3 = vector.load %arg4[%c0_4, %c0_5] : memref<8x128xf32, #tpu.memory_space<vmem>>, vector<8x128xf32>
    %4 = tpu.iota {dimensions = array<i32: 1>} : vector<8x128xi32>
    %c4_i32 = arith.constant 4 : i32
    %c0_i32 = arith.constant 0 : i32
    %5 = arith.cmpi eq, %c4_i32, %c0_i32 : i32
    %c1_i32 = arith.constant 1 : i32
    %6 = arith.select %5, %c1_i32, %c4_i32 : i32
    %7 = vector.broadcast %6 : i32 to vector<8x128xi32>
    %8 = arith.remsi %4, %7 : vector<8x128xi32>
    %c0_i32_6 = arith.constant 0 : i32
    %9 = vector.broadcast %c0_i32_6 : i32 to vector<8x128xi32>
    %10 = arith.cmpi ne, %8, %9 : vector<8x128xi32>
    %c0_i32_7 = arith.constant 0 : i32
    %11 = vector.broadcast %c0_i32_7 : i32 to vector<8x128xi32>
    %12 = arith.cmpi slt, %8, %11 : vector<8x128xi32>
    %c0_i32_8 = arith.constant 0 : i32
    %13 = arith.cmpi slt, %6, %c0_i32_8 : i32
    %14 = vector.broadcast %13 : i1 to vector<8x128xi1>
    %15 = vector.broadcast %14 : vector<8x128xi1> to vector<8x128xi1>
    %16 = arith.xori %12, %15 : vector<8x128xi1>
    %17 = arith.andi %16, %10 : vector<8x128xi1>
    %18 = vector.broadcast %6 : i32 to vector<8x128xi32>
    %19 = arith.addi %8, %18 : vector<8x128xi32>
    %20 = arith.select %17, %19, %8 : vector<8x128xi1>, vector<8x128xi32>
    %c2_i32 = arith.constant 2 : i32
    %21 = vector.broadcast %c2_i32 : i32 to vector<8x128xi32>
    %22 = arith.cmpi slt, %20, %21 : vector<8x128xi32>
    %23 = arith.mulf %1, %3 : vector<8x128xf32>
    %24 = arith.addf %2, %23 : vector<8x128xf32>
    %25 = math.exp %23 : vector<8x128xf32>
    %26 = arith.mulf %2, %25 : vector<8x128xf32>
    %27 = arith.select %22, %24, %26 : vector<8x128xi1>, vector<8x128xf32>
    %c0_9 = arith.constant 0 : index
    %c0_10 = arith.constant 0 : index
    %c0_11 = arith.constant 0 : index
    %28 = vector.load %arg5[%c0_9, %c0_10, %c0_11] : memref<1x8x128xf32, #tpu.memory_space<vmem>>, vector<1x8x128xf32>
    %29 = vector.shape_cast %28 : vector<1x8x128xf32> to vector<8x128xf32>
    %30 = vector.shape_cast %27 : vector<8x128xf32> to vector<1x8x128xf32>
    tpu.vector_store %arg5[%c0_9, %c0_10, %c0_11], %30 {strides = array<i32>} : memref<1x8x128xf32, #tpu.memory_space<vmem>>, vector<1x8x128xf32>,
    return
  }
  func.func @transform_0(%arg0: i32, %arg1: i32) -> (i32, i32, i32) {
    %c0_i32 = arith.constant 0 : i32
    %c0_i32_0 = arith.constant 0 : i32
    return %arg0, %arg1, %c0_i32 : i32, i32, i32
  }
  func.func @transform_1(%arg0: i32, %arg1: i32) -> (i32, i32) {
    %c0_i32 = arith.constant 0 : i32
    %c0_i32_0 = arith.constant 0 : i32
    return %arg1, %c0_i32 : i32, i32
  }
  func.func @transform_2(%arg0: i32, %arg1: i32) -> (i32, i32) {
    %c0_i32 = arith.constant 0 : i32
    %c0_i32_0 = arith.constant 0 : i32
    return %arg1, %c0_i32 : i32, i32
  }
  func.func @transform_3(%arg0: i32, %arg1: i32) -> (i32, i32, i32) {
    %c0_i32 = arith.constant 0 : i32
    %c0_i32_0 = arith.constant 0 : i32
    return %arg0, %arg1, %c0_i32 : i32, i32, i32
  }
}

module attributes {stable_mosaic.version = 11 : i64} {
  func.func @_nms_kernel(%arg0: i32, %arg1: memref<1x1x128xf32, #tpu.memory_space<vmem>>, %arg2: memref<1x4x128xf32, #tpu.memory_space<vmem>>, %arg3: memref<1x5x5xf32, #tpu.memory_space<vmem>>) attributes {dimension_semantics = [#tpu.dimension_semantics<parallel>], iteration_bounds = array<i64: 2>, scalar_prefetch = 0 : i64, scratch_operands = 0 : i64, tpu.core_type = #tpu.core_type<tc>, window_params = [{transform_indices = @transform_0, window_bounds = array<i64: 1, 1, 128>}, {transform_indices = @transform_1, window_bounds = array<i64: 1, 4, 128>}, {transform_indices = @transform_2, window_bounds = array<i64: 1, 5, 5>}]} {
    %c0 = arith.constant 0 : index
    %c0_0 = arith.constant 0 : index
    %c0_1 = arith.constant 0 : index
    %0 = vector.load %arg1[%c0, %c0_0, %c0_1] : memref<1x1x128xf32, #tpu.memory_space<vmem>>, vector<1x1x128xf32>
    %1 = vector.shape_cast %0 : vector<1x1x128xf32> to vector<1x128xf32>
    %c0_2 = arith.constant 0 : index
    %c0_3 = arith.constant 0 : index
    %c0_4 = arith.constant 0 : index
    %2 = vector.load %arg2[%c0_2, %c0_3, %c0_4] : memref<1x4x128xf32, #tpu.memory_space<vmem>>, vector<1x1x128xf32>
    %3 = vector.shape_cast %2 : vector<1x1x128xf32> to vector<1x128xf32>
    %c0_5 = arith.constant 0 : index
    %c1 = arith.constant 1 : index
    %c0_6 = arith.constant 0 : index
    %4 = vector.load %arg2[%c0_5, %c1, %c0_6] : memref<1x4x128xf32, #tpu.memory_space<vmem>>, vector<1x1x128xf32>
    %5 = vector.shape_cast %4 : vector<1x1x128xf32> to vector<1x128xf32>
    %c0_7 = arith.constant 0 : index
    %c2 = arith.constant 2 : index
    %c0_8 = arith.constant 0 : index
    %6 = vector.load %arg2[%c0_7, %c2, %c0_8] : memref<1x4x128xf32, #tpu.memory_space<vmem>>, vector<1x1x128xf32>
    %7 = vector.shape_cast %6 : vector<1x1x128xf32> to vector<1x128xf32>
    %c0_9 = arith.constant 0 : index
    %c3 = arith.constant 3 : index
    %c0_10 = arith.constant 0 : index
    %8 = vector.load %arg2[%c0_9, %c3, %c0_10] : memref<1x4x128xf32, #tpu.memory_space<vmem>>, vector<1x1x128xf32>
    %9 = vector.shape_cast %8 : vector<1x1x128xf32> to vector<1x128xf32>
    %cst = arith.constant 5.000000e-01 : f32
    %10 = vector.broadcast %cst : f32 to vector<1x128xf32>
    %11 = arith.mulf %10, %7 : vector<1x128xf32>
    %12 = arith.subf %3, %11 : vector<1x128xf32>
    %cst_11 = arith.constant 5.000000e-01 : f32
    %13 = vector.broadcast %cst_11 : f32 to vector<1x128xf32>
    %14 = arith.mulf %13, %9 : vector<1x128xf32>
    %15 = arith.subf %5, %14 : vector<1x128xf32>
    %16 = arith.addf %12, %7 : vector<1x128xf32>
    %17 = arith.addf %15, %9 : vector<1x128xf32>
    %18 = arith.subf %16, %12 : vector<1x128xf32>
    %19 = arith.subf %17, %15 : vector<1x128xf32>
    %20 = arith.mulf %18, %19 : vector<1x128xf32>
    %21 = tpu.iota {dimensions = array<i32: 1>} : vector<1x128xi32>
    %22 = arith.sitofp %21 : vector<1x128xi32> to vector<1x128xf32>
    %23 = tpu.iota {dimensions = array<i32: 1>} : vector<1x5xi32>
    %cst_12 = arith.constant dense<0xFF800000> : vector<1xf32>
    %24 = vector.multi_reduction <maximumf>, %1, %cst_12 [1] : vector<1x128xf32> to vector<1xf32>
    %25 = vector.shape_cast %24 : vector<1xf32> to vector<1x1xf32>
    %26 = vector.broadcast %25 : vector<1x1xf32> to vector<1x128xf32>
    %27 = arith.cmpf oge, %1, %26 : vector<1x128xf32>
    %cst_13 = arith.constant 1.280000e+02 : f32
    %28 = vector.broadcast %cst_13 : f32 to vector<1x128xf32>
    %29 = arith.select %27, %22, %28 : vector<1x128xi1>, vector<1x128xf32>
    %cst_14 = arith.constant dense<0x7F800000> : vector<1xf32>
    %30 = vector.multi_reduction <minimumf>, %29, %cst_14 [1] : vector<1x128xf32> to vector<1xf32>
    %31 = vector.shape_cast %30 : vector<1xf32> to vector<1x1xf32>
    %32 = vector.broadcast %31 : vector<1x1xf32> to vector<1x128xf32>
    %33 = arith.cmpf oeq, %22, %32 : vector<1x128xf32>
    %cst_15 = arith.constant 0.000000e+00 : f32
    %34 = vector.broadcast %cst_15 : f32 to vector<1x128xf32>
    %35 = arith.select %33, %12, %34 : vector<1x128xi1>, vector<1x128xf32>
    %cst_16 = arith.constant dense<0.000000e+00> : vector<1xf32>
    %36 = vector.multi_reduction <add>, %35, %cst_16 [1] : vector<1x128xf32> to vector<1xf32>
    %37 = vector.shape_cast %36 : vector<1xf32> to vector<1x1xf32>
    %cst_17 = arith.constant 0.000000e+00 : f32
    %38 = vector.broadcast %cst_17 : f32 to vector<1x128xf32>
    %39 = arith.select %33, %15, %38 : vector<1x128xi1>, vector<1x128xf32>
    %cst_18 = arith.constant dense<0.000000e+00> : vector<1xf32>
    %40 = vector.multi_reduction <add>, %39, %cst_18 [1] : vector<1x128xf32> to vector<1xf32>
    %41 = vector.shape_cast %40 : vector<1xf32> to vector<1x1xf32>
    %cst_19 = arith.constant 0.000000e+00 : f32
    %42 = vector.broadcast %cst_19 : f32 to vector<1x128xf32>
    %43 = arith.select %33, %16, %42 : vector<1x128xi1>, vector<1x128xf32>
    %cst_20 = arith.constant dense<0.000000e+00> : vector<1xf32>
    %44 = vector.multi_reduction <add>, %43, %cst_20 [1] : vector<1x128xf32> to vector<1xf32>
    %45 = vector.shape_cast %44 : vector<1xf32> to vector<1x1xf32>
    %cst_21 = arith.constant 0.000000e+00 : f32
    %46 = vector.broadcast %cst_21 : f32 to vector<1x128xf32>
    %47 = arith.select %33, %17, %46 : vector<1x128xi1>, vector<1x128xf32>
    %cst_22 = arith.constant dense<0.000000e+00> : vector<1xf32>
    %48 = vector.multi_reduction <add>, %47, %cst_22 [1] : vector<1x128xf32> to vector<1xf32>
    %49 = vector.shape_cast %48 : vector<1xf32> to vector<1x1xf32>
    %50 = arith.subf %45, %37 : vector<1x1xf32>
    %51 = arith.subf %49, %41 : vector<1x1xf32>
    %52 = arith.mulf %50, %51 : vector<1x1xf32>
    %53 = vector.broadcast %45 : vector<1x1xf32> to vector<1x128xf32>
    %54 = arith.minimumf %16, %53 : vector<1x128xf32>
    %55 = vector.broadcast %37 : vector<1x1xf32> to vector<1x128xf32>
    %56 = arith.maximumf %12, %55 : vector<1x128xf32>
    %57 = arith.subf %54, %56 : vector<1x128xf32>
    %cst_23 = arith.constant 0.000000e+00 : f32
    %58 = vector.broadcast %cst_23 : f32 to vector<1x128xf32>
    %59 = arith.maximumf %57, %58 : vector<1x128xf32>
    %60 = vector.broadcast %49 : vector<1x1xf32> to vector<1x128xf32>
    %61 = arith.minimumf %17, %60 : vector<1x128xf32>
    %62 = vector.broadcast %41 : vector<1x1xf32> to vector<1x128xf32>
    %63 = arith.maximumf %15, %62 : vector<1x128xf32>
    %64 = arith.subf %61, %63 : vector<1x128xf32>
    %cst_24 = arith.constant 0.000000e+00 : f32
    %65 = vector.broadcast %cst_24 : f32 to vector<1x128xf32>
    %66 = arith.maximumf %64, %65 : vector<1x128xf32>
    %67 = arith.mulf %59, %66 : vector<1x128xf32>
    %68 = vector.broadcast %52 : vector<1x1xf32> to vector<1x128xf32>
    %69 = arith.addf %20, %68 : vector<1x128xf32>
    %70 = arith.subf %69, %67 : vector<1x128xf32>
    %cst_25 = arith.constant 9.99999996E-13 : f32
    %71 = vector.broadcast %cst_25 : f32 to vector<1x128xf32>
    %72 = arith.maximumf %70, %71 : vector<1x128xf32>
    %73 = tpu.reciprocal %72 {approx = true} : vector<1x128xf32> -> vector<1x128xf32>
    %74 = arith.mulf %67, %73 : vector<1x128xf32>
    %cst_26 = arith.constant 5.000000e-02 : f32
    %75 = vector.broadcast %cst_26 : f32 to vector<1x1xf32>
    %76 = arith.cmpf ogt, %25, %75 : vector<1x1xf32>
    %c0_i32 = arith.constant 0 : i32
    %77 = vector.broadcast %c0_i32 : i32 to vector<1x5xi32>
    %78 = arith.cmpi eq, %23, %77 : vector<1x5xi32>
    %cst_27 = arith.constant 0.000000e+00 : f32
    %79 = vector.shape_cast %25 : vector<1x1xf32> to vector<1x1xf32>
    %80 = vector.broadcast %79 : vector<1x1xf32> to vector<1x5xf32>
    %81 = vector.broadcast %cst_27 : f32 to vector<1x5xf32>
    %82 = arith.select %78, %80, %81 : vector<1x5xi1>, vector<1x5xf32>
    %c1_i32 = arith.constant 1 : i32
    %83 = vector.broadcast %c1_i32 : i32 to vector<1x5xi32>
    %84 = arith.cmpi eq, %23, %83 : vector<1x5xi32>
    %cst_28 = arith.constant 0.000000e+00 : f32
    %85 = vector.shape_cast %37 : vector<1x1xf32> to vector<1x1xf32>
    %86 = vector.broadcast %85 : vector<1x1xf32> to vector<1x5xf32>
    %87 = vector.broadcast %cst_28 : f32 to vector<1x5xf32>
    %88 = arith.select %84, %86, %87 : vector<1x5xi1>, vector<1x5xf32>
    %89 = arith.addf %82, %88 : vector<1x5xf32>
    %c2_i32 = arith.constant 2 : i32
    %90 = vector.broadcast %c2_i32 : i32 to vector<1x5xi32>
    %91 = arith.cmpi eq, %23, %90 : vector<1x5xi32>
    %cst_29 = arith.constant 0.000000e+00 : f32
    %92 = vector.shape_cast %41 : vector<1x1xf32> to vector<1x1xf32>
    %93 = vector.broadcast %92 : vector<1x1xf32> to vector<1x5xf32>
    %94 = vector.broadcast %cst_29 : f32 to vector<1x5xf32>
    %95 = arith.select %91, %93, %94 : vector<1x5xi1>, vector<1x5xf32>
    %96 = arith.addf %89, %95 : vector<1x5xf32>
    %c3_i32 = arith.constant 3 : i32
    %97 = vector.broadcast %c3_i32 : i32 to vector<1x5xi32>
    %98 = arith.cmpi eq, %23, %97 : vector<1x5xi32>
    %cst_30 = arith.constant 0.000000e+00 : f32
    %99 = vector.shape_cast %45 : vector<1x1xf32> to vector<1x1xf32>
    %100 = vector.broadcast %99 : vector<1x1xf32> to vector<1x5xf32>
    %101 = vector.broadcast %cst_30 : f32 to vector<1x5xf32>
    %102 = arith.select %98, %100, %101 : vector<1x5xi1>, vector<1x5xf32>
    %103 = arith.addf %96, %102 : vector<1x5xf32>
    %c4_i32 = arith.constant 4 : i32
    %104 = vector.broadcast %c4_i32 : i32 to vector<1x5xi32>
    %105 = arith.cmpi eq, %23, %104 : vector<1x5xi32>
    %cst_31 = arith.constant 0.000000e+00 : f32
    %106 = vector.shape_cast %49 : vector<1x1xf32> to vector<1x1xf32>
    %107 = vector.broadcast %106 : vector<1x1xf32> to vector<1x5xf32>
    %108 = vector.broadcast %cst_31 : f32 to vector<1x5xf32>
    %109 = arith.select %105, %107, %108 : vector<1x5xi1>, vector<1x5xf32>
    %110 = arith.addf %103, %109 : vector<1x5xf32>
    %cst_32 = arith.constant 0.000000e+00 : f32
    %111 = vector.shape_cast %76 : vector<1x1xi1> to vector<1x1xi1>
    %112 = vector.broadcast %111 : vector<1x1xi1> to vector<1x5xi1>
    %113 = vector.broadcast %cst_32 : f32 to vector<1x5xf32>
    %114 = arith.select %112, %110, %113 : vector<1x5xi1>, vector<1x5xf32>
    %c0_33 = arith.constant 0 : index
    %c0_34 = arith.constant 0 : index
    %c0_35 = arith.constant 0 : index
    %115 = vector.load %arg3[%c0_33, %c0_34, %c0_35] : memref<1x5x5xf32, #tpu.memory_space<vmem>>, vector<1x1x5xf32>
    %116 = vector.shape_cast %115 : vector<1x1x5xf32> to vector<1x5xf32>
    %117 = vector.shape_cast %114 : vector<1x5xf32> to vector<1x1x5xf32>
    tpu.vector_store %arg3[%c0_33, %c0_34, %c0_35], %117 {strides = array<i32>} : memref<1x5x5xf32, #tpu.memory_space<vmem>>, vector<1x1x5xf32>,
    %cst_36 = arith.constant 3.000000e-01 : f32
    %118 = vector.broadcast %cst_36 : f32 to vector<1x128xf32>
    %119 = arith.cmpf ogt, %74, %118 : vector<1x128xf32>
    %120 = arith.ori %33, %119 : vector<1x128xi1>
    %121 = vector.broadcast %76 : vector<1x1xi1> to vector<1x128xi1>
    %122 = arith.andi %121, %120 : vector<1x128xi1>
    %cst_37 = arith.constant 0.000000e+00 : f32
    %123 = vector.broadcast %cst_37 : f32 to vector<1x128xf32>
    %124 = arith.select %122, %123, %1 : vector<1x128xi1>, vector<1x128xf32>
    %cst_38 = arith.constant dense<0xFF800000> : vector<1xf32>
    %125 = vector.multi_reduction <maximumf>, %124, %cst_38 [1] : vector<1x128xf32> to vector<1xf32>
    %126 = vector.shape_cast %125 : vector<1xf32> to vector<1x1xf32>
    %127 = vector.broadcast %126 : vector<1x1xf32> to vector<1x128xf32>
    %128 = arith.cmpf oge, %124, %127 : vector<1x128xf32>
    %cst_39 = arith.constant 1.280000e+02 : f32
    %129 = vector.broadcast %cst_39 : f32 to vector<1x128xf32>
    %130 = arith.select %128, %22, %129 : vector<1x128xi1>, vector<1x128xf32>
    %cst_40 = arith.constant dense<0x7F800000> : vector<1xf32>
    %131 = vector.multi_reduction <minimumf>, %130, %cst_40 [1] : vector<1x128xf32> to vector<1xf32>
    %132 = vector.shape_cast %131 : vector<1xf32> to vector<1x1xf32>
    %133 = vector.broadcast %132 : vector<1x1xf32> to vector<1x128xf32>
    %134 = arith.cmpf oeq, %22, %133 : vector<1x128xf32>
    %cst_41 = arith.constant 0.000000e+00 : f32
    %135 = vector.broadcast %cst_41 : f32 to vector<1x128xf32>
    %136 = arith.select %134, %12, %135 : vector<1x128xi1>, vector<1x128xf32>
    %cst_42 = arith.constant dense<0.000000e+00> : vector<1xf32>
    %137 = vector.multi_reduction <add>, %136, %cst_42 [1] : vector<1x128xf32> to vector<1xf32>
    %138 = vector.shape_cast %137 : vector<1xf32> to vector<1x1xf32>
    %cst_43 = arith.constant 0.000000e+00 : f32
    %139 = vector.broadcast %cst_43 : f32 to vector<1x128xf32>
    %140 = arith.select %134, %15, %139 : vector<1x128xi1>, vector<1x128xf32>
    %cst_44 = arith.constant dense<0.000000e+00> : vector<1xf32>
    %141 = vector.multi_reduction <add>, %140, %cst_44 [1] : vector<1x128xf32> to vector<1xf32>
    %142 = vector.shape_cast %141 : vector<1xf32> to vector<1x1xf32>
    %cst_45 = arith.constant 0.000000e+00 : f32
    %143 = vector.broadcast %cst_45 : f32 to vector<1x128xf32>
    %144 = arith.select %134, %16, %143 : vector<1x128xi1>, vector<1x128xf32>
    %cst_46 = arith.constant dense<0.000000e+00> : vector<1xf32>
    %145 = vector.multi_reduction <add>, %144, %cst_46 [1] : vector<1x128xf32> to vector<1xf32>
    %146 = vector.shape_cast %145 : vector<1xf32> to vector<1x1xf32>
    %cst_47 = arith.constant 0.000000e+00 : f32
    %147 = vector.broadcast %cst_47 : f32 to vector<1x128xf32>
    %148 = arith.select %134, %17, %147 : vector<1x128xi1>, vector<1x128xf32>
    %cst_48 = arith.constant dense<0.000000e+00> : vector<1xf32>
    %149 = vector.multi_reduction <add>, %148, %cst_48 [1] : vector<1x128xf32> to vector<1xf32>
    %150 = vector.shape_cast %149 : vector<1xf32> to vector<1x1xf32>
    %151 = arith.subf %146, %138 : vector<1x1xf32>
    %152 = arith.subf %150, %142 : vector<1x1xf32>
    %153 = arith.mulf %151, %152 : vector<1x1xf32>
    %154 = vector.broadcast %146 : vector<1x1xf32> to vector<1x128xf32>
    %155 = arith.minimumf %16, %154 : vector<1x128xf32>
    %156 = vector.broadcast %138 : vector<1x1xf32> to vector<1x128xf32>
    %157 = arith.maximumf %12, %156 : vector<1x128xf32>
    %158 = arith.subf %155, %157 : vector<1x128xf32>
    %cst_49 = arith.constant 0.000000e+00 : f32
    %159 = vector.broadcast %cst_49 : f32 to vector<1x128xf32>
    %160 = arith.maximumf %158, %159 : vector<1x128xf32>
    %161 = vector.broadcast %150 : vector<1x1xf32> to vector<1x128xf32>
    %162 = arith.minimumf %17, %161 : vector<1x128xf32>
    %163 = vector.broadcast %142 : vector<1x1xf32> to vector<1x128xf32>
    %164 = arith.maximumf %15, %163 : vector<1x128xf32>
    %165 = arith.subf %162, %164 : vector<1x128xf32>
    %cst_50 = arith.constant 0.000000e+00 : f32
    %166 = vector.broadcast %cst_50 : f32 to vector<1x128xf32>
    %167 = arith.maximumf %165, %166 : vector<1x128xf32>
    %168 = arith.mulf %160, %167 : vector<1x128xf32>
    %169 = vector.broadcast %153 : vector<1x1xf32> to vector<1x128xf32>
    %170 = arith.addf %20, %169 : vector<1x128xf32>
    %171 = arith.subf %170, %168 : vector<1x128xf32>
    %cst_51 = arith.constant 9.99999996E-13 : f32
    %172 = vector.broadcast %cst_51 : f32 to vector<1x128xf32>
    %173 = arith.maximumf %171, %172 : vector<1x128xf32>
    %174 = tpu.reciprocal %173 {approx = true} : vector<1x128xf32> -> vector<1x128xf32>
    %175 = arith.mulf %168, %174 : vector<1x128xf32>
    %cst_52 = arith.constant 5.000000e-02 : f32
    %176 = vector.broadcast %cst_52 : f32 to vector<1x1xf32>
    %177 = arith.cmpf ogt, %126, %176 : vector<1x1xf32>
    %c0_i32_53 = arith.constant 0 : i32
    %178 = vector.broadcast %c0_i32_53 : i32 to vector<1x5xi32>
    %179 = arith.cmpi eq, %23, %178 : vector<1x5xi32>
    %cst_54 = arith.constant 0.000000e+00 : f32
    %180 = vector.shape_cast %126 : vector<1x1xf32> to vector<1x1xf32>
    %181 = vector.broadcast %180 : vector<1x1xf32> to vector<1x5xf32>
    %182 = vector.broadcast %cst_54 : f32 to vector<1x5xf32>
    %183 = arith.select %179, %181, %182 : vector<1x5xi1>, vector<1x5xf32>
    %c1_i32_55 = arith.constant 1 : i32
    %184 = vector.broadcast %c1_i32_55 : i32 to vector<1x5xi32>
    %185 = arith.cmpi eq, %23, %184 : vector<1x5xi32>
    %cst_56 = arith.constant 0.000000e+00 : f32
    %186 = vector.shape_cast %138 : vector<1x1xf32> to vector<1x1xf32>
    %187 = vector.broadcast %186 : vector<1x1xf32> to vector<1x5xf32>
    %188 = vector.broadcast %cst_56 : f32 to vector<1x5xf32>
    %189 = arith.select %185, %187, %188 : vector<1x5xi1>, vector<1x5xf32>
    %190 = arith.addf %183, %189 : vector<1x5xf32>
    %c2_i32_57 = arith.constant 2 : i32
    %191 = vector.broadcast %c2_i32_57 : i32 to vector<1x5xi32>
    %192 = arith.cmpi eq, %23, %191 : vector<1x5xi32>
    %cst_58 = arith.constant 0.000000e+00 : f32
    %193 = vector.shape_cast %142 : vector<1x1xf32> to vector<1x1xf32>
    %194 = vector.broadcast %193 : vector<1x1xf32> to vector<1x5xf32>
    %195 = vector.broadcast %cst_58 : f32 to vector<1x5xf32>
    %196 = arith.select %192, %194, %195 : vector<1x5xi1>, vector<1x5xf32>
    %197 = arith.addf %190, %196 : vector<1x5xf32>
    %c3_i32_59 = arith.constant 3 : i32
    %198 = vector.broadcast %c3_i32_59 : i32 to vector<1x5xi32>
    %199 = arith.cmpi eq, %23, %198 : vector<1x5xi32>
    %cst_60 = arith.constant 0.000000e+00 : f32
    %200 = vector.shape_cast %146 : vector<1x1xf32> to vector<1x1xf32>
    %201 = vector.broadcast %200 : vector<1x1xf32> to vector<1x5xf32>
    %202 = vector.broadcast %cst_60 : f32 to vector<1x5xf32>
    %203 = arith.select %199, %201, %202 : vector<1x5xi1>, vector<1x5xf32>
    %204 = arith.addf %197, %203 : vector<1x5xf32>
    %c4_i32_61 = arith.constant 4 : i32
    %205 = vector.broadcast %c4_i32_61 : i32 to vector<1x5xi32>
    %206 = arith.cmpi eq, %23, %205 : vector<1x5xi32>
    %cst_62 = arith.constant 0.000000e+00 : f32
    %207 = vector.shape_cast %150 : vector<1x1xf32> to vector<1x1xf32>
    %208 = vector.broadcast %207 : vector<1x1xf32> to vector<1x5xf32>
    %209 = vector.broadcast %cst_62 : f32 to vector<1x5xf32>
    %210 = arith.select %206, %208, %209 : vector<1x5xi1>, vector<1x5xf32>
    %211 = arith.addf %204, %210 : vector<1x5xf32>
    %cst_63 = arith.constant 0.000000e+00 : f32
    %212 = vector.shape_cast %177 : vector<1x1xi1> to vector<1x1xi1>
    %213 = vector.broadcast %212 : vector<1x1xi1> to vector<1x5xi1>
    %214 = vector.broadcast %cst_63 : f32 to vector<1x5xf32>
    %215 = arith.select %213, %211, %214 : vector<1x5xi1>, vector<1x5xf32>
    %c0_64 = arith.constant 0 : index
    %c1_65 = arith.constant 1 : index
    %c0_66 = arith.constant 0 : index
    %216 = vector.load %arg3[%c0_64, %c1_65, %c0_66] : memref<1x5x5xf32, #tpu.memory_space<vmem>>, vector<1x1x5xf32>
    %217 = vector.shape_cast %216 : vector<1x1x5xf32> to vector<1x5xf32>
    %218 = vector.shape_cast %215 : vector<1x5xf32> to vector<1x1x5xf32>
    tpu.vector_store %arg3[%c0_64, %c1_65, %c0_66], %218 {strides = array<i32>} : memref<1x5x5xf32, #tpu.memory_space<vmem>>, vector<1x1x5xf32>,
    %cst_67 = arith.constant 3.000000e-01 : f32
    %219 = vector.broadcast %cst_67 : f32 to vector<1x128xf32>
    %220 = arith.cmpf ogt, %175, %219 : vector<1x128xf32>
    %221 = arith.ori %134, %220 : vector<1x128xi1>
    %222 = vector.broadcast %177 : vector<1x1xi1> to vector<1x128xi1>
    %223 = arith.andi %222, %221 : vector<1x128xi1>
    %cst_68 = arith.constant 0.000000e+00 : f32
    %224 = vector.broadcast %cst_68 : f32 to vector<1x128xf32>
    %225 = arith.select %223, %224, %124 : vector<1x128xi1>, vector<1x128xf32>
    %cst_69 = arith.constant dense<0xFF800000> : vector<1xf32>
    %226 = vector.multi_reduction <maximumf>, %225, %cst_69 [1] : vector<1x128xf32> to vector<1xf32>
    %227 = vector.shape_cast %226 : vector<1xf32> to vector<1x1xf32>
    %228 = vector.broadcast %227 : vector<1x1xf32> to vector<1x128xf32>
    %229 = arith.cmpf oge, %225, %228 : vector<1x128xf32>
    %cst_70 = arith.constant 1.280000e+02 : f32
    %230 = vector.broadcast %cst_70 : f32 to vector<1x128xf32>
    %231 = arith.select %229, %22, %230 : vector<1x128xi1>, vector<1x128xf32>
    %cst_71 = arith.constant dense<0x7F800000> : vector<1xf32>
    %232 = vector.multi_reduction <minimumf>, %231, %cst_71 [1] : vector<1x128xf32> to vector<1xf32>
    %233 = vector.shape_cast %232 : vector<1xf32> to vector<1x1xf32>
    %234 = vector.broadcast %233 : vector<1x1xf32> to vector<1x128xf32>
    %235 = arith.cmpf oeq, %22, %234 : vector<1x128xf32>
    %cst_72 = arith.constant 0.000000e+00 : f32
    %236 = vector.broadcast %cst_72 : f32 to vector<1x128xf32>
    %237 = arith.select %235, %12, %236 : vector<1x128xi1>, vector<1x128xf32>
    %cst_73 = arith.constant dense<0.000000e+00> : vector<1xf32>
    %238 = vector.multi_reduction <add>, %237, %cst_73 [1] : vector<1x128xf32> to vector<1xf32>
    %239 = vector.shape_cast %238 : vector<1xf32> to vector<1x1xf32>
    %cst_74 = arith.constant 0.000000e+00 : f32
    %240 = vector.broadcast %cst_74 : f32 to vector<1x128xf32>
    %241 = arith.select %235, %15, %240 : vector<1x128xi1>, vector<1x128xf32>
    %cst_75 = arith.constant dense<0.000000e+00> : vector<1xf32>
    %242 = vector.multi_reduction <add>, %241, %cst_75 [1] : vector<1x128xf32> to vector<1xf32>
    %243 = vector.shape_cast %242 : vector<1xf32> to vector<1x1xf32>
    %cst_76 = arith.constant 0.000000e+00 : f32
    %244 = vector.broadcast %cst_76 : f32 to vector<1x128xf32>
    %245 = arith.select %235, %16, %244 : vector<1x128xi1>, vector<1x128xf32>
    %cst_77 = arith.constant dense<0.000000e+00> : vector<1xf32>
    %246 = vector.multi_reduction <add>, %245, %cst_77 [1] : vector<1x128xf32> to vector<1xf32>
    %247 = vector.shape_cast %246 : vector<1xf32> to vector<1x1xf32>
    %cst_78 = arith.constant 0.000000e+00 : f32
    %248 = vector.broadcast %cst_78 : f32 to vector<1x128xf32>
    %249 = arith.select %235, %17, %248 : vector<1x128xi1>, vector<1x128xf32>
    %cst_79 = arith.constant dense<0.000000e+00> : vector<1xf32>
    %250 = vector.multi_reduction <add>, %249, %cst_79 [1] : vector<1x128xf32> to vector<1xf32>
    %251 = vector.shape_cast %250 : vector<1xf32> to vector<1x1xf32>
    %252 = arith.subf %247, %239 : vector<1x1xf32>
    %253 = arith.subf %251, %243 : vector<1x1xf32>
    %254 = arith.mulf %252, %253 : vector<1x1xf32>
    %255 = vector.broadcast %247 : vector<1x1xf32> to vector<1x128xf32>
    %256 = arith.minimumf %16, %255 : vector<1x128xf32>
    %257 = vector.broadcast %239 : vector<1x1xf32> to vector<1x128xf32>
    %258 = arith.maximumf %12, %257 : vector<1x128xf32>
    %259 = arith.subf %256, %258 : vector<1x128xf32>
    %cst_80 = arith.constant 0.000000e+00 : f32
    %260 = vector.broadcast %cst_80 : f32 to vector<1x128xf32>
    %261 = arith.maximumf %259, %260 : vector<1x128xf32>
    %262 = vector.broadcast %251 : vector<1x1xf32> to vector<1x128xf32>
    %263 = arith.minimumf %17, %262 : vector<1x128xf32>
    %264 = vector.broadcast %243 : vector<1x1xf32> to vector<1x128xf32>
    %265 = arith.maximumf %15, %264 : vector<1x128xf32>
    %266 = arith.subf %263, %265 : vector<1x128xf32>
    %cst_81 = arith.constant 0.000000e+00 : f32
    %267 = vector.broadcast %cst_81 : f32 to vector<1x128xf32>
    %268 = arith.maximumf %266, %267 : vector<1x128xf32>
    %269 = arith.mulf %261, %268 : vector<1x128xf32>
    %270 = vector.broadcast %254 : vector<1x1xf32> to vector<1x128xf32>
    %271 = arith.addf %20, %270 : vector<1x128xf32>
    %272 = arith.subf %271, %269 : vector<1x128xf32>
    %cst_82 = arith.constant 9.99999996E-13 : f32
    %273 = vector.broadcast %cst_82 : f32 to vector<1x128xf32>
    %274 = arith.maximumf %272, %273 : vector<1x128xf32>
    %275 = tpu.reciprocal %274 {approx = true} : vector<1x128xf32> -> vector<1x128xf32>
    %276 = arith.mulf %269, %275 : vector<1x128xf32>
    %cst_83 = arith.constant 5.000000e-02 : f32
    %277 = vector.broadcast %cst_83 : f32 to vector<1x1xf32>
    %278 = arith.cmpf ogt, %227, %277 : vector<1x1xf32>
    %c0_i32_84 = arith.constant 0 : i32
    %279 = vector.broadcast %c0_i32_84 : i32 to vector<1x5xi32>
    %280 = arith.cmpi eq, %23, %279 : vector<1x5xi32>
    %cst_85 = arith.constant 0.000000e+00 : f32
    %281 = vector.shape_cast %227 : vector<1x1xf32> to vector<1x1xf32>
    %282 = vector.broadcast %281 : vector<1x1xf32> to vector<1x5xf32>
    %283 = vector.broadcast %cst_85 : f32 to vector<1x5xf32>
    %284 = arith.select %280, %282, %283 : vector<1x5xi1>, vector<1x5xf32>
    %c1_i32_86 = arith.constant 1 : i32
    %285 = vector.broadcast %c1_i32_86 : i32 to vector<1x5xi32>
    %286 = arith.cmpi eq, %23, %285 : vector<1x5xi32>
    %cst_87 = arith.constant 0.000000e+00 : f32
    %287 = vector.shape_cast %239 : vector<1x1xf32> to vector<1x1xf32>
    %288 = vector.broadcast %287 : vector<1x1xf32> to vector<1x5xf32>
    %289 = vector.broadcast %cst_87 : f32 to vector<1x5xf32>
    %290 = arith.select %286, %288, %289 : vector<1x5xi1>, vector<1x5xf32>
    %291 = arith.addf %284, %290 : vector<1x5xf32>
    %c2_i32_88 = arith.constant 2 : i32
    %292 = vector.broadcast %c2_i32_88 : i32 to vector<1x5xi32>
    %293 = arith.cmpi eq, %23, %292 : vector<1x5xi32>
    %cst_89 = arith.constant 0.000000e+00 : f32
    %294 = vector.shape_cast %243 : vector<1x1xf32> to vector<1x1xf32>
    %295 = vector.broadcast %294 : vector<1x1xf32> to vector<1x5xf32>
    %296 = vector.broadcast %cst_89 : f32 to vector<1x5xf32>
    %297 = arith.select %293, %295, %296 : vector<1x5xi1>, vector<1x5xf32>
    %298 = arith.addf %291, %297 : vector<1x5xf32>
    %c3_i32_90 = arith.constant 3 : i32
    %299 = vector.broadcast %c3_i32_90 : i32 to vector<1x5xi32>
    %300 = arith.cmpi eq, %23, %299 : vector<1x5xi32>
    %cst_91 = arith.constant 0.000000e+00 : f32
    %301 = vector.shape_cast %247 : vector<1x1xf32> to vector<1x1xf32>
    %302 = vector.broadcast %301 : vector<1x1xf32> to vector<1x5xf32>
    %303 = vector.broadcast %cst_91 : f32 to vector<1x5xf32>
    %304 = arith.select %300, %302, %303 : vector<1x5xi1>, vector<1x5xf32>
    %305 = arith.addf %298, %304 : vector<1x5xf32>
    %c4_i32_92 = arith.constant 4 : i32
    %306 = vector.broadcast %c4_i32_92 : i32 to vector<1x5xi32>
    %307 = arith.cmpi eq, %23, %306 : vector<1x5xi32>
    %cst_93 = arith.constant 0.000000e+00 : f32
    %308 = vector.shape_cast %251 : vector<1x1xf32> to vector<1x1xf32>
    %309 = vector.broadcast %308 : vector<1x1xf32> to vector<1x5xf32>
    %310 = vector.broadcast %cst_93 : f32 to vector<1x5xf32>
    %311 = arith.select %307, %309, %310 : vector<1x5xi1>, vector<1x5xf32>
    %312 = arith.addf %305, %311 : vector<1x5xf32>
    %cst_94 = arith.constant 0.000000e+00 : f32
    %313 = vector.shape_cast %278 : vector<1x1xi1> to vector<1x1xi1>
    %314 = vector.broadcast %313 : vector<1x1xi1> to vector<1x5xi1>
    %315 = vector.broadcast %cst_94 : f32 to vector<1x5xf32>
    %316 = arith.select %314, %312, %315 : vector<1x5xi1>, vector<1x5xf32>
    %c0_95 = arith.constant 0 : index
    %c2_96 = arith.constant 2 : index
    %c0_97 = arith.constant 0 : index
    %317 = vector.load %arg3[%c0_95, %c2_96, %c0_97] : memref<1x5x5xf32, #tpu.memory_space<vmem>>, vector<1x1x5xf32>
    %318 = vector.shape_cast %317 : vector<1x1x5xf32> to vector<1x5xf32>
    %319 = vector.shape_cast %316 : vector<1x5xf32> to vector<1x1x5xf32>
    tpu.vector_store %arg3[%c0_95, %c2_96, %c0_97], %319 {strides = array<i32>} : memref<1x5x5xf32, #tpu.memory_space<vmem>>, vector<1x1x5xf32>,
    %cst_98 = arith.constant 3.000000e-01 : f32
    %320 = vector.broadcast %cst_98 : f32 to vector<1x128xf32>
    %321 = arith.cmpf ogt, %276, %320 : vector<1x128xf32>
    %322 = arith.ori %235, %321 : vector<1x128xi1>
    %323 = vector.broadcast %278 : vector<1x1xi1> to vector<1x128xi1>
    %324 = arith.andi %323, %322 : vector<1x128xi1>
    %cst_99 = arith.constant 0.000000e+00 : f32
    %325 = vector.broadcast %cst_99 : f32 to vector<1x128xf32>
    %326 = arith.select %324, %325, %225 : vector<1x128xi1>, vector<1x128xf32>
    %cst_100 = arith.constant dense<0xFF800000> : vector<1xf32>
    %327 = vector.multi_reduction <maximumf>, %326, %cst_100 [1] : vector<1x128xf32> to vector<1xf32>
    %328 = vector.shape_cast %327 : vector<1xf32> to vector<1x1xf32>
    %329 = vector.broadcast %328 : vector<1x1xf32> to vector<1x128xf32>
    %330 = arith.cmpf oge, %326, %329 : vector<1x128xf32>
    %cst_101 = arith.constant 1.280000e+02 : f32
    %331 = vector.broadcast %cst_101 : f32 to vector<1x128xf32>
    %332 = arith.select %330, %22, %331 : vector<1x128xi1>, vector<1x128xf32>
    %cst_102 = arith.constant dense<0x7F800000> : vector<1xf32>
    %333 = vector.multi_reduction <minimumf>, %332, %cst_102 [1] : vector<1x128xf32> to vector<1xf32>
    %334 = vector.shape_cast %333 : vector<1xf32> to vector<1x1xf32>
    %335 = vector.broadcast %334 : vector<1x1xf32> to vector<1x128xf32>
    %336 = arith.cmpf oeq, %22, %335 : vector<1x128xf32>
    %cst_103 = arith.constant 0.000000e+00 : f32
    %337 = vector.broadcast %cst_103 : f32 to vector<1x128xf32>
    %338 = arith.select %336, %12, %337 : vector<1x128xi1>, vector<1x128xf32>
    %cst_104 = arith.constant dense<0.000000e+00> : vector<1xf32>
    %339 = vector.multi_reduction <add>, %338, %cst_104 [1] : vector<1x128xf32> to vector<1xf32>
    %340 = vector.shape_cast %339 : vector<1xf32> to vector<1x1xf32>
    %cst_105 = arith.constant 0.000000e+00 : f32
    %341 = vector.broadcast %cst_105 : f32 to vector<1x128xf32>
    %342 = arith.select %336, %15, %341 : vector<1x128xi1>, vector<1x128xf32>
    %cst_106 = arith.constant dense<0.000000e+00> : vector<1xf32>
    %343 = vector.multi_reduction <add>, %342, %cst_106 [1] : vector<1x128xf32> to vector<1xf32>
    %344 = vector.shape_cast %343 : vector<1xf32> to vector<1x1xf32>
    %cst_107 = arith.constant 0.000000e+00 : f32
    %345 = vector.broadcast %cst_107 : f32 to vector<1x128xf32>
    %346 = arith.select %336, %16, %345 : vector<1x128xi1>, vector<1x128xf32>
    %cst_108 = arith.constant dense<0.000000e+00> : vector<1xf32>
    %347 = vector.multi_reduction <add>, %346, %cst_108 [1] : vector<1x128xf32> to vector<1xf32>
    %348 = vector.shape_cast %347 : vector<1xf32> to vector<1x1xf32>
    %cst_109 = arith.constant 0.000000e+00 : f32
    %349 = vector.broadcast %cst_109 : f32 to vector<1x128xf32>
    %350 = arith.select %336, %17, %349 : vector<1x128xi1>, vector<1x128xf32>
    %cst_110 = arith.constant dense<0.000000e+00> : vector<1xf32>
    %351 = vector.multi_reduction <add>, %350, %cst_110 [1] : vector<1x128xf32> to vector<1xf32>
    %352 = vector.shape_cast %351 : vector<1xf32> to vector<1x1xf32>
    %353 = arith.subf %348, %340 : vector<1x1xf32>
    %354 = arith.subf %352, %344 : vector<1x1xf32>
    %355 = arith.mulf %353, %354 : vector<1x1xf32>
    %356 = vector.broadcast %348 : vector<1x1xf32> to vector<1x128xf32>
    %357 = arith.minimumf %16, %356 : vector<1x128xf32>
    %358 = vector.broadcast %340 : vector<1x1xf32> to vector<1x128xf32>
    %359 = arith.maximumf %12, %358 : vector<1x128xf32>
    %360 = arith.subf %357, %359 : vector<1x128xf32>
    %cst_111 = arith.constant 0.000000e+00 : f32
    %361 = vector.broadcast %cst_111 : f32 to vector<1x128xf32>
    %362 = arith.maximumf %360, %361 : vector<1x128xf32>
    %363 = vector.broadcast %352 : vector<1x1xf32> to vector<1x128xf32>
    %364 = arith.minimumf %17, %363 : vector<1x128xf32>
    %365 = vector.broadcast %344 : vector<1x1xf32> to vector<1x128xf32>
    %366 = arith.maximumf %15, %365 : vector<1x128xf32>
    %367 = arith.subf %364, %366 : vector<1x128xf32>
    %cst_112 = arith.constant 0.000000e+00 : f32
    %368 = vector.broadcast %cst_112 : f32 to vector<1x128xf32>
    %369 = arith.maximumf %367, %368 : vector<1x128xf32>
    %370 = arith.mulf %362, %369 : vector<1x128xf32>
    %371 = vector.broadcast %355 : vector<1x1xf32> to vector<1x128xf32>
    %372 = arith.addf %20, %371 : vector<1x128xf32>
    %373 = arith.subf %372, %370 : vector<1x128xf32>
    %cst_113 = arith.constant 9.99999996E-13 : f32
    %374 = vector.broadcast %cst_113 : f32 to vector<1x128xf32>
    %375 = arith.maximumf %373, %374 : vector<1x128xf32>
    %376 = tpu.reciprocal %375 {approx = true} : vector<1x128xf32> -> vector<1x128xf32>
    %377 = arith.mulf %370, %376 : vector<1x128xf32>
    %cst_114 = arith.constant 5.000000e-02 : f32
    %378 = vector.broadcast %cst_114 : f32 to vector<1x1xf32>
    %379 = arith.cmpf ogt, %328, %378 : vector<1x1xf32>
    %c0_i32_115 = arith.constant 0 : i32
    %380 = vector.broadcast %c0_i32_115 : i32 to vector<1x5xi32>
    %381 = arith.cmpi eq, %23, %380 : vector<1x5xi32>
    %cst_116 = arith.constant 0.000000e+00 : f32
    %382 = vector.shape_cast %328 : vector<1x1xf32> to vector<1x1xf32>
    %383 = vector.broadcast %382 : vector<1x1xf32> to vector<1x5xf32>
    %384 = vector.broadcast %cst_116 : f32 to vector<1x5xf32>
    %385 = arith.select %381, %383, %384 : vector<1x5xi1>, vector<1x5xf32>
    %c1_i32_117 = arith.constant 1 : i32
    %386 = vector.broadcast %c1_i32_117 : i32 to vector<1x5xi32>
    %387 = arith.cmpi eq, %23, %386 : vector<1x5xi32>
    %cst_118 = arith.constant 0.000000e+00 : f32
    %388 = vector.shape_cast %340 : vector<1x1xf32> to vector<1x1xf32>
    %389 = vector.broadcast %388 : vector<1x1xf32> to vector<1x5xf32>
    %390 = vector.broadcast %cst_118 : f32 to vector<1x5xf32>
    %391 = arith.select %387, %389, %390 : vector<1x5xi1>, vector<1x5xf32>
    %392 = arith.addf %385, %391 : vector<1x5xf32>
    %c2_i32_119 = arith.constant 2 : i32
    %393 = vector.broadcast %c2_i32_119 : i32 to vector<1x5xi32>
    %394 = arith.cmpi eq, %23, %393 : vector<1x5xi32>
    %cst_120 = arith.constant 0.000000e+00 : f32
    %395 = vector.shape_cast %344 : vector<1x1xf32> to vector<1x1xf32>
    %396 = vector.broadcast %395 : vector<1x1xf32> to vector<1x5xf32>
    %397 = vector.broadcast %cst_120 : f32 to vector<1x5xf32>
    %398 = arith.select %394, %396, %397 : vector<1x5xi1>, vector<1x5xf32>
    %399 = arith.addf %392, %398 : vector<1x5xf32>
    %c3_i32_121 = arith.constant 3 : i32
    %400 = vector.broadcast %c3_i32_121 : i32 to vector<1x5xi32>
    %401 = arith.cmpi eq, %23, %400 : vector<1x5xi32>
    %cst_122 = arith.constant 0.000000e+00 : f32
    %402 = vector.shape_cast %348 : vector<1x1xf32> to vector<1x1xf32>
    %403 = vector.broadcast %402 : vector<1x1xf32> to vector<1x5xf32>
    %404 = vector.broadcast %cst_122 : f32 to vector<1x5xf32>
    %405 = arith.select %401, %403, %404 : vector<1x5xi1>, vector<1x5xf32>
    %406 = arith.addf %399, %405 : vector<1x5xf32>
    %c4_i32_123 = arith.constant 4 : i32
    %407 = vector.broadcast %c4_i32_123 : i32 to vector<1x5xi32>
    %408 = arith.cmpi eq, %23, %407 : vector<1x5xi32>
    %cst_124 = arith.constant 0.000000e+00 : f32
    %409 = vector.shape_cast %352 : vector<1x1xf32> to vector<1x1xf32>
    %410 = vector.broadcast %409 : vector<1x1xf32> to vector<1x5xf32>
    %411 = vector.broadcast %cst_124 : f32 to vector<1x5xf32>
    %412 = arith.select %408, %410, %411 : vector<1x5xi1>, vector<1x5xf32>
    %413 = arith.addf %406, %412 : vector<1x5xf32>
    %cst_125 = arith.constant 0.000000e+00 : f32
    %414 = vector.shape_cast %379 : vector<1x1xi1> to vector<1x1xi1>
    %415 = vector.broadcast %414 : vector<1x1xi1> to vector<1x5xi1>
    %416 = vector.broadcast %cst_125 : f32 to vector<1x5xf32>
    %417 = arith.select %415, %413, %416 : vector<1x5xi1>, vector<1x5xf32>
    %c0_126 = arith.constant 0 : index
    %c3_127 = arith.constant 3 : index
    %c0_128 = arith.constant 0 : index
    %418 = vector.load %arg3[%c0_126, %c3_127, %c0_128] : memref<1x5x5xf32, #tpu.memory_space<vmem>>, vector<1x1x5xf32>
    %419 = vector.shape_cast %418 : vector<1x1x5xf32> to vector<1x5xf32>
    %420 = vector.shape_cast %417 : vector<1x5xf32> to vector<1x1x5xf32>
    tpu.vector_store %arg3[%c0_126, %c3_127, %c0_128], %420 {strides = array<i32>} : memref<1x5x5xf32, #tpu.memory_space<vmem>>, vector<1x1x5xf32>,
    %cst_129 = arith.constant 3.000000e-01 : f32
    %421 = vector.broadcast %cst_129 : f32 to vector<1x128xf32>
    %422 = arith.cmpf ogt, %377, %421 : vector<1x128xf32>
    %423 = arith.ori %336, %422 : vector<1x128xi1>
    %424 = vector.broadcast %379 : vector<1x1xi1> to vector<1x128xi1>
    %425 = arith.andi %424, %423 : vector<1x128xi1>
    %cst_130 = arith.constant 0.000000e+00 : f32
    %426 = vector.broadcast %cst_130 : f32 to vector<1x128xf32>
    %427 = arith.select %425, %426, %326 : vector<1x128xi1>, vector<1x128xf32>
    %cst_131 = arith.constant dense<0xFF800000> : vector<1xf32>
    %428 = vector.multi_reduction <maximumf>, %427, %cst_131 [1] : vector<1x128xf32> to vector<1xf32>
    %429 = vector.shape_cast %428 : vector<1xf32> to vector<1x1xf32>
    %430 = vector.broadcast %429 : vector<1x1xf32> to vector<1x128xf32>
    %431 = arith.cmpf oge, %427, %430 : vector<1x128xf32>
    %cst_132 = arith.constant 1.280000e+02 : f32
    %432 = vector.broadcast %cst_132 : f32 to vector<1x128xf32>
    %433 = arith.select %431, %22, %432 : vector<1x128xi1>, vector<1x128xf32>
    %cst_133 = arith.constant dense<0x7F800000> : vector<1xf32>
    %434 = vector.multi_reduction <minimumf>, %433, %cst_133 [1] : vector<1x128xf32> to vector<1xf32>
    %435 = vector.shape_cast %434 : vector<1xf32> to vector<1x1xf32>
    %436 = vector.broadcast %435 : vector<1x1xf32> to vector<1x128xf32>
    %437 = arith.cmpf oeq, %22, %436 : vector<1x128xf32>
    %cst_134 = arith.constant 0.000000e+00 : f32
    %438 = vector.broadcast %cst_134 : f32 to vector<1x128xf32>
    %439 = arith.select %437, %12, %438 : vector<1x128xi1>, vector<1x128xf32>
    %cst_135 = arith.constant dense<0.000000e+00> : vector<1xf32>
    %440 = vector.multi_reduction <add>, %439, %cst_135 [1] : vector<1x128xf32> to vector<1xf32>
    %441 = vector.shape_cast %440 : vector<1xf32> to vector<1x1xf32>
    %cst_136 = arith.constant 0.000000e+00 : f32
    %442 = vector.broadcast %cst_136 : f32 to vector<1x128xf32>
    %443 = arith.select %437, %15, %442 : vector<1x128xi1>, vector<1x128xf32>
    %cst_137 = arith.constant dense<0.000000e+00> : vector<1xf32>
    %444 = vector.multi_reduction <add>, %443, %cst_137 [1] : vector<1x128xf32> to vector<1xf32>
    %445 = vector.shape_cast %444 : vector<1xf32> to vector<1x1xf32>
    %cst_138 = arith.constant 0.000000e+00 : f32
    %446 = vector.broadcast %cst_138 : f32 to vector<1x128xf32>
    %447 = arith.select %437, %16, %446 : vector<1x128xi1>, vector<1x128xf32>
    %cst_139 = arith.constant dense<0.000000e+00> : vector<1xf32>
    %448 = vector.multi_reduction <add>, %447, %cst_139 [1] : vector<1x128xf32> to vector<1xf32>
    %449 = vector.shape_cast %448 : vector<1xf32> to vector<1x1xf32>
    %cst_140 = arith.constant 0.000000e+00 : f32
    %450 = vector.broadcast %cst_140 : f32 to vector<1x128xf32>
    %451 = arith.select %437, %17, %450 : vector<1x128xi1>, vector<1x128xf32>
    %cst_141 = arith.constant dense<0.000000e+00> : vector<1xf32>
    %452 = vector.multi_reduction <add>, %451, %cst_141 [1] : vector<1x128xf32> to vector<1xf32>
    %453 = vector.shape_cast %452 : vector<1xf32> to vector<1x1xf32>
    %cst_142 = arith.constant 5.000000e-02 : f32
    %454 = vector.broadcast %cst_142 : f32 to vector<1x1xf32>
    %455 = arith.cmpf ogt, %429, %454 : vector<1x1xf32>
    %c0_i32_143 = arith.constant 0 : i32
    %456 = vector.broadcast %c0_i32_143 : i32 to vector<1x5xi32>
    %457 = arith.cmpi eq, %23, %456 : vector<1x5xi32>
    %cst_144 = arith.constant 0.000000e+00 : f32
    %458 = vector.shape_cast %429 : vector<1x1xf32> to vector<1x1xf32>
    %459 = vector.broadcast %458 : vector<1x1xf32> to vector<1x5xf32>
    %460 = vector.broadcast %cst_144 : f32 to vector<1x5xf32>
    %461 = arith.select %457, %459, %460 : vector<1x5xi1>, vector<1x5xf32>
    %c1_i32_145 = arith.constant 1 : i32
    %462 = vector.broadcast %c1_i32_145 : i32 to vector<1x5xi32>
    %463 = arith.cmpi eq, %23, %462 : vector<1x5xi32>
    %cst_146 = arith.constant 0.000000e+00 : f32
    %464 = vector.shape_cast %441 : vector<1x1xf32> to vector<1x1xf32>
    %465 = vector.broadcast %464 : vector<1x1xf32> to vector<1x5xf32>
    %466 = vector.broadcast %cst_146 : f32 to vector<1x5xf32>
    %467 = arith.select %463, %465, %466 : vector<1x5xi1>, vector<1x5xf32>
    %468 = arith.addf %461, %467 : vector<1x5xf32>
    %c2_i32_147 = arith.constant 2 : i32
    %469 = vector.broadcast %c2_i32_147 : i32 to vector<1x5xi32>
    %470 = arith.cmpi eq, %23, %469 : vector<1x5xi32>
    %cst_148 = arith.constant 0.000000e+00 : f32
    %471 = vector.shape_cast %445 : vector<1x1xf32> to vector<1x1xf32>
    %472 = vector.broadcast %471 : vector<1x1xf32> to vector<1x5xf32>
    %473 = vector.broadcast %cst_148 : f32 to vector<1x5xf32>
    %474 = arith.select %470, %472, %473 : vector<1x5xi1>, vector<1x5xf32>
    %475 = arith.addf %468, %474 : vector<1x5xf32>
    %c3_i32_149 = arith.constant 3 : i32
    %476 = vector.broadcast %c3_i32_149 : i32 to vector<1x5xi32>
    %477 = arith.cmpi eq, %23, %476 : vector<1x5xi32>
    %cst_150 = arith.constant 0.000000e+00 : f32
    %478 = vector.shape_cast %449 : vector<1x1xf32> to vector<1x1xf32>
    %479 = vector.broadcast %478 : vector<1x1xf32> to vector<1x5xf32>
    %480 = vector.broadcast %cst_150 : f32 to vector<1x5xf32>
    %481 = arith.select %477, %479, %480 : vector<1x5xi1>, vector<1x5xf32>
    %482 = arith.addf %475, %481 : vector<1x5xf32>
    %c4_i32_151 = arith.constant 4 : i32
    %483 = vector.broadcast %c4_i32_151 : i32 to vector<1x5xi32>
    %484 = arith.cmpi eq, %23, %483 : vector<1x5xi32>
    %cst_152 = arith.constant 0.000000e+00 : f32
    %485 = vector.shape_cast %453 : vector<1x1xf32> to vector<1x1xf32>
    %486 = vector.broadcast %485 : vector<1x1xf32> to vector<1x5xf32>
    %487 = vector.broadcast %cst_152 : f32 to vector<1x5xf32>
    %488 = arith.select %484, %486, %487 : vector<1x5xi1>, vector<1x5xf32>
    %489 = arith.addf %482, %488 : vector<1x5xf32>
    %cst_153 = arith.constant 0.000000e+00 : f32
    %490 = vector.shape_cast %455 : vector<1x1xi1> to vector<1x1xi1>
    %491 = vector.broadcast %490 : vector<1x1xi1> to vector<1x5xi1>
    %492 = vector.broadcast %cst_153 : f32 to vector<1x5xf32>
    %493 = arith.select %491, %489, %492 : vector<1x5xi1>, vector<1x5xf32>
    %c0_154 = arith.constant 0 : index
    %c4 = arith.constant 4 : index
    %c0_155 = arith.constant 0 : index
    %494 = vector.load %arg3[%c0_154, %c4, %c0_155] : memref<1x5x5xf32, #tpu.memory_space<vmem>>, vector<1x1x5xf32>
    %495 = vector.shape_cast %494 : vector<1x1x5xf32> to vector<1x5xf32>
    %496 = vector.shape_cast %493 : vector<1x5xf32> to vector<1x1x5xf32>
    tpu.vector_store %arg3[%c0_154, %c4, %c0_155], %496 {strides = array<i32>} : memref<1x5x5xf32, #tpu.memory_space<vmem>>, vector<1x1x5xf32>,
    return
  }
  func.func @transform_0(%arg0: i32) -> (i32, i32, i32) {
    %c0_i32 = arith.constant 0 : i32
    %c0_i32_0 = arith.constant 0 : i32
    %c0_i32_1 = arith.constant 0 : i32
    return %arg0, %c0_i32, %c0_i32_0 : i32, i32, i32
  }
  func.func @transform_1(%arg0: i32) -> (i32, i32, i32) {
    %c0_i32 = arith.constant 0 : i32
    %c0_i32_0 = arith.constant 0 : i32
    %c0_i32_1 = arith.constant 0 : i32
    return %arg0, %c0_i32, %c0_i32_0 : i32, i32, i32
  }
  func.func @transform_2(%arg0: i32) -> (i32, i32, i32) {
    %c0_i32 = arith.constant 0 : i32
    %c0_i32_0 = arith.constant 0 : i32
    %c0_i32_1 = arith.constant 0 : i32
    return %arg0, %c0_i32, %c0_i32_0 : i32, i32, i32
  }
}

</mosaic_0001>

<llo_original>
// kernel: approx_top_k.22
$region0: #{approx_top_k.22}
  %s0 = inlined_call_operand.vmem [shape: f32[2,1,256], index: 0, kind: input, shape index: {}]
  %s1 = inlined_call_operand.vmem [shape: s32[2,1,256], index: 1, kind: input, shape index: {}]
  %s2 = inlined_call_operand.vmem [shape: f32[2,1,256], index: 2, kind: output, shape index: {0}]
  %s3 = inlined_call_operand.vmem [shape: s32[2,1,256], index: 3, kind: output, shape index: {1}]
  %4 = xla_tuple %s2, %s3
  $region1: #{approx_top_k.22} parent=0
    #allocation0 [shape = 'u8[8192]{0}', space=vmem, size = 0x2000, scoped, tag = 'operand span for operand 0']
    #allocation1 [shape = 'u8[2048]{0}', space=vmem, size = 0x800, scoped, tag = 'packed  for operand 0']
    #allocation2 [shape = 'u8[8192]{0}', space=vmem, size = 0x2000, scoped, tag = 'operand span for operand 2']
    #allocation3 [shape = 'u8[2048]{0}', space=vmem, size = 0x800, scoped, tag = 'packed  for operand 2']
    #allocation4 [shape = 'u8[8192]{0}', space=vmem, size = 0x2000, scoped, tag = 'operand span for operand 1']
    #allocation5 [shape = 'u8[2048]{0}', space=vmem, size = 0x800, scoped, tag = 'packed  for operand 1']
    #allocation6 [shape = 'u8[8192]{0}', space=vmem, size = 0x2000, scoped, tag = 'operand span for operand 3']
    #allocation7 [shape = 'u8[2048]{0}', space=vmem, size = 0x800, scoped, tag = 'packed  for operand 3']
    // Predicated region
    $region2: #{approx_top_k.22} parent=1 // pred_check
      _
    $region3: #{approx_top_k.22} parent=1 // pred_check_branch
      %6 = sbr.rel (0) target = $region5
    $region4: #{approx_top_k.22} parent=1 // pred_region
      // Predicated region
      $region6: #{approx_top_k.22} parent=4 // pred_check
        _
      $region7: #{approx_top_k.22} parent=4 // pred_check_branch
        %8 = sbr.rel target = $region9
      $region8: #{approx_top_k.22} parent=4 // pred_region
        // Predicated region
        $region21: #{approx_top_k.22} parent=8 // pred_check
          _
        $region22: #{approx_top_k.22} parent=8 // pred_check_branch
          %23 = sbr.rel (0) target = $region24
        $region23: #{approx_top_k.22} parent=8 // pred_region
          loop: start=0, step=1, limit=1
          $region25: #{approx_top_k.22} parent=23 // loop_pre_header
            _
          $region26: #{approx_top_k.22} parent=23 // loop_header
            %s26 = sphi 0, %s30
            %p27 = scmp.ge.s32.totalorder %s26, 1
            %s31 = sphi %s0, %s0
            %s32 = sphi [#allocation1], [#allocation1]
          $region27: #{approx_top_k.22} parent=23 // loop_header_branch
            %29 = sbr.rel (%p27) target = $region31
          $region28: #{approx_top_k.22} parent=23 // loop_body
            %v33 = vld [vmem:[%s31] sm:$0xf]
            %34 = vst [vmem:[%s32] sm:$0xf] %v33
          $region29: #{approx_top_k.22} parent=23 // loop_footer
            %s30 = sadd.s32 1, %s26
          $region30: #{approx_top_k.22} parent=23 // loop_footer_branch
            %25 = sbr.rel target = $region26
          $region31: #{approx_top_k.22} parent=23 // loop_exit
            _
        $region24: #{approx_top_k.22} parent=8 // pred_fallthru
          _
      $region9: #{approx_top_k.22} parent=4 // pred_fallthru
        _
      // Predicated region
      $region10: #{approx_top_k.22} parent=4 // pred_check
        _
      $region11: #{approx_top_k.22} parent=4 // pred_check_branch
        %10 = sbr.rel (0) target = $region13
      $region12: #{approx_top_k.22} parent=4 // pred_region
        loop: start=0, step=1, limit=1
        $region14: #{approx_top_k.22} parent=12 // loop_pre_header
          _
        $region15: #{approx_top_k.22} parent=12 // loop_header
          %s13 = sphi 0, %s17
          %p14 = scmp.ge.s32.totalorder %s13, 1
          %s18 = sphi %s0, %s0
          %s19 = sphi [#allocation1], [#allocation1]
        $region16: #{approx_top_k.22} parent=12 // loop_header_branch
          %16 = sbr.rel (%p14) target = $region20
        $region17: #{approx_top_k.22} parent=12 // loop_body
          %v20 = vld [vmem:[%s18] sm:$0xf]
          %21 = vst [vmem:[%s19] sm:$0xf] %v20
        $region18: #{approx_top_k.22} parent=12 // loop_footer
          %s17 = sadd.s32 1, %s13
        $region19: #{approx_top_k.22} parent=12 // loop_footer_branch
          %12 = sbr.rel target = $region15
        $region20: #{approx_top_k.22} parent=12 // loop_exit
          _
      $region13: #{approx_top_k.22} parent=4 // pred_fallthru
        _
    $region5: #{approx_top_k.22} parent=1 // pred_fallthru
      _
    %35 = vnop
    // Predicated region
    $region32: #{approx_top_k.22} parent=1 // pred_check
      _
    $region33: #{approx_top_k.22} parent=1 // pred_check_branch
      %37 = sbr.rel (0) target = $region35
    $region34: #{approx_top_k.22} parent=1 // pred_region
      // Predicated region
      $region36: #{approx_top_k.22} parent=34 // pred_check
        _
      $region37: #{approx_top_k.22} parent=34 // pred_check_branch
        %39 = sbr.rel target = $region39
      $region38: #{approx_top_k.22} parent=34 // pred_region
        // Predicated region
        $region51: #{approx_top_k.22} parent=38 // pred_check
          _
        $region52: #{approx_top_k.22} parent=38 // pred_check_branch
          %54 = sbr.rel (0) target = $region54
        $region53: #{approx_top_k.22} parent=38 // pred_region
          loop: start=0, step=1, limit=1
          $region55: #{approx_top_k.22} parent=53 // loop_pre_header
            _
          $region56: #{approx_top_k.22} parent=53 // loop_header
            %s57 = sphi 0, %s61
            %p58 = scmp.ge.s32.totalorder %s57, 1
            %s62 = sphi %s1, %s1
            %s63 = sphi [#allocation5], [#allocation5]
          $region57: #{approx_top_k.22} parent=53 // loop_header_branch
            %60 = sbr.rel (%p58) target = $region61
          $region58: #{approx_top_k.22} parent=53 // loop_body
            %v64 = vld [vmem:[%s62] sm:$0xf]
            %65 = vst [vmem:[%s63] sm:$0xf] %v64
          $region59: #{approx_top_k.22} parent=53 // loop_footer
            %s61 = sadd.s32 1, %s57
          $region60: #{approx_top_k.22} parent=53 // loop_footer_branch
            %56 = sbr.rel target = $region56
          $region61: #{approx_top_k.22} parent=53 // loop_exit
            _
        $region54: #{approx_top_k.22} parent=38 // pred_fallthru
          _
      $region39: #{approx_top_k.22} parent=34 // pred_fallthru
        _
      // Predicated region
      $region40: #{approx_top_k.22} parent=34 // pred_check
        _
      $region41: #{approx_top_k.22} parent=34 // pred_check_branch
        %41 = sbr.rel (0) target = $region43
      $region42: #{approx_top_k.22} parent=34 // pred_region
        loop: start=0, step=1, limit=1
        $region44: #{approx_top_k.22} parent=42 // loop_pre_header
          _
        $region45: #{approx_top_k.22} parent=42 // loop_header
          %s44 = sphi 0, %s48
          %p45 = scmp.ge.s32.totalorder %s44, 1
          %s49 = sphi %s1, %s1
          %s50 = sphi [#allocation5], [#allocation5]
        $region46: #{approx_top_k.22} parent=42 // loop_header_branch
          %47 = sbr.rel (%p45) target = $region50
        $region47: #{approx_top_k.22} parent=42 // loop_body
          %v51 = vld [vmem:[%s49] sm:$0xf]
          %52 = vst [vmem:[%s50] sm:$0xf] %v51
        $region48: #{approx_top_k.22} parent=42 // loop_footer
          %s48 = sadd.s32 1, %s44
        $region49: #{approx_top_k.22} parent=42 // loop_footer_branch
          %43 = sbr.rel target = $region45
        $region50: #{approx_top_k.22} parent=42 // loop_exit
          _
      $region43: #{approx_top_k.22} parent=34 // pred_fallthru
        _
    $region35: #{approx_top_k.22} parent=1 // pred_fallthru
      _
    %66 = vnop
    %s68 = sshllo.u32 0, 2
    %s69 = scalar_lea.vmem [#allocation1], 2
    %v70 = vld [vmem:[%s69] sm:%s68]
    %s71 = scalar_lea.vmem [#allocation0], 8
    %72 = vst [vmem:[%s71] sm:%s68] %v70
    %v73 = vld [vmem:[#allocation1] sm:%s68]
    %74 = vst [vmem:[#allocation0] sm:%s68] %v73
    %s76 = sshllo.u32 0, 2
    %s77 = scalar_lea.vmem [#allocation5], 2
    %v78 = vld [vmem:[%s77] sm:%s76]
    %s79 = scalar_lea.vmem [#allocation4], 8
    %80 = vst [vmem:[%s79] sm:%s76] %v78
    %v81 = vld [vmem:[#allocation5] sm:%s76]
    %82 = vst [vmem:[#allocation4] sm:%s76] %v81
    %v83 = vlaneseq
    %v84 = vand.u32 %v83, 127
    %v85 = vxor.u32 %v84, 1
    %86 = vset.pattern.permute.xlu0 %v85
    %v87 = vlaneseq
    %v88 = vand.u32 %v87, 127
    %v89 = vand.u32 %v88, 1
    %vm90 = vcmp.eq.s32.totalorder 0, %v89
    %s92 = scalar_lea.vmem [#allocation0], 0
    %v93 = vld [vmem:[%s92] sm:$0xff]
    %94 = vperm.xlu0 %86, %v93
    %v95 = vpop.permute.xlu0 %94
    %s97 = scalar_lea.vmem [#allocation4], 0
    %v98 = vld [vmem:[%s97] sm:$0xff]
    %99 = vperm.xlu0 %86, %v98
    %v100 = vpop.permute.xlu0 %99
    %101 = xla_tuple %v95, %v93
    %102 = xla_tuple %101
    %vm103 = vcmp.gt.f32.partialorder %v95, %v93
    %v104 = vsel %vm103, 1, 0
    %105 = xla_tuple %v104
    %106 = xla_tuple %v93, %v95
    %107 = xla_tuple %106
    %vm108 = vcmp.gt.f32.partialorder %v93, %v95
    %v109 = vsel %vm108, 1, 0
    %110 = xla_tuple %v109
    %vm111 = vcmp.ne.s32.totalorder %v104, 0
    %vm112 = vcmp.ne.s32.totalorder %v109, 0
    %v113 = vsel %vm111, %v95, %v93
    %v114 = vsel %vm112, %v95, %v93
    %v115 = vsel %vm90, %v113, %v114
    %s117 = scalar_lea.vmem [#allocation2], 0
    %118 = vst [vmem:[%s117] sm:$0xff] %v115
    %v119 = vsel %vm111, %v100, %v98
    %v120 = vsel %vm112, %v100, %v98
    %v121 = vsel %vm90, %v119, %v120
    %s123 = scalar_lea.vmem [#allocation6], 0
    %124 = vst [vmem:[%s123] sm:$0xff] %v121
    %s126 = scalar_lea.vmem [#allocation0], 8
    %v127 = vld [vmem:[%s126] sm:$0xff]
    %128 = vperm.xlu0 %86, %v127
    %v129 = vpop.permute.xlu0 %128
    %s131 = scalar_lea.vmem [#allocation4], 8
    %v132 = vld [vmem:[%s131] sm:$0xff]
    %133 = vperm.xlu0 %86, %v132
    %v134 = vpop.permute.xlu0 %133
    %135 = xla_tuple %v129, %v127
    %136 = xla_tuple %135
    %vm137 = vcmp.gt.f32.partialorder %v129, %v127
    %v138 = vsel %vm137, 1, 0
    %139 = xla_tuple %v138
    %140 = xla_tuple %v127, %v129
    %141 = xla_tuple %140
    %vm142 = vcmp.gt.f32.partialorder %v127, %v129
    %v143 = vsel %vm142, 1, 0
    %144 = xla_tuple %v143
    %vm145 = vcmp.ne.s32.totalorder %v138, 0
    %vm146 = vcmp.ne.s32.totalorder %v143, 0
    %v147 = vsel %vm145, %v129, %v127
    %v148 = vsel %vm146, %v129, %v127
    %v149 = vsel %vm90, %v147, %v148
    %s151 = scalar_lea.vmem [#allocation2], 8
    %152 = vst [vmem:[%s151] sm:$0xff] %v149
    %v153 = vsel %vm145, %v134, %v132
    %v154 = vsel %vm146, %v134, %v132
    %v155 = vsel %vm90, %v153, %v154
    %s157 = scalar_lea.vmem [#allocation6], 8
    %158 = vst [vmem:[%s157] sm:$0xff] %v155
    %v159 = vlaneseq
    %v160 = vand.u32 %v159, 127
    %v161 = vxor.u32 %v160, 3
    %162 = vset.pattern.permute.xlu0 %v161
    %v163 = vlaneseq
    %v164 = vand.u32 %v163, 127
    %v165 = vand.u32 %v164, 2
    %vm166 = vcmp.eq.s32.totalorder 0, %v165
    %s168 = scalar_lea.vmem [#allocation2], 0
    %v169 = vld [vmem:[%s168] sm:$0xff]
    %170 = vperm.xlu0 %162, %v169
    %v171 = vpop.permute.xlu0 %170
    %s173 = scalar_lea.vmem [#allocation6], 0
    %v174 = vld [vmem:[%s173] sm:$0xff]
    %175 = vperm.xlu0 %162, %v174
    %v176 = vpop.permute.xlu0 %175
    %177 = xla_tuple %v171, %v169
    %178 = xla_tuple %177
    %vm179 = vcmp.gt.f32.partialorder %v171, %v169
    %v180 = vsel %vm179, 1, 0
    %181 = xla_tuple %v180
    %182 = xla_tuple %v169, %v171
    %183 = xla_tuple %182
    %vm184 = vcmp.gt.f32.partialorder %v169, %v171
    %v185 = vsel %vm184, 1, 0
    %186 = xla_tuple %v185
    %vm187 = vcmp.ne.s32.totalorder %v180, 0
    %vm188 = vcmp.ne.s32.totalorder %v185, 0
    %v189 = vsel %vm187, %v171, %v169
    %v190 = vsel %vm188, %v171, %v169
    %v191 = vsel %vm166, %v189, %v190
    %s193 = scalar_lea.vmem [#allocation2], 0
    %194 = vst [vmem:[%s193] sm:$0xff] %v191
    %v195 = vsel %vm187, %v176, %v174
    %v196 = vsel %vm188, %v176, %v174
    %v197 = vsel %vm166, %v195, %v196
    %s199 = scalar_lea.vmem [#allocation6], 0
    %200 = vst [vmem:[%s199] sm:$0xff] %v197
    %s202 = scalar_lea.vmem [#allocation2], 8
    %v203 = vld [vmem:[%s202] sm:$0xff]
    %204 = vperm.xlu0 %162, %v203
    %v205 = vpop.permute.xlu0 %204
    %s207 = scalar_lea.vmem [#allocation6], 8
    %v208 = vld [vmem:[%s207] sm:$0xff]
    %209 = vperm.xlu0 %162, %v208
    %v210 = vpop.permute.xlu0 %209
    %211 = xla_tuple %v205, %v203
    %212 = xla_tuple %211
    %vm213 = vcmp.gt.f32.partialorder %v205, %v203
    %v214 = vsel %vm213, 1, 0
    %215 = xla_tuple %v214
    %216 = xla_tuple %v203, %v205
    %217 = xla_tuple %216
    %vm218 = vcmp.gt.f32.partialorder %v203, %v205
    %v219 = vsel %vm218, 1, 0
    %220 = xla_tuple %v219
    %vm221 = vcmp.ne.s32.totalorder %v214, 0
    %vm222 = vcmp.ne.s32.totalorder %v219, 0
    %v223 = vsel %vm221, %v205, %v203
    %v224 = vsel %vm222, %v205, %v203
    %v225 = vsel %vm166, %v223, %v224
    %s227 = scalar_lea.vmem [#allocation2], 8
    %228 = vst [vmem:[%s227] sm:$0xff] %v225
    %v229 = vsel %vm221, %v210, %v208
    %v230 = vsel %vm222, %v210, %v208
    %v231 = vsel %vm166, %v229, %v230
    %s233 = scalar_lea.vmem [#allocation6], 8
    %234 = vst [vmem:[%s233] sm:$0xff] %v231
    %v235 = vlaneseq
    %v236 = vand.u32 %v235, 127
    %v237 = vxor.u32 %v236, 1
    %238 = vset.pattern.permute.xlu0 %v237
    %v239 = vlaneseq
    %v240 = vand.u32 %v239, 127
    %v241 = vand.u32 %v240, 1
    %vm242 = vcmp.eq.s32.totalorder 0, %v241
    %s244 = scalar_lea.vmem [#allocation2], 0
    %v245 = vld [vmem:[%s244] sm:$0xff]
    %246 = vperm.xlu0 %238, %v245
    %v247 = vpop.permute.xlu0 %246
    %s249 = scalar_lea.vmem [#allocation6], 0
    %v250 = vld [vmem:[%s249] sm:$0xff]
    %251 = vperm.xlu0 %238, %v250
    %v252 = vpop.permute.xlu0 %251
    %253 = xla_tuple %v247, %v245
    %254 = xla_tuple %253
    %vm255 = vcmp.gt.f32.partialorder %v247, %v245
    %v256 = vsel %vm255, 1, 0
    %257 = xla_tuple %v256
    %258 = xla_tuple %v245, %v247
    %259 = xla_tuple %258
    %vm260 = vcmp.gt.f32.partialorder %v245, %v247
    %v261 = vsel %vm260, 1, 0
    %262 = xla_tuple %v261
    %vm263 = vcmp.ne.s32.totalorder %v256, 0
    %vm264 = vcmp.ne.s32.totalorder %v261, 0
    %v265 = vsel %vm263, %v247, %v245
    %v266 = vsel %vm264, %v247, %v245
    %v267 = vsel %vm242, %v265, %v266
    %s269 = scalar_lea.vmem [#allocation2], 0
    %270 = vst [vmem:[%s269] sm:$0xff] %v267
    %v271 = vsel %vm263, %v252, %v250
    %v272 = vsel %vm264, %v252, %v250
    %v273 = vsel %vm242, %v271, %v272
    %s275 = scalar_lea.vmem [#allocation6], 0
    %276 = vst [vmem:[%s275] sm:$0xff] %v273
    %s278 = scalar_lea.vmem [#allocation2], 8
    %v279 = vld [vmem:[%s278] sm:$0xff]
    %280 = vperm.xlu0 %238, %v279
    %v281 = vpop.permute.xlu0 %280
    %s283 = scalar_lea.vmem [#allocation6], 8
    %v284 = vld [vmem:[%s283] sm:$0xff]
    %285 = vperm.xlu0 %238, %v284
    %v286 = vpop.permute.xlu0 %285
    %287 = xla_tuple %v281, %v279
    %288 = xla_tuple %287
    %vm289 = vcmp.gt.f32.partialorder %v281, %v279
    %v290 = vsel %vm289, 1, 0
    %291 = xla_tuple %v290
    %292 = xla_tuple %v279, %v281
    %293 = xla_tuple %292
    %vm294 = vcmp.gt.f32.partialorder %v279, %v281
    %v295 = vsel %vm294, 1, 0
    %296 = xla_tuple %v295
    %vm297 = vcmp.ne.s32.totalorder %v290, 0
    %vm298 = vcmp.ne.s32.totalorder %v295, 0
    %v299 = vsel %vm297, %v281, %v279
    %v300 = vsel %vm298, %v281, %v279
    %v301 = vsel %vm242, %v299, %v300
    %s303 = scalar_lea.vmem [#allocation2], 8
    %304 = vst [vmem:[%s303] sm:$0xff] %v301
    %v305 = vsel %vm297, %v286, %v284
    %v306 = vsel %vm298, %v286, %v284
    %v307 = vsel %vm242, %v305, %v306
    %s309 = scalar_lea.vmem [#allocation6], 8
    %310 = vst [vmem:[%s309] sm:$0xff] %v307
    %v311 = vlaneseq
    %v312 = vand.u32 %v311, 127
    %v313 = vxor.u32 %v312, 7
    %314 = vset.pattern.permute.xlu0 %v313
    %v315 = vlaneseq
    %v316 = vand.u32 %v315, 127
    %v317 = vand.u32 %v316, 4
    %vm318 = vcmp.eq.s32.totalorder 0, %v317
    %s320 = scalar_lea.vmem [#allocation2], 0
    %v321 = vld [vmem:[%s320] sm:$0xff]
    %322 = vperm.xlu0 %314, %v321
    %v323 = vpop.permute.xlu0 %322
    %s325 = scalar_lea.vmem [#allocation6], 0
    %v326 = vld [vmem:[%s325] sm:$0xff]
    %327 = vperm.xlu0 %314, %v326
    %v328 = vpop.permute.xlu0 %327
    %329 = xla_tuple %v323, %v321
    %330 = xla_tuple %329
    %vm331 = vcmp.gt.f32.partialorder %v323, %v321
    %v332 = vsel %vm331, 1, 0
    %333 = xla_tuple %v332
    %334 = xla_tuple %v321, %v323
    %335 = xla_tuple %334
    %vm336 = vcmp.gt.f32.partialorder %v321, %v323
    %v337 = vsel %vm336, 1, 0
    %338 = xla_tuple %v337
    %vm339 = vcmp.ne.s32.totalorder %v332, 0
    %vm340 = vcmp.ne.s32.totalorder %v337, 0
    %v341 = vsel %vm339, %v323, %v321
    %v342 = vsel %vm340, %v323, %v321
    %v343 = vsel %vm318, %v341, %v342
    %s345 = scalar_lea.vmem [#allocation2], 0
    %346 = vst [vmem:[%s345] sm:$0xff] %v343
    %v347 = vsel %vm339, %v328, %v326
    %v348 = vsel %vm340, %v328, %v326
    %v349 = vsel %vm318, %v347, %v348
    %s351 = scalar_lea.vmem [#allocation6], 0
    %352 = vst [vmem:[%s351] sm:$0xff] %v349
    %s354 = scalar_lea.vmem [#allocation2], 8
    %v355 = vld [vmem:[%s354] sm:$0xff]
    %356 = vperm.xlu0 %314, %v355
    %v357 = vpop.permute.xlu0 %356
    %s359 = scalar_lea.vmem [#allocation6], 8
    %v360 = vld [vmem:[%s359] sm:$0xff]
    %361 = vperm.xlu0 %314, %v360
    %v362 = vpop.permute.xlu0 %361
    %363 = xla_tuple %v357, %v355
    %364 = xla_tuple %363
    %vm365 = vcmp.gt.f32.partialorder %v357, %v355
    %v366 = vsel %vm365, 1, 0
    %367 = xla_tuple %v366
    %368 = xla_tuple %v355, %v357
    %369 = xla_tuple %368
    %vm370 = vcmp.gt.f32.partialorder %v355, %v357
    %v371 = vsel %vm370, 1, 0
    %372 = xla_tuple %v371
    %vm373 = vcmp.ne.s32.totalorder %v366, 0
    %vm374 = vcmp.ne.s32.totalorder %v371, 0
    %v375 = vsel %vm373, %v357, %v355
    %v376 = vsel %vm374, %v357, %v355
    %v377 = vsel %vm318, %v375, %v376
    %s379 = scalar_lea.vmem [#allocation2], 8
    %380 = vst [vmem:[%s379] sm:$0xff] %v377
    %v381 = vsel %vm373, %v362, %v360
    %v382 = vsel %vm374, %v362, %v360
    %v383 = vsel %vm318, %v381, %v382
    %s385 = scalar_lea.vmem [#allocation6], 8
    %386 = vst [vmem:[%s385] sm:$0xff] %v383
    %v387 = vlaneseq
    %v388 = vand.u32 %v387, 127
    %v389 = vxor.u32 %v388, 2
    %390 = vset.pattern.permute.xlu0 %v389
    %v391 = vlaneseq
    %v392 = vand.u32 %v391, 127
    %v393 = vand.u32 %v392, 2
    %vm394 = vcmp.eq.s32.totalorder 0, %v393
    %s396 = scalar_lea.vmem [#allocation2], 0
    %v397 = vld [vmem:[%s396] sm:$0xff]
    %398 = vperm.xlu0 %390, %v397
    %v399 = vpop.permute.xlu0 %398
    %s401 = scalar_lea.vmem [#allocation6], 0
    %v402 = vld [vmem:[%s401] sm:$0xff]
    %403 = vperm.xlu0 %390, %v402
    %v404 = vpop.permute.xlu0 %403
    %405 = xla_tuple %v399, %v397
    %406 = xla_tuple %405
    %vm407 = vcmp.gt.f32.partialorder %v399, %v397
    %v408 = vsel %vm407, 1, 0
    %409 = xla_tuple %v408
    %410 = xla_tuple %v397, %v399
    %411 = xla_tuple %410
    %vm412 = vcmp.gt.f32.partialorder %v397, %v399
    %v413 = vsel %vm412, 1, 0
    %414 = xla_tuple %v413
    %vm415 = vcmp.ne.s32.totalorder %v408, 0
    %vm416 = vcmp.ne.s32.totalorder %v413, 0
    %v417 = vsel %vm415, %v399, %v397
    %v418 = vsel %vm416, %v399, %v397
    %v419 = vsel %vm394, %v417, %v418
    %s421 = scalar_lea.vmem [#allocation2], 0
    %422 = vst [vmem:[%s421] sm:$0xff] %v419
    %v423 = vsel %vm415, %v404, %v402
    %v424 = vsel %vm416, %v404, %v402
    %v425 = vsel %vm394, %v423, %v424
    %s427 = scalar_lea.vmem [#allocation6], 0
    %428 = vst [vmem:[%s427] sm:$0xff] %v425
    %s430 = scalar_lea.vmem [#allocation2], 8
    %v431 = vld [vmem:[%s430] sm:$0xff]
    %432 = vperm.xlu0 %390, %v431
    %v433 = vpop.permute.xlu0 %432
    %s435 = scalar_lea.vmem [#allocation6], 8
    %v436 = vld [vmem:[%s435] sm:$0xff]
    %437 = vperm.xlu0 %390, %v436
    %v438 = vpop.permute.xlu0 %437
    %439 = xla_tuple %v433, %v431
    %440 = xla_tuple %439
    %vm441 = vcmp.gt.f32.partialorder %v433, %v431
    %v442 = vsel %vm441, 1, 0
    %443 = xla_tuple %v442
    %444 = xla_tuple %v431, %v433
    %445 = xla_tuple %444
    %vm446 = vcmp.gt.f32.partialorder %v431, %v433
    %v447 = vsel %vm446, 1, 0
    %448 = xla_tuple %v447
    %vm449 = vcmp.ne.s32.totalorder %v442, 0
    %vm450 = vcmp.ne.s32.totalorder %v447, 0
    %v451 = vsel %vm449, %v433, %v431
    %v452 = vsel %vm450, %v433, %v431
    %v453 = vsel %vm394, %v451, %v452
    %s455 = scalar_lea.vmem [#allocation2], 8
    %456 = vst [vmem:[%s455] sm:$0xff] %v453
    %v457 = vsel %vm449, %v438, %v436
    %v458 = vsel %vm450, %v438, %v436
    %v459 = vsel %vm394, %v457, %v458
    %s461 = scalar_lea.vmem [#allocation6], 8
    %462 = vst [vmem:[%s461] sm:$0xff] %v459
    %v463 = vlaneseq
    %v464 = vand.u32 %v463, 127
    %v465 = vxor.u32 %v464, 1
    %466 = vset.pattern.permute.xlu0 %v465
    %v467 = vlaneseq
    %v468 = vand.u32 %v467, 127
    %v469 = vand.u32 %v468, 1
    %vm470 = vcmp.eq.s32.totalorder 0, %v469
    %s472 = scalar_lea.vmem [#allocation2], 0
    %v473 = vld [vmem:[%s472] sm:$0xff]
    %474 = vperm.xlu0 %466, %v473
    %v475 = vpop.permute.xlu0 %474
    %s477 = scalar_lea.vmem [#allocation6], 0
    %v478 = vld [vmem:[%s477] sm:$0xff]
    %479 = vperm.xlu0 %466, %v478
    %v480 = vpop.permute.xlu0 %479
    %481 = xla_tuple %v475, %v473
    %482 = xla_tuple %481
    %vm483 = vcmp.gt.f32.partialorder %v475, %v473
    %v484 = vsel %vm483, 1, 0
    %485 = xla_tuple %v484
    %486 = xla_tuple %v473, %v475
    %487 = xla_tuple %486
    %vm488 = vcmp.gt.f32.partialorder %v473, %v475
    %v489 = vsel %vm488, 1, 0
    %490 = xla_tuple %v489
    %vm491 = vcmp.ne.s32.totalorder %v484, 0
    %vm492 = vcmp.ne.s32.totalorder %v489, 0
    %v493 = vsel %vm491, %v475, %v473
    %v494 = vsel %vm492, %v475, %v473
    %v495 = vsel %vm470, %v493, %v494
    %s497 = scalar_lea.vmem [#allocation2], 0
    %498 = vst [vmem:[%s497] sm:$0xff] %v495
    %v499 = vsel %vm491, %v480, %v478
    %v500 = vsel %vm492, %v480, %v478
    %v501 = vsel %vm470, %v499, %v500
    %s503 = scalar_lea.vmem [#allocation6], 0
    %504 = vst [vmem:[%s503] sm:$0xff] %v501
    %s506 = scalar_lea.vmem [#allocation2], 8
    %v507 = vld [vmem:[%s506] sm:$0xff]
    %508 = vperm.xlu0 %466, %v507
    %v509 = vpop.permute.xlu0 %508
    %s511 = scalar_lea.vmem [#allocation6], 8
    %v512 = vld [vmem:[%s511] sm:$0xff]
    %513 = vperm.xlu0 %466, %v512
    %v514 = vpop.permute.xlu0 %513
    %515 = xla_tuple %v509, %v507
    %516 = xla_tuple %515
    %vm517 = vcmp.gt.f32.partialorder %v509, %v507
    %v518 = vsel %vm517, 1, 0
    %519 = xla_tuple %v518
    %520 = xla_tuple %v507, %v509
    %521 = xla_tuple %520
    %vm522 = vcmp.gt.f32.partialorder %v507, %v509
    %v523 = vsel %vm522, 1, 0
    %524 = xla_tuple %v523
    %vm525 = vcmp.ne.s32.totalorder %v518, 0
    %vm526 = vcmp.ne.s32.totalorder %v523, 0
    %v527 = vsel %vm525, %v509, %v507
    %v528 = vsel %vm526, %v509, %v507
    %v529 = vsel %vm470, %v527, %v528
    %s531 = scalar_lea.vmem [#allocation2], 8
    %532 = vst [vmem:[%s531] sm:$0xff] %v529
    %v533 = vsel %vm525, %v514, %v512
    %v534 = vsel %vm526, %v514, %v512
    %v535 = vsel %vm470, %v533, %v534
    %s537 = scalar_lea.vmem [#allocation6], 8
    %538 = vst [vmem:[%s537] sm:$0xff] %v535
    %v539 = vlaneseq
    %v540 = vand.u32 %v539, 127
    %v541 = vxor.u32 %v540, 15
    %542 = vset.pattern.permute.xlu0 %v541
    %v543 = vlaneseq
    %v544 = vand.u32 %v543, 127
    %v545 = vand.u32 %v544, 8
    %vm546 = vcmp.eq.s32.totalorder 0, %v545
    %s548 = scalar_lea.vmem [#allocation2], 0
    %v549 = vld [vmem:[%s548] sm:$0xff]
    %550 = vperm.xlu0 %542, %v549
    %v551 = vpop.permute.xlu0 %550
    %s553 = scalar_lea.vmem [#allocation6], 0
    %v554 = vld [vmem:[%s553] sm:$0xff]
    %555 = vperm.xlu0 %542, %v554
    %v556 = vpop.permute.xlu0 %555
    %557 = xla_tuple %v551, %v549
    %558 = xla_tuple %557
    %vm559 = vcmp.gt.f32.partialorder %v551, %v549
    %v560 = vsel %vm559, 1, 0
    %561 = xla_tuple %v560
    %562 = xla_tuple %v549, %v551
    %563 = xla_tuple %562
    %vm564 = vcmp.gt.f32.partialorder %v549, %v551
    %v565 = vsel %vm564, 1, 0
    %566 = xla_tuple %v565
    %vm567 = vcmp.ne.s32.totalorder %v560, 0
    %vm568 = vcmp.ne.s32.totalorder %v565, 0
    %v569 = vsel %vm567, %v551, %v549
    %v570 = vsel %vm568, %v551, %v549
    %v571 = vsel %vm546, %v569, %v570
    %s573 = scalar_lea.vmem [#allocation2], 0
    %574 = vst [vmem:[%s573] sm:$0xff] %v571
    %v575 = vsel %vm567, %v556, %v554
    %v576 = vsel %vm568, %v556, %v554
    %v577 = vsel %vm546, %v575, %v576
    %s579 = scalar_lea.vmem [#allocation6], 0
    %580 = vst [vmem:[%s579] sm:$0xff] %v577
    %s582 = scalar_lea.vmem [#allocation2], 8
    %v583 = vld [vmem:[%s582] sm:$0xff]
    %584 = vperm.xlu0 %542, %v583
    %v585 = vpop.permute.xlu0 %584
    %s587 = scalar_lea.vmem [#allocation6], 8
    %v588 = vld [vmem:[%s587] sm:$0xff]
    %589 = vperm.xlu0 %542, %v588
    %v590 = vpop.permute.xlu0 %589
    %591 = xla_tuple %v585, %v583
    %592 = xla_tuple %591
    %vm593 = vcmp.gt.f32.partialorder %v585, %v583
    %v594 = vsel %vm593, 1, 0
    %595 = xla_tuple %v594
    %596 = xla_tuple %v583, %v585
    %597 = xla_tuple %596
    %vm598 = vcmp.gt.f32.partialorder %v583, %v585
    %v599 = vsel %vm598, 1, 0
    %600 = xla_tuple %v599
    %vm601 = vcmp.ne.s32.totalorder %v594, 0
    %vm602 = vcmp.ne.s32.totalorder %v599, 0
    %v603 = vsel %vm601, %v585, %v583
    %v604 = vsel %vm602, %v585, %v583
    %v605 = vsel %vm546, %v603, %v604
    %s607 = scalar_lea.vmem [#allocation2], 8
    %608 = vst [vmem:[%s607] sm:$0xff] %v605
    %v609 = vsel %vm601, %v590, %v588
    %v610 = vsel %vm602, %v590, %v588
    %v611 = vsel %vm546, %v609, %v610
    %s613 = scalar_lea.vmem [#allocation6], 8
    %614 = vst [vmem:[%s613] sm:$0xff] %v611
    %v615 = vlaneseq
    %v616 = vand.u32 %v615, 127
    %v617 = vxor.u32 %v616, 4
    %618 = vset.pattern.permute.xlu0 %v617
    %v619 = vlaneseq
    %v620 = vand.u32 %v619, 127
    %v621 = vand.u32 %v620, 4
    %vm622 = vcmp.eq.s32.totalorder 0, %v621
    %s624 = scalar_lea.vmem [#allocation2], 0
    %v625 = vld [vmem:[%s624] sm:$0xff]
    %626 = vperm.xlu0 %618, %v625
    %v627 = vpop.permute.xlu0 %626
    %s629 = scalar_lea.vmem [#allocation6], 0
    %v630 = vld [vmem:[%s629] sm:$0xff]
    %631 = vperm.xlu0 %618, %v630
    %v632 = vpop.permute.xlu0 %631
    %633 = xla_tuple %v627, %v625
    %634 = xla_tuple %633
    %vm635 = vcmp.gt.f32.partialorder %v627, %v625
    %v636 = vsel %vm635, 1, 0
    %637 = xla_tuple %v636
    %638 = xla_tuple %v625, %v627
    %639 = xla_tuple %638
    %vm640 = vcmp.gt.f32.partialorder %v625, %v627
    %v641 = vsel %vm640, 1, 0
    %642 = xla_tuple %v641
    %vm643 = vcmp.ne.s32.totalorder %v636, 0
    %vm644 = vcmp.ne.s32.totalorder %v641, 0
    %v645 = vsel %vm643, %v627, %v625
    %v646 = vsel %vm644, %v627, %v625
    %v647 = vsel %vm622, %v645, %v646
    %s649 = scalar_lea.vmem [#allocation2], 0
    %650 = vst [vmem:[%s649] sm:$0xff] %v647
    %v651 = vsel %vm643, %v632, %v630
    %v652 = vsel %vm644, %v632, %v630
    %v653 = vsel %vm622, %v651, %v652
    %s655 = scalar_lea.vmem [#allocation6], 0
    %656 = vst [vmem:[%s655] sm:$0xff] %v653
    %s658 = scalar_lea.vmem [#allocation2], 8
    %v659 = vld [vmem:[%s658] sm:$0xff]
    %660 = vperm.xlu0 %618, %v659
    %v661 = vpop.permute.xlu0 %660
    %s663 = scalar_lea.vmem [#allocation6], 8
    %v664 = vld [vmem:[%s663] sm:$0xff]
    %665 = vperm.xlu0 %618, %v664
    %v666 = vpop.permute.xlu0 %665
    %667 = xla_tuple %v661, %v659
    %668 = xla_tuple %667
    %vm669 = vcmp.gt.f32.partialorder %v661, %v659
    %v670 = vsel %vm669, 1, 0
    %671 = xla_tuple %v670
    %672 = xla_tuple %v659, %v661
    %673 = xla_tuple %672
    %vm674 = vcmp.gt.f32.partialorder %v659, %v661
    %v675 = vsel %vm674, 1, 0
    %676 = xla_tuple %v675
    %vm677 = vcmp.ne.s32.totalorder %v670, 0
    %vm678 = vcmp.ne.s32.totalorder %v675, 0
    %v679 = vsel %vm677, %v661, %v659
    %v680 = vsel %vm678, %v661, %v659
    %v681 = vsel %vm622, %v679, %v680
    %s683 = scalar_lea.vmem [#allocation2], 8
    %684 = vst [vmem:[%s683] sm:$0xff] %v681
    %v685 = vsel %vm677, %v666, %v664
    %v686 = vsel %vm678, %v666, %v664
    %v687 = vsel %vm622, %v685, %v686
    %s689 = scalar_lea.vmem [#allocation6], 8
    %690 = vst [vmem:[%s689] sm:$0xff] %v687
    %v691 = vlaneseq
    %v692 = vand.u32 %v691, 127
    %v693 = vxor.u32 %v692, 2
    %694 = vset.pattern.permute.xlu0 %v693
    %v695 = vlaneseq
    %v696 = vand.u32 %v695, 127
    %v697 = vand.u32 %v696, 2
    %vm698 = vcmp.eq.s32.totalorder 0, %v697
    %s700 = scalar_lea.vmem [#allocation2], 0
    %v701 = vld [vmem:[%s700] sm:$0xff]
    %702 = vperm.xlu0 %694, %v701
    %v703 = vpop.permute.xlu0 %702
    %s705 = scalar_lea.vmem [#allocation6], 0
    %v706 = vld [vmem:[%s705] sm:$0xff]
    %707 = vperm.xlu0 %694, %v706
    %v708 = vpop.permute.xlu0 %707
    %709 = xla_tuple %v703, %v701
    %710 = xla_tuple %709
    %vm711 = vcmp.gt.f32.partialorder %v703, %v701
    %v712 = vsel %vm711, 1, 0
    %713 = xla_tuple %v712
    %714 = xla_tuple %v701, %v703
    %715 = xla_tuple %714
    %vm716 = vcmp.gt.f32.partialorder %v701, %v703
    %v717 = vsel %vm716, 1, 0
    %718 = xla_tuple %v717
    %vm719 = vcmp.ne.s32.totalorder %v712, 0
    %vm720 = vcmp.ne.s32.totalorder %v717, 0
    %v721 = vsel %vm719, %v703, %v701
    %v722 = vsel %vm720, %v703, %v701
    %v723 = vsel %vm698, %v721, %v722
    %s725 = scalar_lea.vmem [#allocation2], 0
    %726 = vst [vmem:[%s725] sm:$0xff] %v723
    %v727 = vsel %vm719, %v708, %v706
    %v728 = vsel %vm720, %v708, %v706
    %v729 = vsel %vm698, %v727, %v728
    %s731 = scalar_lea.vmem [#allocation6], 0
    %732 = vst [vmem:[%s731] sm:$0xff] %v729
    %s734 = scalar_lea.vmem [#allocation2], 8
    %v735 = vld [vmem:[%s734] sm:$0xff]
    %736 = vperm.xlu0 %694, %v735
    %v737 = vpop.permute.xlu0 %736
    %s739 = scalar_lea.vmem [#allocation6], 8
    %v740 = vld [vmem:[%s739] sm:$0xff]
    %741 = vperm.xlu0 %694, %v740
    %v742 = vpop.permute.xlu0 %741
    %743 = xla_tuple %v737, %v735
    %744 = xla_tuple %743
    %vm745 = vcmp.gt.f32.partialorder %v737, %v735
    %v746 = vsel %vm745, 1, 0
    %747 = xla_tuple %v746
    %748 = xla_tuple %v735, %v737
    %749 = xla_tuple %748
    %vm750 = vcmp.gt.f32.partialorder %v735, %v737
    %v751 = vsel %vm750, 1, 0
    %752 = xla_tuple %v751
    %vm753 = vcmp.ne.s32.totalorder %v746, 0
    %vm754 = vcmp.ne.s32.totalorder %v751, 0
    %v755 = vsel %vm753, %v737, %v735
    %v756 = vsel %vm754, %v737, %v735
    %v757 = vsel %vm698, %v755, %v756
    %s759 = scalar_lea.vmem [#allocation2], 8
    %760 = vst [vmem:[%s759] sm:$0xff] %v757
    %v761 = vsel %vm753, %v742, %v740
    %v762 = vsel %vm754, %v742, %v740
    %v763 = vsel %vm698, %v761, %v762
    %s765 = scalar_lea.vmem [#allocation6], 8
    %766 = vst [vmem:[%s765] sm:$0xff] %v763
    %v767 = vlaneseq
    %v768 = vand.u32 %v767, 127
    %v769 = vxor.u32 %v768, 1
    %770 = vset.pattern.permute.xlu0 %v769
    %v771 = vlaneseq
    %v772 = vand.u32 %v771, 127
    %v773 = vand.u32 %v772, 1
    %vm774 = vcmp.eq.s32.totalorder 0, %v773
    %s776 = scalar_lea.vmem [#allocation2], 0
    %v777 = vld [vmem:[%s776] sm:$0xff]
    %778 = vperm.xlu0 %770, %v777
    %v779 = vpop.permute.xlu0 %778
    %s781 = scalar_lea.vmem [#allocation6], 0
    %v782 = vld [vmem:[%s781] sm:$0xff]
    %783 = vperm.xlu0 %770, %v782
    %v784 = vpop.permute.xlu0 %783
    %785 = xla_tuple %v779, %v777
    %786 = xla_tuple %785
    %vm787 = vcmp.gt.f32.partialorder %v779, %v777
    %v788 = vsel %vm787, 1, 0
    %789 = xla_tuple %v788
    %790 = xla_tuple %v777, %v779
    %791 = xla_tuple %790
    %vm792 = vcmp.gt.f32.partialorder %v777, %v779
    %v793 = vsel %vm792, 1, 0
    %794 = xla_tuple %v793
    %vm795 = vcmp.ne.s32.totalorder %v788, 0
    %vm796 = vcmp.ne.s32.totalorder %v793, 0
    %v797 = vsel %vm795, %v779, %v777
    %v798 = vsel %vm796, %v779, %v777
    %v799 = vsel %vm774, %v797, %v798
    %s801 = scalar_lea.vmem [#allocation2], 0
    %802 = vst [vmem:[%s801] sm:$0xff] %v799
    %v803 = vsel %vm795, %v784, %v782
    %v804 = vsel %vm796, %v784, %v782
    %v805 = vsel %vm774, %v803, %v804
    %s807 = scalar_lea.vmem [#allocation6], 0
    %808 = vst [vmem:[%s807] sm:$0xff] %v805
    %s810 = scalar_lea.vmem [#allocation2], 8
    %v811 = vld [vmem:[%s810] sm:$0xff]
    %812 = vperm.xlu0 %770, %v811
    %v813 = vpop.permute.xlu0 %812
    %s815 = scalar_lea.vmem [#allocation6], 8
    %v816 = vld [vmem:[%s815] sm:$0xff]
    %817 = vperm.xlu0 %770, %v816
    %v818 = vpop.permute.xlu0 %817
    %819 = xla_tuple %v813, %v811
    %820 = xla_tuple %819
    %vm821 = vcmp.gt.f32.partialorder %v813, %v811
    %v822 = vsel %vm821, 1, 0
    %823 = xla_tuple %v822
    %824 = xla_tuple %v811, %v813
    %825 = xla_tuple %824
    %vm826 = vcmp.gt.f32.partialorder %v811, %v813
    %v827 = vsel %vm826, 1, 0
    %828 = xla_tuple %v827
    %vm829 = vcmp.ne.s32.totalorder %v822, 0
    %vm830 = vcmp.ne.s32.totalorder %v827, 0
    %v831 = vsel %vm829, %v813, %v811
    %v832 = vsel %vm830, %v813, %v811
    %v833 = vsel %vm774, %v831, %v832
    %s835 = scalar_lea.vmem [#allocation2], 8
    %836 = vst [vmem:[%s835] sm:$0xff] %v833
    %v837 = vsel %vm829, %v818, %v816
    %v838 = vsel %vm830, %v818, %v816
    %v839 = vsel %vm774, %v837, %v838
    %s841 = scalar_lea.vmem [#allocation6], 8
    %842 = vst [vmem:[%s841] sm:$0xff] %v839
    %v843 = vlaneseq
    %v844 = vand.u32 %v843, 127
    %v845 = vxor.u32 %v844, 31
    %846 = vset.pattern.permute.xlu0 %v845
    %v847 = vlaneseq
    %v848 = vand.u32 %v847, 127
    %v849 = vand.u32 %v848, 16
    %vm850 = vcmp.eq.s32.totalorder 0, %v849
    %s852 = scalar_lea.vmem [#allocation2], 0
    %v853 = vld [vmem:[%s852] sm:$0xff]
    %854 = vperm.xlu0 %846, %v853
    %v855 = vpop.permute.xlu0 %854
    %s857 = scalar_lea.vmem [#allocation6], 0
    %v858 = vld [vmem:[%s857] sm:$0xff]
    %859 = vperm.xlu0 %846, %v858
    %v860 = vpop.permute.xlu0 %859
    %861 = xla_tuple %v855, %v853
    %862 = xla_tuple %861
    %vm863 = vcmp.gt.f32.partialorder %v855, %v853
    %v864 = vsel %vm863, 1, 0
    %865 = xla_tuple %v864
    %866 = xla_tuple %v853, %v855
    %867 = xla_tuple %866
    %vm868 = vcmp.gt.f32.partialorder %v853, %v855
    %v869 = vsel %vm868, 1, 0
    %870 = xla_tuple %v869
    %vm871 = vcmp.ne.s32.totalorder %v864, 0
    %vm872 = vcmp.ne.s32.totalorder %v869, 0
    %v873 = vsel %vm871, %v855, %v853
    %v874 = vsel %vm872, %v855, %v853
    %v875 = vsel %vm850, %v873, %v874
    %s877 = scalar_lea.vmem [#allocation2], 0
    %878 = vst [vmem:[%s877] sm:$0xff] %v875
    %v879 = vsel %vm871, %v860, %v858
    %v880 = vsel %vm872, %v860, %v858
    %v881 = vsel %vm850, %v879, %v880
    %s883 = scalar_lea.vmem [#allocation6], 0
    %884 = vst [vmem:[%s883] sm:$0xff] %v881
    %s886 = scalar_lea.vmem [#allocation2], 8
    %v887 = vld [vmem:[%s886] sm:$0xff]
    %888 = vperm.xlu0 %846, %v887
    %v889 = vpop.permute.xlu0 %888
    %s891 = scalar_lea.vmem [#allocation6], 8
    %v892 = vld [vmem:[%s891] sm:$0xff]
    %893 = vperm.xlu0 %846, %v892
    %v894 = vpop.permute.xlu0 %893
    %895 = xla_tuple %v889, %v887
    %896 = xla_tuple %895
    %vm897 = vcmp.gt.f32.partialorder %v889, %v887
    %v898 = vsel %vm897, 1, 0
    %899 = xla_tuple %v898
    %900 = xla_tuple %v887, %v889
    %901 = xla_tuple %900
    %vm902 = vcmp.gt.f32.partialorder %v887, %v889
    %v903 = vsel %vm902, 1, 0
    %904 = xla_tuple %v903
    %vm905 = vcmp.ne.s32.totalorder %v898, 0
    %vm906 = vcmp.ne.s32.totalorder %v903, 0
    %v907 = vsel %vm905, %v889, %v887
    %v908 = vsel %vm906, %v889, %v887
    %v909 = vsel %vm850, %v907, %v908
    %s911 = scalar_lea.vmem [#allocation2], 8
    %912 = vst [vmem:[%s911] sm:$0xff] %v909
    %v913 = vsel %vm905, %v894, %v892
    %v914 = vsel %vm906, %v894, %v892
    %v915 = vsel %vm850, %v913, %v914
    %s917 = scalar_lea.vmem [#allocation6], 8
    %918 = vst [vmem:[%s917] sm:$0xff] %v915
    %v919 = vlaneseq
    %v920 = vand.u32 %v919, 127
    %v921 = vxor.u32 %v920, 8
    %922 = vset.pattern.permute.xlu0 %v921
    %v923 = vlaneseq
    %v924 = vand.u32 %v923, 127
    %v925 = vand.u32 %v924, 8
    %vm926 = vcmp.eq.s32.totalorder 0, %v925
    %s928 = scalar_lea.vmem [#allocation2], 0
    %v929 = vld [vmem:[%s928] sm:$0xff]
    %930 = vperm.xlu0 %922, %v929
    %v931 = vpop.permute.xlu0 %930
    %s933 = scalar_lea.vmem [#allocation6], 0
    %v934 = vld [vmem:[%s933] sm:$0xff]
    %935 = vperm.xlu0 %922, %v934
    %v936 = vpop.permute.xlu0 %935
    %937 = xla_tuple %v931, %v929
    %938 = xla_tuple %937
    %vm939 = vcmp.gt.f32.partialorder %v931, %v929
    %v940 = vsel %vm939, 1, 0
    %941 = xla_tuple %v940
    %942 = xla_tuple %v929, %v931
    %943 = xla_tuple %942
    %vm944 = vcmp.gt.f32.partialorder %v929, %v931
    %v945 = vsel %vm944, 1, 0
    %946 = xla_tuple %v945
    %vm947 = vcmp.ne.s32.totalorder %v940, 0
    %vm948 = vcmp.ne.s32.totalorder %v945, 0
    %v949 = vsel %vm947, %v931, %v929
    %v950 = vsel %vm948, %v931, %v929
    %v951 = vsel %vm926, %v949, %v950
    %s953 = scalar_lea.vmem [#allocation2], 0
    %954 = vst [vmem:[%s953] sm:$0xff] %v951
    %v955 = vsel %vm947, %v936, %v934
    %v956 = vsel %vm948, %v936, %v934
    %v957 = vsel %vm926, %v955, %v956
    %s959 = scalar_lea.vmem [#allocation6], 0
    %960 = vst [vmem:[%s959] sm:$0xff] %v957
    %s962 = scalar_lea.vmem [#allocation2], 8
    %v963 = vld [vmem:[%s962] sm:$0xff]
    %964 = vperm.xlu0 %922, %v963
    %v965 = vpop.permute.xlu0 %964
    %s967 = scalar_lea.vmem [#allocation6], 8
    %v968 = vld [vmem:[%s967] sm:$0xff]
    %969 = vperm.xlu0 %922, %v968
    %v970 = vpop.permute.xlu0 %969
    %971 = xla_tuple %v965, %v963
    %972 = xla_tuple %971
    %vm973 = vcmp.gt.f32.partialorder %v965, %v963
    %v974 = vsel %vm973, 1, 0
    %975 = xla_tuple %v974
    %976 = xla_tuple %v963, %v965
    %977 = xla_tuple %976
    %vm978 = vcmp.gt.f32.partialorder %v963, %v965
    %v979 = vsel %vm978, 1, 0
    %980 = xla_tuple %v979
    %vm981 = vcmp.ne.s32.totalorder %v974, 0
    %vm982 = vcmp.ne.s32.totalorder %v979, 0
    %v983 = vsel %vm981, %v965, %v963
    %v984 = vsel %vm982, %v965, %v963
    %v985 = vsel %vm926, %v983, %v984
    %s987 = scalar_lea.vmem [#allocation2], 8
    %988 = vst [vmem:[%s987] sm:$0xff] %v985
    %v989 = vsel %vm981, %v970, %v968
    %v990 = vsel %vm982, %v970, %v968
    %v991 = vsel %vm926, %v989, %v990
    %s993 = scalar_lea.vmem [#allocation6], 8
    %994 = vst [vmem:[%s993] sm:$0xff] %v991
    %v995 = vlaneseq
    %v996 = vand.u32 %v995, 127
    %v997 = vxor.u32 %v996, 4
    %998 = vset.pattern.permute.xlu0 %v997
    %v999 = vlaneseq
    %v1000 = vand.u32 %v999, 127
    %v1001 = vand.u32 %v1000, 4
    %vm1002 = vcmp.eq.s32.totalorder 0, %v1001
    %s1004 = scalar_lea.vmem [#allocation2], 0
    %v1005 = vld [vmem:[%s1004] sm:$0xff]
    %1006 = vperm.xlu0 %998, %v1005
    %v1007 = vpop.permute.xlu0 %1006
    %s1009 = scalar_lea.vmem [#allocation6], 0
    %v1010 = vld [vmem:[%s1009] sm:$0xff]
    %1011 = vperm.xlu0 %998, %v1010
    %v1012 = vpop.permute.xlu0 %1011
    %1013 = xla_tuple %v1007, %v1005
    %1014 = xla_tuple %1013
    %vm1015 = vcmp.gt.f32.partialorder %v1007, %v1005
    %v1016 = vsel %vm1015, 1, 0
    %1017 = xla_tuple %v1016
    %1018 = xla_tuple %v1005, %v1007
    %1019 = xla_tuple %1018
    %vm1020 = vcmp.gt.f32.partialorder %v1005, %v1007
    %v1021 = vsel %vm1020, 1, 0
    %1022 = xla_tuple %v1021
    %vm1023 = vcmp.ne.s32.totalorder %v1016, 0
    %vm1024 = vcmp.ne.s32.totalorder %v1021, 0
    %v1025 = vsel %vm1023, %v1007, %v1005
    %v1026 = vsel %vm1024, %v1007, %v1005
    %v1027 = vsel %vm1002, %v1025, %v1026
    %s1029 = scalar_lea.vmem [#allocation2], 0
    %1030 = vst [vmem:[%s1029] sm:$0xff] %v1027
    %v1031 = vsel %vm1023, %v1012, %v1010
    %v1032 = vsel %vm1024, %v1012, %v1010
    %v1033 = vsel %vm1002, %v1031, %v1032
    %s1035 = scalar_lea.vmem [#allocation6], 0
    %1036 = vst [vmem:[%s1035] sm:$0xff] %v1033
    %s1038 = scalar_lea.vmem [#allocation2], 8
    %v1039 = vld [vmem:[%s1038] sm:$0xff]
    %1040 = vperm.xlu0 %998, %v1039
    %v1041 = vpop.permute.xlu0 %1040
    %s1043 = scalar_lea.vmem [#allocation6], 8
    %v1044 = vld [vmem:[%s1043] sm:$0xff]
    %1045 = vperm.xlu0 %998, %v1044
    %v1046 = vpop.permute.xlu0 %1045
    %1047 = xla_tuple %v1041, %v1039
    %1048 = xla_tuple %1047
    %vm1049 = vcmp.gt.f32.partialorder %v1041, %v1039
    %v1050 = vsel %vm1049, 1, 0
    %1051 = xla_tuple %v1050
    %1052 = xla_tuple %v1039, %v1041
    %1053 = xla_tuple %1052
    %vm1054 = vcmp.gt.f32.partialorder %v1039, %v1041
    %v1055 = vsel %vm1054, 1, 0
    %1056 = xla_tuple %v1055
    %vm1057 = vcmp.ne.s32.totalorder %v1050, 0
    %vm1058 = vcmp.ne.s32.totalorder %v1055, 0
    %v1059 = vsel %vm1057, %v1041, %v1039
    %v1060 = vsel %vm1058, %v1041, %v1039
    %v1061 = vsel %vm1002, %v1059, %v1060
    %s1063 = scalar_lea.vmem [#allocation2], 8
    %1064 = vst [vmem:[%s1063] sm:$0xff] %v1061
    %v1065 = vsel %vm1057, %v1046, %v1044
    %v1066 = vsel %vm1058, %v1046, %v1044
    %v1067 = vsel %vm1002, %v1065, %v1066
    %s1069 = scalar_lea.vmem [#allocation6], 8
    %1070 = vst [vmem:[%s1069] sm:$0xff] %v1067
    %v1071 = vlaneseq
    %v1072 = vand.u32 %v1071, 127
    %v1073 = vxor.u32 %v1072, 2
    %1074 = vset.pattern.permute.xlu0 %v1073
    %v1075 = vlaneseq
    %v1076 = vand.u32 %v1075, 127
    %v1077 = vand.u32 %v1076, 2
    %vm1078 = vcmp.eq.s32.totalorder 0, %v1077
    %s1080 = scalar_lea.vmem [#allocation2], 0
    %v1081 = vld [vmem:[%s1080] sm:$0xff]
    %1082 = vperm.xlu0 %1074, %v1081
    %v1083 = vpop.permute.xlu0 %1082
    %s1085 = scalar_lea.vmem [#allocation6], 0
    %v1086 = vld [vmem:[%s1085] sm:$0xff]
    %1087 = vperm.xlu0 %1074, %v1086
    %v1088 = vpop.permute.xlu0 %1087
    %1089 = xla_tuple %v1083, %v1081
    %1090 = xla_tuple %1089
    %vm1091 = vcmp.gt.f32.partialorder %v1083, %v1081
    %v1092 = vsel %vm1091, 1, 0
    %1093 = xla_tuple %v1092
    %1094 = xla_tuple %v1081, %v1083
    %1095 = xla_tuple %1094
    %vm1096 = vcmp.gt.f32.partialorder %v1081, %v1083
    %v1097 = vsel %vm1096, 1, 0
    %1098 = xla_tuple %v1097
    %vm1099 = vcmp.ne.s32.totalorder %v1092, 0
    %vm1100 = vcmp.ne.s32.totalorder %v1097, 0
    %v1101 = vsel %vm1099, %v1083, %v1081
    %v1102 = vsel %vm1100, %v1083, %v1081
    %v1103 = vsel %vm1078, %v1101, %v1102
    %s1105 = scalar_lea.vmem [#allocation2], 0
    %1106 = vst [vmem:[%s1105] sm:$0xff] %v1103
    %v1107 = vsel %vm1099, %v1088, %v1086
    %v1108 = vsel %vm1100, %v1088, %v1086
    %v1109 = vsel %vm1078, %v1107, %v1108
    %s1111 = scalar_lea.vmem [#allocation6], 0
    %1112 = vst [vmem:[%s1111] sm:$0xff] %v1109
    %s1114 = scalar_lea.vmem [#allocation2], 8
    %v1115 = vld [vmem:[%s1114] sm:$0xff]
    %1116 = vperm.xlu0 %1074, %v1115
    %v1117 = vpop.permute.xlu0 %1116
    %s1119 = scalar_lea.vmem [#allocation6], 8
    %v1120 = vld [vmem:[%s1119] sm:$0xff]
    %1121 = vperm.xlu0 %1074, %v1120
    %v1122 = vpop.permute.xlu0 %1121
    %1123 = xla_tuple %v1117, %v1115
    %1124 = xla_tuple %1123
    %vm1125 = vcmp.gt.f32.partialorder %v1117, %v1115
    %v1126 = vsel %vm1125, 1, 0
    %1127 = xla_tuple %v1126
    %1128 = xla_tuple %v1115, %v1117
    %1129 = xla_tuple %1128
    %vm1130 = vcmp.gt.f32.partialorder %v1115, %v1117
    %v1131 = vsel %vm1130, 1, 0
    %1132 = xla_tuple %v1131
    %vm1133 = vcmp.ne.s32.totalorder %v1126, 0
    %vm1134 = vcmp.ne.s32.totalorder %v1131, 0
    %v1135 = vsel %vm1133, %v1117, %v1115
    %v1136 = vsel %vm1134, %v1117, %v1115
    %v1137 = vsel %vm1078, %v1135, %v1136
    %s1139 = scalar_lea.vmem [#allocation2], 8
    %1140 = vst [vmem:[%s1139] sm:$0xff] %v1137
    %v1141 = vsel %vm1133, %v1122, %v1120
    %v1142 = vsel %vm1134, %v1122, %v1120
    %v1143 = vsel %vm1078, %v1141, %v1142
    %s1145 = scalar_lea.vmem [#allocation6], 8
    %1146 = vst [vmem:[%s1145] sm:$0xff] %v1143
    %v1147 = vlaneseq
    %v1148 = vand.u32 %v1147, 127
    %v1149 = vxor.u32 %v1148, 1
    %1150 = vset.pattern.permute.xlu0 %v1149
    %v1151 = vlaneseq
    %v1152 = vand.u32 %v1151, 127
    %v1153 = vand.u32 %v1152, 1
    %vm1154 = vcmp.eq.s32.totalorder 0, %v1153
    %s1156 = scalar_lea.vmem [#allocation2], 0
    %v1157 = vld [vmem:[%s1156] sm:$0xff]
    %1158 = vperm.xlu0 %1150, %v1157
    %v1159 = vpop.permute.xlu0 %1158
    %s1161 = scalar_lea.vmem [#allocation6], 0
    %v1162 = vld [vmem:[%s1161] sm:$0xff]
    %1163 = vperm.xlu0 %1150, %v1162
    %v1164 = vpop.permute.xlu0 %1163
    %1165 = xla_tuple %v1159, %v1157
    %1166 = xla_tuple %1165
    %vm1167 = vcmp.gt.f32.partialorder %v1159, %v1157
    %v1168 = vsel %vm1167, 1, 0
    %1169 = xla_tuple %v1168
    %1170 = xla_tuple %v1157, %v1159
    %1171 = xla_tuple %1170
    %vm1172 = vcmp.gt.f32.partialorder %v1157, %v1159
    %v1173 = vsel %vm1172, 1, 0
    %1174 = xla_tuple %v1173
    %vm1175 = vcmp.ne.s32.totalorder %v1168, 0
    %vm1176 = vcmp.ne.s32.totalorder %v1173, 0
    %v1177 = vsel %vm1175, %v1159, %v1157
    %v1178 = vsel %vm1176, %v1159, %v1157
    %v1179 = vsel %vm1154, %v1177, %v1178
    %s1181 = scalar_lea.vmem [#allocation2], 0
    %1182 = vst [vmem:[%s1181] sm:$0xff] %v1179
    %v1183 = vsel %vm1175, %v1164, %v1162
    %v1184 = vsel %vm1176, %v1164, %v1162
    %v1185 = vsel %vm1154, %v1183, %v1184
    %s1187 = scalar_lea.vmem [#allocation6], 0
    %1188 = vst [vmem:[%s1187] sm:$0xff] %v1185
    %s1190 = scalar_lea.vmem [#allocation2], 8
    %v1191 = vld [vmem:[%s1190] sm:$0xff]
    %1192 = vperm.xlu0 %1150, %v1191
    %v1193 = vpop.permute.xlu0 %1192
    %s1195 = scalar_lea.vmem [#allocation6], 8
    %v1196 = vld [vmem:[%s1195] sm:$0xff]
    %1197 = vperm.xlu0 %1150, %v1196
    %v1198 = vpop.permute.xlu0 %1197
    %1199 = xla_tuple %v1193, %v1191
    %1200 = xla_tuple %1199
    %vm1201 = vcmp.gt.f32.partialorder %v1193, %v1191
    %v1202 = vsel %vm1201, 1, 0
    %1203 = xla_tuple %v1202
    %1204 = xla_tuple %v1191, %v1193
    %1205 = xla_tuple %1204
    %vm1206 = vcmp.gt.f32.partialorder %v1191, %v1193
    %v1207 = vsel %vm1206, 1, 0
    %1208 = xla_tuple %v1207
    %vm1209 = vcmp.ne.s32.totalorder %v1202, 0
    %vm1210 = vcmp.ne.s32.totalorder %v1207, 0
    %v1211 = vsel %vm1209, %v1193, %v1191
    %v1212 = vsel %vm1210, %v1193, %v1191
    %v1213 = vsel %vm1154, %v1211, %v1212
    %s1215 = scalar_lea.vmem [#allocation2], 8
    %1216 = vst [vmem:[%s1215] sm:$0xff] %v1213
    %v1217 = vsel %vm1209, %v1198, %v1196
    %v1218 = vsel %vm1210, %v1198, %v1196
    %v1219 = vsel %vm1154, %v1217, %v1218
    %s1221 = scalar_lea.vmem [#allocation6], 8
    %1222 = vst [vmem:[%s1221] sm:$0xff] %v1219
    %v1223 = vlaneseq
    %v1224 = vand.u32 %v1223, 127
    %v1225 = vxor.u32 %v1224, 63
    %1226 = vset.pattern.permute.xlu0 %v1225
    %v1227 = vlaneseq
    %v1228 = vand.u32 %v1227, 127
    %v1229 = vand.u32 %v1228, 32
    %vm1230 = vcmp.eq.s32.totalorder 0, %v1229
    %s1232 = scalar_lea.vmem [#allocation2], 0
    %v1233 = vld [vmem:[%s1232] sm:$0xff]
    %1234 = vperm.xlu0 %1226, %v1233
    %v1235 = vpop.permute.xlu0 %1234
    %s1237 = scalar_lea.vmem [#allocation6], 0
    %v1238 = vld [vmem:[%s1237] sm:$0xff]
    %1239 = vperm.xlu0 %1226, %v1238
    %v1240 = vpop.permute.xlu0 %1239
    %1241 = xla_tuple %v1235, %v1233
    %1242 = xla_tuple %1241
    %vm1243 = vcmp.gt.f32.partialorder %v1235, %v1233
    %v1244 = vsel %vm1243, 1, 0
    %1245 = xla_tuple %v1244
    %1246 = xla_tuple %v1233, %v1235
    %1247 = xla_tuple %1246
    %vm1248 = vcmp.gt.f32.partialorder %v1233, %v1235
    %v1249 = vsel %vm1248, 1, 0
    %1250 = xla_tuple %v1249
    %vm1251 = vcmp.ne.s32.totalorder %v1244, 0
    %vm1252 = vcmp.ne.s32.totalorder %v1249, 0
    %v1253 = vsel %vm1251, %v1235, %v1233
    %v1254 = vsel %vm1252, %v1235, %v1233
    %v1255 = vsel %vm1230, %v1253, %v1254
    %s1257 = scalar_lea.vmem [#allocation2], 0
    %1258 = vst [vmem:[%s1257] sm:$0xff] %v1255
    %v1259 = vsel %vm1251, %v1240, %v1238
    %v1260 = vsel %vm1252, %v1240, %v1238
    %v1261 = vsel %vm1230, %v1259, %v1260
    %s1263 = scalar_lea.vmem [#allocation6], 0
    %1264 = vst [vmem:[%s1263] sm:$0xff] %v1261
    %s1266 = scalar_lea.vmem [#allocation2], 8
    %v1267 = vld [vmem:[%s1266] sm:$0xff]
    %1268 = vperm.xlu0 %1226, %v1267
    %v1269 = vpop.permute.xlu0 %1268
    %s1271 = scalar_lea.vmem [#allocation6], 8
    %v1272 = vld [vmem:[%s1271] sm:$0xff]
    %1273 = vperm.xlu0 %1226, %v1272
    %v1274 = vpop.permute.xlu0 %1273
    %1275 = xla_tuple %v1269, %v1267
    %1276 = xla_tuple %1275
    %vm1277 = vcmp.gt.f32.partialorder %v1269, %v1267
    %v1278 = vsel %vm1277, 1, 0
    %1279 = xla_tuple %v1278
    %1280 = xla_tuple %v1267, %v1269
    %1281 = xla_tuple %1280
    %vm1282 = vcmp.gt.f32.partialorder %v1267, %v1269
    %v1283 = vsel %vm1282, 1, 0
    %1284 = xla_tuple %v1283
    %vm1285 = vcmp.ne.s32.totalorder %v1278, 0
    %vm1286 = vcmp.ne.s32.totalorder %v1283, 0
    %v1287 = vsel %vm1285, %v1269, %v1267
    %v1288 = vsel %vm1286, %v1269, %v1267
    %v1289 = vsel %vm1230, %v1287, %v1288
    %s1291 = scalar_lea.vmem [#allocation2], 8
    %1292 = vst [vmem:[%s1291] sm:$0xff] %v1289
    %v1293 = vsel %vm1285, %v1274, %v1272
    %v1294 = vsel %vm1286, %v1274, %v1272
    %v1295 = vsel %vm1230, %v1293, %v1294
    %s1297 = scalar_lea.vmem [#allocation6], 8
    %1298 = vst [vmem:[%s1297] sm:$0xff] %v1295
    %v1299 = vlaneseq
    %v1300 = vand.u32 %v1299, 127
    %v1301 = vxor.u32 %v1300, 16
    %1302 = vset.pattern.permute.xlu0 %v1301
    %v1303 = vlaneseq
    %v1304 = vand.u32 %v1303, 127
    %v1305 = vand.u32 %v1304, 16
    %vm1306 = vcmp.eq.s32.totalorder 0, %v1305
    %s1308 = scalar_lea.vmem [#allocation2], 0
    %v1309 = vld [vmem:[%s1308] sm:$0xff]
    %1310 = vperm.xlu0 %1302, %v1309
    %v1311 = vpop.permute.xlu0 %1310
    %s1313 = scalar_lea.vmem [#allocation6], 0
    %v1314 = vld [vmem:[%s1313] sm:$0xff]
    %1315 = vperm.xlu0 %1302, %v1314
    %v1316 = vpop.permute.xlu0 %1315
    %1317 = xla_tuple %v1311, %v1309
    %1318 = xla_tuple %1317
    %vm1319 = vcmp.gt.f32.partialorder %v1311, %v1309
    %v1320 = vsel %vm1319, 1, 0
    %1321 = xla_tuple %v1320
    %1322 = xla_tuple %v1309, %v1311
    %1323 = xla_tuple %1322
    %vm1324 = vcmp.gt.f32.partialorder %v1309, %v1311
    %v1325 = vsel %vm1324, 1, 0
    %1326 = xla_tuple %v1325
    %vm1327 = vcmp.ne.s32.totalorder %v1320, 0
    %vm1328 = vcmp.ne.s32.totalorder %v1325, 0
    %v1329 = vsel %vm1327, %v1311, %v1309
    %v1330 = vsel %vm1328, %v1311, %v1309
    %v1331 = vsel %vm1306, %v1329, %v1330
    %s1333 = scalar_lea.vmem [#allocation2], 0
    %1334 = vst [vmem:[%s1333] sm:$0xff] %v1331
    %v1335 = vsel %vm1327, %v1316, %v1314
    %v1336 = vsel %vm1328, %v1316, %v1314
    %v1337 = vsel %vm1306, %v1335, %v1336
    %s1339 = scalar_lea.vmem [#allocation6], 0
    %1340 = vst [vmem:[%s1339] sm:$0xff] %v1337
    %s1342 = scalar_lea.vmem [#allocation2], 8
    %v1343 = vld [vmem:[%s1342] sm:$0xff]
    %1344 = vperm.xlu0 %1302, %v1343
    %v1345 = vpop.permute.xlu0 %1344
    %s1347 = scalar_lea.vmem [#allocation6], 8
    %v1348 = vld [vmem:[%s1347] sm:$0xff]
    %1349 = vperm.xlu0 %1302, %v1348
    %v1350 = vpop.permute.xlu0 %1349
    %1351 = xla_tuple %v1345, %v1343
    %1352 = xla_tuple %1351
    %vm1353 = vcmp.gt.f32.partialorder %v1345, %v1343
    %v1354 = vsel %vm1353, 1, 0
    %1355 = xla_tuple %v1354
    %1356 = xla_tuple %v1343, %v1345
    %1357 = xla_tuple %1356
    %vm1358 = vcmp.gt.f32.partialorder %v1343, %v1345
    %v1359 = vsel %vm1358, 1, 0
    %1360 = xla_tuple %v1359
    %vm1361 = vcmp.ne.s32.totalorder %v1354, 0
    %vm1362 = vcmp.ne.s32.totalorder %v1359, 0
    %v1363 = vsel %vm1361, %v1345, %v1343
    %v1364 = vsel %vm1362, %v1345, %v1343
    %v1365 = vsel %vm1306, %v1363, %v1364
    %s1367 = scalar_lea.vmem [#allocation2], 8
    %1368 = vst [vmem:[%s1367] sm:$0xff] %v1365
    %v1369 = vsel %vm1361, %v1350, %v1348
    %v1370 = vsel %vm1362, %v1350, %v1348
    %v1371 = vsel %vm1306, %v1369, %v1370
    %s1373 = scalar_lea.vmem [#allocation6], 8
    %1374 = vst [vmem:[%s1373] sm:$0xff] %v1371
    %v1375 = vlaneseq
    %v1376 = vand.u32 %v1375, 127
    %v1377 = vxor.u32 %v1376, 8
    %1378 = vset.pattern.permute.xlu0 %v1377
    %v1379 = vlaneseq
    %v1380 = vand.u32 %v1379, 127
    %v1381 = vand.u32 %v1380, 8
    %vm1382 = vcmp.eq.s32.totalorder 0, %v1381
    %s1384 = scalar_lea.vmem [#allocation2], 0
    %v1385 = vld [vmem:[%s1384] sm:$0xff]
    %1386 = vperm.xlu0 %1378, %v1385
    %v1387 = vpop.permute.xlu0 %1386
    %s1389 = scalar_lea.vmem [#allocation6], 0
    %v1390 = vld [vmem:[%s1389] sm:$0xff]
    %1391 = vperm.xlu0 %1378, %v1390
    %v1392 = vpop.permute.xlu0 %1391
    %1393 = xla_tuple %v1387, %v1385
    %1394 = xla_tuple %1393
    %vm1395 = vcmp.gt.f32.partialorder %v1387, %v1385
    %v1396 = vsel %vm1395, 1, 0
    %1397 = xla_tuple %v1396
    %1398 = xla_tuple %v1385, %v1387
    %1399 = xla_tuple %1398
    %vm1400 = vcmp.gt.f32.partialorder %v1385, %v1387
    %v1401 = vsel %vm1400, 1, 0
    %1402 = xla_tuple %v1401
    %vm1403 = vcmp.ne.s32.totalorder %v1396, 0
    %vm1404 = vcmp.ne.s32.totalorder %v1401, 0
    %v1405 = vsel %vm1403, %v1387, %v1385
    %v1406 = vsel %vm1404, %v1387, %v1385
    %v1407 = vsel %vm1382, %v1405, %v1406
    %s1409 = scalar_lea.vmem [#allocation2], 0
    %1410 = vst [vmem:[%s1409] sm:$0xff] %v1407
    %v1411 = vsel %vm1403, %v1392, %v1390
    %v1412 = vsel %vm1404, %v1392, %v1390
    %v1413 = vsel %vm1382, %v1411, %v1412
    %s1415 = scalar_lea.vmem [#allocation6], 0
    %1416 = vst [vmem:[%s1415] sm:$0xff] %v1413
    %s1418 = scalar_lea.vmem [#allocation2], 8
    %v1419 = vld [vmem:[%s1418] sm:$0xff]
    %1420 = vperm.xlu0 %1378, %v1419
    %v1421 = vpop.permute.xlu0 %1420
    %s1423 = scalar_lea.vmem [#allocation6], 8
    %v1424 = vld [vmem:[%s1423] sm:$0xff]
    %1425 = vperm.xlu0 %1378, %v1424
    %v1426 = vpop.permute.xlu0 %1425
    %1427 = xla_tuple %v1421, %v1419
    %1428 = xla_tuple %1427
    %vm1429 = vcmp.gt.f32.partialorder %v1421, %v1419
    %v1430 = vsel %vm1429, 1, 0
    %1431 = xla_tuple %v1430
    %1432 = xla_tuple %v1419, %v1421
    %1433 = xla_tuple %1432
    %vm1434 = vcmp.gt.f32.partialorder %v1419, %v1421
    %v1435 = vsel %vm1434, 1, 0
    %1436 = xla_tuple %v1435
    %vm1437 = vcmp.ne.s32.totalorder %v1430, 0
    %vm1438 = vcmp.ne.s32.totalorder %v1435, 0
    %v1439 = vsel %vm1437, %v1421, %v1419
    %v1440 = vsel %vm1438, %v1421, %v1419
    %v1441 = vsel %vm1382, %v1439, %v1440
    %s1443 = scalar_lea.vmem [#allocation2], 8
    %1444 = vst [vmem:[%s1443] sm:$0xff] %v1441
    %v1445 = vsel %vm1437, %v1426, %v1424
    %v1446 = vsel %vm1438, %v1426, %v1424
    %v1447 = vsel %vm1382, %v1445, %v1446
    %s1449 = scalar_lea.vmem [#allocation6], 8
    %1450 = vst [vmem:[%s1449] sm:$0xff] %v1447
    %v1451 = vlaneseq
    %v1452 = vand.u32 %v1451, 127
    %v1453 = vxor.u32 %v1452, 4
    %1454 = vset.pattern.permute.xlu0 %v1453
    %v1455 = vlaneseq
    %v1456 = vand.u32 %v1455, 127
    %v1457 = vand.u32 %v1456, 4
    %vm1458 = vcmp.eq.s32.totalorder 0, %v1457
    %s1460 = scalar_lea.vmem [#allocation2], 0
    %v1461 = vld [vmem:[%s1460] sm:$0xff]
    %1462 = vperm.xlu0 %1454, %v1461
    %v1463 = vpop.permute.xlu0 %1462
    %s1465 = scalar_lea.vmem [#allocation6], 0
    %v1466 = vld [vmem:[%s1465] sm:$0xff]
    %1467 = vperm.xlu0 %1454, %v1466
    %v1468 = vpop.permute.xlu0 %1467
    %1469 = xla_tuple %v1463, %v1461
    %1470 = xla_tuple %1469
    %vm1471 = vcmp.gt.f32.partialorder %v1463, %v1461
    %v1472 = vsel %vm1471, 1, 0
    %1473 = xla_tuple %v1472
    %1474 = xla_tuple %v1461, %v1463
    %1475 = xla_tuple %1474
    %vm1476 = vcmp.gt.f32.partialorder %v1461, %v1463
    %v1477 = vsel %vm1476, 1, 0
    %1478 = xla_tuple %v1477
    %vm1479 = vcmp.ne.s32.totalorder %v1472, 0
    %vm1480 = vcmp.ne.s32.totalorder %v1477, 0
    %v1481 = vsel %vm1479, %v1463, %v1461
    %v1482 = vsel %vm1480, %v1463, %v1461
    %v1483 = vsel %vm1458, %v1481, %v1482
    %s1485 = scalar_lea.vmem [#allocation2], 0
    %1486 = vst [vmem:[%s1485] sm:$0xff] %v1483
    %v1487 = vsel %vm1479, %v1468, %v1466
    %v1488 = vsel %vm1480, %v1468, %v1466
    %v1489 = vsel %vm1458, %v1487, %v1488
    %s1491 = scalar_lea.vmem [#allocation6], 0
    %1492 = vst [vmem:[%s1491] sm:$0xff] %v1489
    %s1494 = scalar_lea.vmem [#allocation2], 8
    %v1495 = vld [vmem:[%s1494] sm:$0xff]
    %1496 = vperm.xlu0 %1454, %v1495
    %v1497 = vpop.permute.xlu0 %1496
    %s1499 = scalar_lea.vmem [#allocation6], 8
    %v1500 = vld [vmem:[%s1499] sm:$0xff]
    %1501 = vperm.xlu0 %1454, %v1500
    %v1502 = vpop.permute.xlu0 %1501
    %1503 = xla_tuple %v1497, %v1495
    %1504 = xla_tuple %1503
    %vm1505 = vcmp.gt.f32.partialorder %v1497, %v1495
    %v1506 = vsel %vm1505, 1, 0
    %1507 = xla_tuple %v1506
    %1508 = xla_tuple %v1495, %v1497
    %1509 = xla_tuple %1508
    %vm1510 = vcmp.gt.f32.partialorder %v1495, %v1497
    %v1511 = vsel %vm1510, 1, 0
    %1512 = xla_tuple %v1511
    %vm1513 = vcmp.ne.s32.totalorder %v1506, 0
    %vm1514 = vcmp.ne.s32.totalorder %v1511, 0
    %v1515 = vsel %vm1513, %v1497, %v1495
    %v1516 = vsel %vm1514, %v1497, %v1495
    %v1517 = vsel %vm1458, %v1515, %v1516
    %s1519 = scalar_lea.vmem [#allocation2], 8
    %1520 = vst [vmem:[%s1519] sm:$0xff] %v1517
    %v1521 = vsel %vm1513, %v1502, %v1500
    %v1522 = vsel %vm1514, %v1502, %v1500
    %v1523 = vsel %vm1458, %v1521, %v1522
    %s1525 = scalar_lea.vmem [#allocation6], 8
    %1526 = vst [vmem:[%s1525] sm:$0xff] %v1523
    %v1527 = vlaneseq
    %v1528 = vand.u32 %v1527, 127
    %v1529 = vxor.u32 %v1528, 2
    %1530 = vset.pattern.permute.xlu0 %v1529
    %v1531 = vlaneseq
    %v1532 = vand.u32 %v1531, 127
    %v1533 = vand.u32 %v1532, 2
    %vm1534 = vcmp.eq.s32.totalorder 0, %v1533
    %s1536 = scalar_lea.vmem [#allocation2], 0
    %v1537 = vld [vmem:[%s1536] sm:$0xff]
    %1538 = vperm.xlu0 %1530, %v1537
    %v1539 = vpop.permute.xlu0 %1538
    %s1541 = scalar_lea.vmem [#allocation6], 0
    %v1542 = vld [vmem:[%s1541] sm:$0xff]
    %1543 = vperm.xlu0 %1530, %v1542
    %v1544 = vpop.permute.xlu0 %1543
    %1545 = xla_tuple %v1539, %v1537
    %1546 = xla_tuple %1545
    %vm1547 = vcmp.gt.f32.partialorder %v1539, %v1537
    %v1548 = vsel %vm1547, 1, 0
    %1549 = xla_tuple %v1548
    %1550 = xla_tuple %v1537, %v1539
    %1551 = xla_tuple %1550
    %vm1552 = vcmp.gt.f32.partialorder %v1537, %v1539
    %v1553 = vsel %vm1552, 1, 0
    %1554 = xla_tuple %v1553
    %vm1555 = vcmp.ne.s32.totalorder %v1548, 0
    %vm1556 = vcmp.ne.s32.totalorder %v1553, 0
    %v1557 = vsel %vm1555, %v1539, %v1537
    %v1558 = vsel %vm1556, %v1539, %v1537
    %v1559 = vsel %vm1534, %v1557, %v1558
    %s1561 = scalar_lea.vmem [#allocation2], 0
    %1562 = vst [vmem:[%s1561] sm:$0xff] %v1559
    %v1563 = vsel %vm1555, %v1544, %v1542
    %v1564 = vsel %vm1556, %v1544, %v1542
    %v1565 = vsel %vm1534, %v1563, %v1564
    %s1567 = scalar_lea.vmem [#allocation6], 0
    %1568 = vst [vmem:[%s1567] sm:$0xff] %v1565
    %s1570 = scalar_lea.vmem [#allocation2], 8
    %v1571 = vld [vmem:[%s1570] sm:$0xff]
    %1572 = vperm.xlu0 %1530, %v1571
    %v1573 = vpop.permute.xlu0 %1572
    %s1575 = scalar_lea.vmem [#allocation6], 8
    %v1576 = vld [vmem:[%s1575] sm:$0xff]
    %1577 = vperm.xlu0 %1530, %v1576
    %v1578 = vpop.permute.xlu0 %1577
    %1579 = xla_tuple %v1573, %v1571
    %1580 = xla_tuple %1579
    %vm1581 = vcmp.gt.f32.partialorder %v1573, %v1571
    %v1582 = vsel %vm1581, 1, 0
    %1583 = xla_tuple %v1582
    %1584 = xla_tuple %v1571, %v1573
    %1585 = xla_tuple %1584
    %vm1586 = vcmp.gt.f32.partialorder %v1571, %v1573
    %v1587 = vsel %vm1586, 1, 0
    %1588 = xla_tuple %v1587
    %vm1589 = vcmp.ne.s32.totalorder %v1582, 0
    %vm1590 = vcmp.ne.s32.totalorder %v1587, 0
    %v1591 = vsel %vm1589, %v1573, %v1571
    %v1592 = vsel %vm1590, %v1573, %v1571
    %v1593 = vsel %vm1534, %v1591, %v1592
    %s1595 = scalar_lea.vmem [#allocation2], 8
    %1596 = vst [vmem:[%s1595] sm:$0xff] %v1593
    %v1597 = vsel %vm1589, %v1578, %v1576
    %v1598 = vsel %vm1590, %v1578, %v1576
    %v1599 = vsel %vm1534, %v1597, %v1598
    %s1601 = scalar_lea.vmem [#allocation6], 8
    %1602 = vst [vmem:[%s1601] sm:$0xff] %v1599
    %v1603 = vlaneseq
    %v1604 = vand.u32 %v1603, 127
    %v1605 = vxor.u32 %v1604, 1
    %1606 = vset.pattern.permute.xlu0 %v1605
    %v1607 = vlaneseq
    %v1608 = vand.u32 %v1607, 127
    %v1609 = vand.u32 %v1608, 1
    %vm1610 = vcmp.eq.s32.totalorder 0, %v1609
    %s1612 = scalar_lea.vmem [#allocation2], 0
    %v1613 = vld [vmem:[%s1612] sm:$0xff]
    %1614 = vperm.xlu0 %1606, %v1613
    %v1615 = vpop.permute.xlu0 %1614
    %s1617 = scalar_lea.vmem [#allocation6], 0
    %v1618 = vld [vmem:[%s1617] sm:$0xff]
    %1619 = vperm.xlu0 %1606, %v1618
    %v1620 = vpop.permute.xlu0 %1619
    %1621 = xla_tuple %v1615, %v1613
    %1622 = xla_tuple %1621
    %vm1623 = vcmp.gt.f32.partialorder %v1615, %v1613
    %v1624 = vsel %vm1623, 1, 0
    %1625 = xla_tuple %v1624
    %1626 = xla_tuple %v1613, %v1615
    %1627 = xla_tuple %1626
    %vm1628 = vcmp.gt.f32.partialorder %v1613, %v1615
    %v1629 = vsel %vm1628, 1, 0
    %1630 = xla_tuple %v1629
    %vm1631 = vcmp.ne.s32.totalorder %v1624, 0
    %vm1632 = vcmp.ne.s32.totalorder %v1629, 0
    %v1633 = vsel %vm1631, %v1615, %v1613
    %v1634 = vsel %vm1632, %v1615, %v1613
    %v1635 = vsel %vm1610, %v1633, %v1634
    %s1637 = scalar_lea.vmem [#allocation2], 0
    %1638 = vst [vmem:[%s1637] sm:$0xff] %v1635
    %v1639 = vsel %vm1631, %v1620, %v1618
    %v1640 = vsel %vm1632, %v1620, %v1618
    %v1641 = vsel %vm1610, %v1639, %v1640
    %s1643 = scalar_lea.vmem [#allocation6], 0
    %1644 = vst [vmem:[%s1643] sm:$0xff] %v1641
    %s1646 = scalar_lea.vmem [#allocation2], 8
    %v1647 = vld [vmem:[%s1646] sm:$0xff]
    %1648 = vperm.xlu0 %1606, %v1647
    %v1649 = vpop.permute.xlu0 %1648
    %s1651 = scalar_lea.vmem [#allocation6], 8
    %v1652 = vld [vmem:[%s1651] sm:$0xff]
    %1653 = vperm.xlu0 %1606, %v1652
    %v1654 = vpop.permute.xlu0 %1653
    %1655 = xla_tuple %v1649, %v1647
    %1656 = xla_tuple %1655
    %vm1657 = vcmp.gt.f32.partialorder %v1649, %v1647
    %v1658 = vsel %vm1657, 1, 0
    %1659 = xla_tuple %v1658
    %1660 = xla_tuple %v1647, %v1649
    %1661 = xla_tuple %1660
    %vm1662 = vcmp.gt.f32.partialorder %v1647, %v1649
    %v1663 = vsel %vm1662, 1, 0
    %1664 = xla_tuple %v1663
    %vm1665 = vcmp.ne.s32.totalorder %v1658, 0
    %vm1666 = vcmp.ne.s32.totalorder %v1663, 0
    %v1667 = vsel %vm1665, %v1649, %v1647
    %v1668 = vsel %vm1666, %v1649, %v1647
    %v1669 = vsel %vm1610, %v1667, %v1668
    %s1671 = scalar_lea.vmem [#allocation2], 8
    %1672 = vst [vmem:[%s1671] sm:$0xff] %v1669
    %v1673 = vsel %vm1665, %v1654, %v1652
    %v1674 = vsel %vm1666, %v1654, %v1652
    %v1675 = vsel %vm1610, %v1673, %v1674
    %s1677 = scalar_lea.vmem [#allocation6], 8
    %1678 = vst [vmem:[%s1677] sm:$0xff] %v1675
    %v1679 = vlaneseq
    %v1680 = vand.u32 %v1679, 127
    %v1681 = vxor.u32 %v1680, 127
    %1682 = vset.pattern.permute.xlu0 %v1681
    %v1683 = vlaneseq
    %v1684 = vand.u32 %v1683, 127
    %v1685 = vand.u32 %v1684, 64
    %vm1686 = vcmp.eq.s32.totalorder 0, %v1685
    %s1688 = scalar_lea.vmem [#allocation2], 0
    %v1689 = vld [vmem:[%s1688] sm:$0xff]
    %1690 = vperm.xlu0 %1682, %v1689
    %v1691 = vpop.permute.xlu0 %1690
    %s1693 = scalar_lea.vmem [#allocation6], 0
    %v1694 = vld [vmem:[%s1693] sm:$0xff]
    %1695 = vperm.xlu0 %1682, %v1694
    %v1696 = vpop.permute.xlu0 %1695
    %1697 = xla_tuple %v1691, %v1689
    %1698 = xla_tuple %1697
    %vm1699 = vcmp.gt.f32.partialorder %v1691, %v1689
    %v1700 = vsel %vm1699, 1, 0
    %1701 = xla_tuple %v1700
    %1702 = xla_tuple %v1689, %v1691
    %1703 = xla_tuple %1702
    %vm1704 = vcmp.gt.f32.partialorder %v1689, %v1691
    %v1705 = vsel %vm1704, 1, 0
    %1706 = xla_tuple %v1705
    %vm1707 = vcmp.ne.s32.totalorder %v1700, 0
    %vm1708 = vcmp.ne.s32.totalorder %v1705, 0
    %v1709 = vsel %vm1707, %v1691, %v1689
    %v1710 = vsel %vm1708, %v1691, %v1689
    %v1711 = vsel %vm1686, %v1709, %v1710
    %s1713 = scalar_lea.vmem [#allocation2], 0
    %1714 = vst [vmem:[%s1713] sm:$0xff] %v1711
    %v1715 = vsel %vm1707, %v1696, %v1694
    %v1716 = vsel %vm1708, %v1696, %v1694
    %v1717 = vsel %vm1686, %v1715, %v1716
    %s1719 = scalar_lea.vmem [#allocation6], 0
    %1720 = vst [vmem:[%s1719] sm:$0xff] %v1717
    %s1722 = scalar_lea.vmem [#allocation2], 8
    %v1723 = vld [vmem:[%s1722] sm:$0xff]
    %1724 = vperm.xlu0 %1682, %v1723
    %v1725 = vpop.permute.xlu0 %1724
    %s1727 = scalar_lea.vmem [#allocation6], 8
    %v1728 = vld [vmem:[%s1727] sm:$0xff]
    %1729 = vperm.xlu0 %1682, %v1728
    %v1730 = vpop.permute.xlu0 %1729
    %1731 = xla_tuple %v1725, %v1723
    %1732 = xla_tuple %1731
    %vm1733 = vcmp.gt.f32.partialorder %v1725, %v1723
    %v1734 = vsel %vm1733, 1, 0
    %1735 = xla_tuple %v1734
    %1736 = xla_tuple %v1723, %v1725
    %1737 = xla_tuple %1736
    %vm1738 = vcmp.gt.f32.partialorder %v1723, %v1725
    %v1739 = vsel %vm1738, 1, 0
    %1740 = xla_tuple %v1739
    %vm1741 = vcmp.ne.s32.totalorder %v1734, 0
    %vm1742 = vcmp.ne.s32.totalorder %v1739, 0
    %v1743 = vsel %vm1741, %v1725, %v1723
    %v1744 = vsel %vm1742, %v1725, %v1723
    %v1745 = vsel %vm1686, %v1743, %v1744
    %s1747 = scalar_lea.vmem [#allocation2], 8
    %1748 = vst [vmem:[%s1747] sm:$0xff] %v1745
    %v1749 = vsel %vm1741, %v1730, %v1728
    %v1750 = vsel %vm1742, %v1730, %v1728
    %v1751 = vsel %vm1686, %v1749, %v1750
    %s1753 = scalar_lea.vmem [#allocation6], 8
    %1754 = vst [vmem:[%s1753] sm:$0xff] %v1751
    %v1755 = vlaneseq
    %v1756 = vand.u32 %v1755, 127
    %v1757 = vxor.u32 %v1756, 32
    %1758 = vset.pattern.permute.xlu0 %v1757
    %v1759 = vlaneseq
    %v1760 = vand.u32 %v1759, 127
    %v1761 = vand.u32 %v1760, 32
    %vm1762 = vcmp.eq.s32.totalorder 0, %v1761
    %s1764 = scalar_lea.vmem [#allocation2], 0
    %v1765 = vld [vmem:[%s1764] sm:$0xff]
    %1766 = vperm.xlu0 %1758, %v1765
    %v1767 = vpop.permute.xlu0 %1766
    %s1769 = scalar_lea.vmem [#allocation6], 0
    %v1770 = vld [vmem:[%s1769] sm:$0xff]
    %1771 = vperm.xlu0 %1758, %v1770
    %v1772 = vpop.permute.xlu0 %1771
    %1773 = xla_tuple %v1767, %v1765
    %1774 = xla_tuple %1773
    %vm1775 = vcmp.gt.f32.partialorder %v1767, %v1765
    %v1776 = vsel %vm1775, 1, 0
    %1777 = xla_tuple %v1776
    %1778 = xla_tuple %v1765, %v1767
    %1779 = xla_tuple %1778
    %vm1780 = vcmp.gt.f32.partialorder %v1765, %v1767
    %v1781 = vsel %vm1780, 1, 0
    %1782 = xla_tuple %v1781
    %vm1783 = vcmp.ne.s32.totalorder %v1776, 0
    %vm1784 = vcmp.ne.s32.totalorder %v1781, 0
    %v1785 = vsel %vm1783, %v1767, %v1765
    %v1786 = vsel %vm1784, %v1767, %v1765
    %v1787 = vsel %vm1762, %v1785, %v1786
    %s1789 = scalar_lea.vmem [#allocation2], 0
    %1790 = vst [vmem:[%s1789] sm:$0xff] %v1787
    %v1791 = vsel %vm1783, %v1772, %v1770
    %v1792 = vsel %vm1784, %v1772, %v1770
    %v1793 = vsel %vm1762, %v1791, %v1792
    %s1795 = scalar_lea.vmem [#allocation6], 0
    %1796 = vst [vmem:[%s1795] sm:$0xff] %v1793
    %s1798 = scalar_lea.vmem [#allocation2], 8
    %v1799 = vld [vmem:[%s1798] sm:$0xff]
    %1800 = vperm.xlu0 %1758, %v1799
    %v1801 = vpop.permute.xlu0 %1800
    %s1803 = scalar_lea.vmem [#allocation6], 8
    %v1804 = vld [vmem:[%s1803] sm:$0xff]
    %1805 = vperm.xlu0 %1758, %v1804
    %v1806 = vpop.permute.xlu0 %1805
    %1807 = xla_tuple %v1801, %v1799
    %1808 = xla_tuple %1807
    %vm1809 = vcmp.gt.f32.partialorder %v1801, %v1799
    %v1810 = vsel %vm1809, 1, 0
    %1811 = xla_tuple %v1810
    %1812 = xla_tuple %v1799, %v1801
    %1813 = xla_tuple %1812
    %vm1814 = vcmp.gt.f32.partialorder %v1799, %v1801
    %v1815 = vsel %vm1814, 1, 0
    %1816 = xla_tuple %v1815
    %vm1817 = vcmp.ne.s32.totalorder %v1810, 0
    %vm1818 = vcmp.ne.s32.totalorder %v1815, 0
    %v1819 = vsel %vm1817, %v1801, %v1799
    %v1820 = vsel %vm1818, %v1801, %v1799
    %v1821 = vsel %vm1762, %v1819, %v1820
    %s1823 = scalar_lea.vmem [#allocation2], 8
    %1824 = vst [vmem:[%s1823] sm:$0xff] %v1821
    %v1825 = vsel %vm1817, %v1806, %v1804
    %v1826 = vsel %vm1818, %v1806, %v1804
    %v1827 = vsel %vm1762, %v1825, %v1826
    %s1829 = scalar_lea.vmem [#allocation6], 8
    %1830 = vst [vmem:[%s1829] sm:$0xff] %v1827
    %v1831 = vlaneseq
    %v1832 = vand.u32 %v1831, 127
    %v1833 = vxor.u32 %v1832, 16
    %1834 = vset.pattern.permute.xlu0 %v1833
    %v1835 = vlaneseq
    %v1836 = vand.u32 %v1835, 127
    %v1837 = vand.u32 %v1836, 16
    %vm1838 = vcmp.eq.s32.totalorder 0, %v1837
    %s1840 = scalar_lea.vmem [#allocation2], 0
    %v1841 = vld [vmem:[%s1840] sm:$0xff]
    %1842 = vperm.xlu0 %1834, %v1841
    %v1843 = vpop.permute.xlu0 %1842
    %s1845 = scalar_lea.vmem [#allocation6], 0
    %v1846 = vld [vmem:[%s1845] sm:$0xff]
    %1847 = vperm.xlu0 %1834, %v1846
    %v1848 = vpop.permute.xlu0 %1847
    %1849 = xla_tuple %v1843, %v1841
    %1850 = xla_tuple %1849
    %vm1851 = vcmp.gt.f32.partialorder %v1843, %v1841
    %v1852 = vsel %vm1851, 1, 0
    %1853 = xla_tuple %v1852
    %1854 = xla_tuple %v1841, %v1843
    %1855 = xla_tuple %1854
    %vm1856 = vcmp.gt.f32.partialorder %v1841, %v1843
    %v1857 = vsel %vm1856, 1, 0
    %1858 = xla_tuple %v1857
    %vm1859 = vcmp.ne.s32.totalorder %v1852, 0
    %vm1860 = vcmp.ne.s32.totalorder %v1857, 0
    %v1861 = vsel %vm1859, %v1843, %v1841
    %v1862 = vsel %vm1860, %v1843, %v1841
    %v1863 = vsel %vm1838, %v1861, %v1862
    %s1865 = scalar_lea.vmem [#allocation2], 0
    %1866 = vst [vmem:[%s1865] sm:$0xff] %v1863
    %v1867 = vsel %vm1859, %v1848, %v1846
    %v1868 = vsel %vm1860, %v1848, %v1846
    %v1869 = vsel %vm1838, %v1867, %v1868
    %s1871 = scalar_lea.vmem [#allocation6], 0
    %1872 = vst [vmem:[%s1871] sm:$0xff] %v1869
    %s1874 = scalar_lea.vmem [#allocation2], 8
    %v1875 = vld [vmem:[%s1874] sm:$0xff]
    %1876 = vperm.xlu0 %1834, %v1875
    %v1877 = vpop.permute.xlu0 %1876
    %s1879 = scalar_lea.vmem [#allocation6], 8
    %v1880 = vld [vmem:[%s1879] sm:$0xff]
    %1881 = vperm.xlu0 %1834, %v1880
    %v1882 = vpop.permute.xlu0 %1881
    %1883 = xla_tuple %v1877, %v1875
    %1884 = xla_tuple %1883
    %vm1885 = vcmp.gt.f32.partialorder %v1877, %v1875
    %v1886 = vsel %vm1885, 1, 0
    %1887 = xla_tuple %v1886
    %1888 = xla_tuple %v1875, %v1877
    %1889 = xla_tuple %1888
    %vm1890 = vcmp.gt.f32.partialorder %v1875, %v1877
    %v1891 = vsel %vm1890, 1, 0
    %1892 = xla_tuple %v1891
    %vm1893 = vcmp.ne.s32.totalorder %v1886, 0
    %vm1894 = vcmp.ne.s32.totalorder %v1891, 0
    %v1895 = vsel %vm1893, %v1877, %v1875
    %v1896 = vsel %vm1894, %v1877, %v1875
    %v1897 = vsel %vm1838, %v1895, %v1896
    %s1899 = scalar_lea.vmem [#allocation2], 8
    %1900 = vst [vmem:[%s1899] sm:$0xff] %v1897
    %v1901 = vsel %vm1893, %v1882, %v1880
    %v1902 = vsel %vm1894, %v1882, %v1880
    %v1903 = vsel %vm1838, %v1901, %v1902
    %s1905 = scalar_lea.vmem [#allocation6], 8
    %1906 = vst [vmem:[%s1905] sm:$0xff] %v1903
    %v1907 = vlaneseq
    %v1908 = vand.u32 %v1907, 127
    %v1909 = vxor.u32 %v1908, 8
    %1910 = vset.pattern.permute.xlu0 %v1909
    %v1911 = vlaneseq
    %v1912 = vand.u32 %v1911, 127
    %v1913 = vand.u32 %v1912, 8
    %vm1914 = vcmp.eq.s32.totalorder 0, %v1913
    %s1916 = scalar_lea.vmem [#allocation2], 0
    %v1917 = vld [vmem:[%s1916] sm:$0xff]
    %1918 = vperm.xlu0 %1910, %v1917
    %v1919 = vpop.permute.xlu0 %1918
    %s1921 = scalar_lea.vmem [#allocation6], 0
    %v1922 = vld [vmem:[%s1921] sm:$0xff]
    %1923 = vperm.xlu0 %1910, %v1922
    %v1924 = vpop.permute.xlu0 %1923
    %1925 = xla_tuple %v1919, %v1917
    %1926 = xla_tuple %1925
    %vm1927 = vcmp.gt.f32.partialorder %v1919, %v1917
    %v1928 = vsel %vm1927, 1, 0
    %1929 = xla_tuple %v1928
    %1930 = xla_tuple %v1917, %v1919
    %1931 = xla_tuple %1930
    %vm1932 = vcmp.gt.f32.partialorder %v1917, %v1919
    %v1933 = vsel %vm1932, 1, 0
    %1934 = xla_tuple %v1933
    %vm1935 = vcmp.ne.s32.totalorder %v1928, 0
    %vm1936 = vcmp.ne.s32.totalorder %v1933, 0
    %v1937 = vsel %vm1935, %v1919, %v1917
    %v1938 = vsel %vm1936, %v1919, %v1917
    %v1939 = vsel %vm1914, %v1937, %v1938
    %s1941 = scalar_lea.vmem [#allocation2], 0
    %1942 = vst [vmem:[%s1941] sm:$0xff] %v1939
    %v1943 = vsel %vm1935, %v1924, %v1922
    %v1944 = vsel %vm1936, %v1924, %v1922
    %v1945 = vsel %vm1914, %v1943, %v1944
    %s1947 = scalar_lea.vmem [#allocation6], 0
    %1948 = vst [vmem:[%s1947] sm:$0xff] %v1945
    %s1950 = scalar_lea.vmem [#allocation2], 8
    %v1951 = vld [vmem:[%s1950] sm:$0xff]
    %1952 = vperm.xlu0 %1910, %v1951
    %v1953 = vpop.permute.xlu0 %1952
    %s1955 = scalar_lea.vmem [#allocation6], 8
    %v1956 = vld [vmem:[%s1955] sm:$0xff]
    %1957 = vperm.xlu0 %1910, %v1956
    %v1958 = vpop.permute.xlu0 %1957
    %1959 = xla_tuple %v1953, %v1951
    %1960 = xla_tuple %1959
    %vm1961 = vcmp.gt.f32.partialorder %v1953, %v1951
    %v1962 = vsel %vm1961, 1, 0
    %1963 = xla_tuple %v1962
    %1964 = xla_tuple %v1951, %v1953
    %1965 = xla_tuple %1964
    %vm1966 = vcmp.gt.f32.partialorder %v1951, %v1953
    %v1967 = vsel %vm1966, 1, 0
    %1968 = xla_tuple %v1967
    %vm1969 = vcmp.ne.s32.totalorder %v1962, 0
    %vm1970 = vcmp.ne.s32.totalorder %v1967, 0
    %v1971 = vsel %vm1969, %v1953, %v1951
    %v1972 = vsel %vm1970, %v1953, %v1951
    %v1973 = vsel %vm1914, %v1971, %v1972
    %s1975 = scalar_lea.vmem [#allocation2], 8
    %1976 = vst [vmem:[%s1975] sm:$0xff] %v1973
    %v1977 = vsel %vm1969, %v1958, %v1956
    %v1978 = vsel %vm1970, %v1958, %v1956
    %v1979 = vsel %vm1914, %v1977, %v1978
    %s1981 = scalar_lea.vmem [#allocation6], 8
    %1982 = vst [vmem:[%s1981] sm:$0xff] %v1979
    %v1983 = vlaneseq
    %v1984 = vand.u32 %v1983, 127
    %v1985 = vxor.u32 %v1984, 4
    %1986 = vset.pattern.permute.xlu0 %v1985
    %v1987 = vlaneseq
    %v1988 = vand.u32 %v1987, 127
    %v1989 = vand.u32 %v1988, 4
    %vm1990 = vcmp.eq.s32.totalorder 0, %v1989
    %s1992 = scalar_lea.vmem [#allocation2], 0
    %v1993 = vld [vmem:[%s1992] sm:$0xff]
    %1994 = vperm.xlu0 %1986, %v1993
    %v1995 = vpop.permute.xlu0 %1994
    %s1997 = scalar_lea.vmem [#allocation6], 0
    %v1998 = vld [vmem:[%s1997] sm:$0xff]
    %1999 = vperm.xlu0 %1986, %v1998
    %v2000 = vpop.permute.xlu0 %1999
    %2001 = xla_tuple %v1995, %v1993
    %2002 = xla_tuple %2001
    %vm2003 = vcmp.gt.f32.partialorder %v1995, %v1993
    %v2004 = vsel %vm2003, 1, 0
    %2005 = xla_tuple %v2004
    %2006 = xla_tuple %v1993, %v1995
    %2007 = xla_tuple %2006
    %vm2008 = vcmp.gt.f32.partialorder %v1993, %v1995
    %v2009 = vsel %vm2008, 1, 0
    %2010 = xla_tuple %v2009
    %vm2011 = vcmp.ne.s32.totalorder %v2004, 0
    %vm2012 = vcmp.ne.s32.totalorder %v2009, 0
    %v2013 = vsel %vm2011, %v1995, %v1993
    %v2014 = vsel %vm2012, %v1995, %v1993
    %v2015 = vsel %vm1990, %v2013, %v2014
    %s2017 = scalar_lea.vmem [#allocation2], 0
    %2018 = vst [vmem:[%s2017] sm:$0xff] %v2015
    %v2019 = vsel %vm2011, %v2000, %v1998
    %v2020 = vsel %vm2012, %v2000, %v1998
    %v2021 = vsel %vm1990, %v2019, %v2020
    %s2023 = scalar_lea.vmem [#allocation6], 0
    %2024 = vst [vmem:[%s2023] sm:$0xff] %v2021
    %s2026 = scalar_lea.vmem [#allocation2], 8
    %v2027 = vld [vmem:[%s2026] sm:$0xff]
    %2028 = vperm.xlu0 %1986, %v2027
    %v2029 = vpop.permute.xlu0 %2028
    %s2031 = scalar_lea.vmem [#allocation6], 8
    %v2032 = vld [vmem:[%s2031] sm:$0xff]
    %2033 = vperm.xlu0 %1986, %v2032
    %v2034 = vpop.permute.xlu0 %2033
    %2035 = xla_tuple %v2029, %v2027
    %2036 = xla_tuple %2035
    %vm2037 = vcmp.gt.f32.partialorder %v2029, %v2027
    %v2038 = vsel %vm2037, 1, 0
    %2039 = xla_tuple %v2038
    %2040 = xla_tuple %v2027, %v2029
    %2041 = xla_tuple %2040
    %vm2042 = vcmp.gt.f32.partialorder %v2027, %v2029
    %v2043 = vsel %vm2042, 1, 0
    %2044 = xla_tuple %v2043
    %vm2045 = vcmp.ne.s32.totalorder %v2038, 0
    %vm2046 = vcmp.ne.s32.totalorder %v2043, 0
    %v2047 = vsel %vm2045, %v2029, %v2027
    %v2048 = vsel %vm2046, %v2029, %v2027
    %v2049 = vsel %vm1990, %v2047, %v2048
    %s2051 = scalar_lea.vmem [#allocation2], 8
    %2052 = vst [vmem:[%s2051] sm:$0xff] %v2049
    %v2053 = vsel %vm2045, %v2034, %v2032
    %v2054 = vsel %vm2046, %v2034, %v2032
    %v2055 = vsel %vm1990, %v2053, %v2054
    %s2057 = scalar_lea.vmem [#allocation6], 8
    %2058 = vst [vmem:[%s2057] sm:$0xff] %v2055
    %v2059 = vlaneseq
    %v2060 = vand.u32 %v2059, 127
    %v2061 = vxor.u32 %v2060, 2
    %2062 = vset.pattern.permute.xlu0 %v2061
    %v2063 = vlaneseq
    %v2064 = vand.u32 %v2063, 127
    %v2065 = vand.u32 %v2064, 2
    %vm2066 = vcmp.eq.s32.totalorder 0, %v2065
    %s2068 = scalar_lea.vmem [#allocation2], 0
    %v2069 = vld [vmem:[%s2068] sm:$0xff]
    %2070 = vperm.xlu0 %2062, %v2069
    %v2071 = vpop.permute.xlu0 %2070
    %s2073 = scalar_lea.vmem [#allocation6], 0
    %v2074 = vld [vmem:[%s2073] sm:$0xff]
    %2075 = vperm.xlu0 %2062, %v2074
    %v2076 = vpop.permute.xlu0 %2075
    %2077 = xla_tuple %v2071, %v2069
    %2078 = xla_tuple %2077
    %vm2079 = vcmp.gt.f32.partialorder %v2071, %v2069
    %v2080 = vsel %vm2079, 1, 0
    %2081 = xla_tuple %v2080
    %2082 = xla_tuple %v2069, %v2071
    %2083 = xla_tuple %2082
    %vm2084 = vcmp.gt.f32.partialorder %v2069, %v2071
    %v2085 = vsel %vm2084, 1, 0
    %2086 = xla_tuple %v2085
    %vm2087 = vcmp.ne.s32.totalorder %v2080, 0
    %vm2088 = vcmp.ne.s32.totalorder %v2085, 0
    %v2089 = vsel %vm2087, %v2071, %v2069
    %v2090 = vsel %vm2088, %v2071, %v2069
    %v2091 = vsel %vm2066, %v2089, %v2090
    %s2093 = scalar_lea.vmem [#allocation2], 0
    %2094 = vst [vmem:[%s2093] sm:$0xff] %v2091
    %v2095 = vsel %vm2087, %v2076, %v2074
    %v2096 = vsel %vm2088, %v2076, %v2074
    %v2097 = vsel %vm2066, %v2095, %v2096
    %s2099 = scalar_lea.vmem [#allocation6], 0
    %2100 = vst [vmem:[%s2099] sm:$0xff] %v2097
    %s2102 = scalar_lea.vmem [#allocation2], 8
    %v2103 = vld [vmem:[%s2102] sm:$0xff]
    %2104 = vperm.xlu0 %2062, %v2103
    %v2105 = vpop.permute.xlu0 %2104
    %s2107 = scalar_lea.vmem [#allocation6], 8
    %v2108 = vld [vmem:[%s2107] sm:$0xff]
    %2109 = vperm.xlu0 %2062, %v2108
    %v2110 = vpop.permute.xlu0 %2109
    %2111 = xla_tuple %v2105, %v2103
    %2112 = xla_tuple %2111
    %vm2113 = vcmp.gt.f32.partialorder %v2105, %v2103
    %v2114 = vsel %vm2113, 1, 0
    %2115 = xla_tuple %v2114
    %2116 = xla_tuple %v2103, %v2105
    %2117 = xla_tuple %2116
    %vm2118 = vcmp.gt.f32.partialorder %v2103, %v2105
    %v2119 = vsel %vm2118, 1, 0
    %2120 = xla_tuple %v2119
    %vm2121 = vcmp.ne.s32.totalorder %v2114, 0
    %vm2122 = vcmp.ne.s32.totalorder %v2119, 0
    %v2123 = vsel %vm2121, %v2105, %v2103
    %v2124 = vsel %vm2122, %v2105, %v2103
    %v2125 = vsel %vm2066, %v2123, %v2124
    %s2127 = scalar_lea.vmem [#allocation2], 8
    %2128 = vst [vmem:[%s2127] sm:$0xff] %v2125
    %v2129 = vsel %vm2121, %v2110, %v2108
    %v2130 = vsel %vm2122, %v2110, %v2108
    %v2131 = vsel %vm2066, %v2129, %v2130
    %s2133 = scalar_lea.vmem [#allocation6], 8
    %2134 = vst [vmem:[%s2133] sm:$0xff] %v2131
    %v2135 = vlaneseq
    %v2136 = vand.u32 %v2135, 127
    %v2137 = vxor.u32 %v2136, 1
    %2138 = vset.pattern.permute.xlu0 %v2137
    %v2139 = vlaneseq
    %v2140 = vand.u32 %v2139, 127
    %v2141 = vand.u32 %v2140, 1
    %vm2142 = vcmp.eq.s32.totalorder 0, %v2141
    %s2144 = scalar_lea.vmem [#allocation2], 0
    %v2145 = vld [vmem:[%s2144] sm:$0xff]
    %2146 = vperm.xlu0 %2138, %v2145
    %v2147 = vpop.permute.xlu0 %2146
    %s2149 = scalar_lea.vmem [#allocation6], 0
    %v2150 = vld [vmem:[%s2149] sm:$0xff]
    %2151 = vperm.xlu0 %2138, %v2150
    %v2152 = vpop.permute.xlu0 %2151
    %2153 = xla_tuple %v2147, %v2145
    %2154 = xla_tuple %2153
    %vm2155 = vcmp.gt.f32.partialorder %v2147, %v2145
    %v2156 = vsel %vm2155, 1, 0
    %2157 = xla_tuple %v2156
    %2158 = xla_tuple %v2145, %v2147
    %2159 = xla_tuple %2158
    %vm2160 = vcmp.gt.f32.partialorder %v2145, %v2147
    %v2161 = vsel %vm2160, 1, 0
    %2162 = xla_tuple %v2161
    %vm2163 = vcmp.ne.s32.totalorder %v2156, 0
    %vm2164 = vcmp.ne.s32.totalorder %v2161, 0
    %v2165 = vsel %vm2163, %v2147, %v2145
    %v2166 = vsel %vm2164, %v2147, %v2145
    %v2167 = vsel %vm2142, %v2165, %v2166
    %s2169 = scalar_lea.vmem [#allocation2], 0
    %2170 = vst [vmem:[%s2169] sm:$0xff] %v2167
    %v2171 = vsel %vm2163, %v2152, %v2150
    %v2172 = vsel %vm2164, %v2152, %v2150
    %v2173 = vsel %vm2142, %v2171, %v2172
    %s2175 = scalar_lea.vmem [#allocation6], 0
    %2176 = vst [vmem:[%s2175] sm:$0xff] %v2173
    %s2178 = scalar_lea.vmem [#allocation2], 8
    %v2179 = vld [vmem:[%s2178] sm:$0xff]
    %2180 = vperm.xlu0 %2138, %v2179
    %v2181 = vpop.permute.xlu0 %2180
    %s2183 = scalar_lea.vmem [#allocation6], 8
    %v2184 = vld [vmem:[%s2183] sm:$0xff]
    %2185 = vperm.xlu0 %2138, %v2184
    %v2186 = vpop.permute.xlu0 %2185
    %2187 = xla_tuple %v2181, %v2179
    %2188 = xla_tuple %2187
    %vm2189 = vcmp.gt.f32.partialorder %v2181, %v2179
    %v2190 = vsel %vm2189, 1, 0
    %2191 = xla_tuple %v2190
    %2192 = xla_tuple %v2179, %v2181
    %2193 = xla_tuple %2192
    %vm2194 = vcmp.gt.f32.partialorder %v2179, %v2181
    %v2195 = vsel %vm2194, 1, 0
    %2196 = xla_tuple %v2195
    %vm2197 = vcmp.ne.s32.totalorder %v2190, 0
    %vm2198 = vcmp.ne.s32.totalorder %v2195, 0
    %v2199 = vsel %vm2197, %v2181, %v2179
    %v2200 = vsel %vm2198, %v2181, %v2179
    %v2201 = vsel %vm2142, %v2199, %v2200
    %s2203 = scalar_lea.vmem [#allocation2], 8
    %2204 = vst [vmem:[%s2203] sm:$0xff] %v2201
    %v2205 = vsel %vm2197, %v2186, %v2184
    %v2206 = vsel %vm2198, %v2186, %v2184
    %v2207 = vsel %vm2142, %v2205, %v2206
    %s2209 = scalar_lea.vmem [#allocation6], 8
    %2210 = vst [vmem:[%s2209] sm:$0xff] %v2207
    %vm2211 = vcmp.ne.s32.totalorder 1, 0
    %s2213 = scalar_lea.vmem [#allocation2], 0
    %s2215 = scalar_lea.vmem [#allocation2], 8
    %v2216 = vld [vmem:[%s2213] sm:$0xff]
    %v2217 = vld [vmem:[%s2215] sm:$0xff]
    %v2218 = vlaneseq
    %v2219 = vand.u32 %v2218, 127
    %v2220 = vsub.s32 %v2219, 127
    %v2221 = vsub.s32 0, %v2220
    %2222 = vset.pattern.permute.xlu0 %v2221
    %2223 = vperm.xlu0 %2222, %v2217
    %v2224 = vpop.permute.xlu0 %2223
    %s2226 = scalar_lea.vmem [#allocation6], 0
    %s2228 = scalar_lea.vmem [#allocation6], 8
    %v2229 = vld [vmem:[%s2226] sm:$0xff]
    %v2230 = vld [vmem:[%s2228] sm:$0xff]
    %v2231 = vlaneseq
    %v2232 = vand.u32 %v2231, 127
    %v2233 = vsub.s32 %v2232, 127
    %v2234 = vsub.s32 0, %v2233
    %2235 = vset.pattern.permute.xlu0 %v2234
    %2236 = vperm.xlu0 %2235, %v2230
    %v2237 = vpop.permute.xlu0 %2236
    %2238 = xla_tuple %v2224, %v2216
    %2239 = xla_tuple %2238
    %vm2240 = vcmp.gt.f32.partialorder %v2224, %v2216
    %v2241 = vsel %vm2240, 1, 0
    %2242 = xla_tuple %v2241
    %v2243 = vsel %vm2211, %v2241, 0
    %vm2244 = vcmp.ne.s32.totalorder %v2243, 0
    %v2245 = vsel %vm2244, %v2224, %v2216
    %v2246 = vsel %vm2244, %v2216, %v2224
    %s2248 = scalar_lea.vmem [#allocation2], 0
    %2249 = vst [vmem:[%s2248] sm:$0xff] %v2245
    %s2251 = scalar_lea.vmem [#allocation2], 8
    %v2252 = vlaneseq
    %v2253 = vand.u32 %v2252, 127
    %v2254 = vsub.s32 %v2253, 127
    %v2255 = vsub.s32 0, %v2254
    %2256 = vset.pattern.permute.xlu0 %v2255
    %2257 = vperm.xlu0 %2256, %v2246
    %v2258 = vpop.permute.xlu0 %2257
    %2259 = vst [vmem:[%s2251] sm:$0xff] %v2258
    %v2260 = vsel %vm2244, %v2237, %v2229
    %v2261 = vsel %vm2244, %v2229, %v2237
    %s2263 = scalar_lea.vmem [#allocation6], 0
    %2264 = vst [vmem:[%s2263] sm:$0xff] %v2260
    %s2266 = scalar_lea.vmem [#allocation6], 8
    %v2267 = vlaneseq
    %v2268 = vand.u32 %v2267, 127
    %v2269 = vsub.s32 %v2268, 127
    %v2270 = vsub.s32 0, %v2269
    %2271 = vset.pattern.permute.xlu0 %v2270
    %2272 = vperm.xlu0 %2271, %v2261
    %v2273 = vpop.permute.xlu0 %2272
    %2274 = vst [vmem:[%s2266] sm:$0xff] %v2273
    %v2275 = vlaneseq
    %v2276 = vand.u32 %v2275, 127
    %v2277 = vxor.u32 %v2276, 64
    %2278 = vset.pattern.permute.xlu0 %v2277
    %v2279 = vlaneseq
    %v2280 = vand.u32 %v2279, 127
    %v2281 = vand.u32 %v2280, 64
    %vm2282 = vcmp.eq.s32.totalorder 0, %v2281
    %s2284 = scalar_lea.vmem [#allocation2], 0
    %v2285 = vld [vmem:[%s2284] sm:$0xff]
    %2286 = vperm.xlu0 %2278, %v2285
    %v2287 = vpop.permute.xlu0 %2286
    %s2289 = scalar_lea.vmem [#allocation6], 0
    %v2290 = vld [vmem:[%s2289] sm:$0xff]
    %2291 = vperm.xlu0 %2278, %v2290
    %v2292 = vpop.permute.xlu0 %2291
    %2293 = xla_tuple %v2287, %v2285
    %2294 = xla_tuple %2293
    %vm2295 = vcmp.gt.f32.partialorder %v2287, %v2285
    %v2296 = vsel %vm2295, 1, 0
    %2297 = xla_tuple %v2296
    %2298 = xla_tuple %v2285, %v2287
    %2299 = xla_tuple %2298
    %vm2300 = vcmp.gt.f32.partialorder %v2285, %v2287
    %v2301 = vsel %vm2300, 1, 0
    %2302 = xla_tuple %v2301
    %vm2303 = vcmp.ne.s32.totalorder %v2296, 0
    %vm2304 = vcmp.ne.s32.totalorder %v2301, 0
    %v2305 = vsel %vm2303, %v2287, %v2285
    %v2306 = vsel %vm2304, %v2287, %v2285
    %v2307 = vsel %vm2282, %v2305, %v2306
    %s2309 = scalar_lea.vmem [#allocation2], 0
    %2310 = vst [vmem:[%s2309] sm:$0xff] %v2307
    %v2311 = vsel %vm2303, %v2292, %v2290
    %v2312 = vsel %vm2304, %v2292, %v2290
    %v2313 = vsel %vm2282, %v2311, %v2312
    %s2315 = scalar_lea.vmem [#allocation6], 0
    %2316 = vst [vmem:[%s2315] sm:$0xff] %v2313
    %s2318 = scalar_lea.vmem [#allocation2], 8
    %v2319 = vld [vmem:[%s2318] sm:$0xff]
    %2320 = vperm.xlu0 %2278, %v2319
    %v2321 = vpop.permute.xlu0 %2320
    %s2323 = scalar_lea.vmem [#allocation6], 8
    %v2324 = vld [vmem:[%s2323] sm:$0xff]
    %2325 = vperm.xlu0 %2278, %v2324
    %v2326 = vpop.permute.xlu0 %2325
    %2327 = xla_tuple %v2321, %v2319
    %2328 = xla_tuple %2327
    %vm2329 = vcmp.gt.f32.partialorder %v2321, %v2319
    %v2330 = vsel %vm2329, 1, 0
    %2331 = xla_tuple %v2330
    %2332 = xla_tuple %v2319, %v2321
    %2333 = xla_tuple %2332
    %vm2334 = vcmp.gt.f32.partialorder %v2319, %v2321
    %v2335 = vsel %vm2334, 1, 0
    %2336 = xla_tuple %v2335
    %vm2337 = vcmp.ne.s32.totalorder %v2330, 0
    %vm2338 = vcmp.ne.s32.totalorder %v2335, 0
    %v2339 = vsel %vm2337, %v2321, %v2319
    %v2340 = vsel %vm2338, %v2321, %v2319
    %v2341 = vsel %vm2282, %v2339, %v2340
    %s2343 = scalar_lea.vmem [#allocation2], 8
    %2344 = vst [vmem:[%s2343] sm:$0xff] %v2341
    %v2345 = vsel %vm2337, %v2326, %v2324
    %v2346 = vsel %vm2338, %v2326, %v2324
    %v2347 = vsel %vm2282, %v2345, %v2346
    %s2349 = scalar_lea.vmem [#allocation6], 8
    %2350 = vst [vmem:[%s2349] sm:$0xff] %v2347
    %v2351 = vlaneseq
    %v2352 = vand.u32 %v2351, 127
    %v2353 = vxor.u32 %v2352, 32
    %2354 = vset.pattern.permute.xlu0 %v2353
    %v2355 = vlaneseq
    %v2356 = vand.u32 %v2355, 127
    %v2357 = vand.u32 %v2356, 32
    %vm2358 = vcmp.eq.s32.totalorder 0, %v2357
    %s2360 = scalar_lea.vmem [#allocation2], 0
    %v2361 = vld [vmem:[%s2360] sm:$0xff]
    %2362 = vperm.xlu0 %2354, %v2361
    %v2363 = vpop.permute.xlu0 %2362
    %s2365 = scalar_lea.vmem [#allocation6], 0
    %v2366 = vld [vmem:[%s2365] sm:$0xff]
    %2367 = vperm.xlu0 %2354, %v2366
    %v2368 = vpop.permute.xlu0 %2367
    %2369 = xla_tuple %v2363, %v2361
    %2370 = xla_tuple %2369
    %vm2371 = vcmp.gt.f32.partialorder %v2363, %v2361
    %v2372 = vsel %vm2371, 1, 0
    %2373 = xla_tuple %v2372
    %2374 = xla_tuple %v2361, %v2363
    %2375 = xla_tuple %2374
    %vm2376 = vcmp.gt.f32.partialorder %v2361, %v2363
    %v2377 = vsel %vm2376, 1, 0
    %2378 = xla_tuple %v2377
    %vm2379 = vcmp.ne.s32.totalorder %v2372, 0
    %vm2380 = vcmp.ne.s32.totalorder %v2377, 0
    %v2381 = vsel %vm2379, %v2363, %v2361
    %v2382 = vsel %vm2380, %v2363, %v2361
    %v2383 = vsel %vm2358, %v2381, %v2382
    %s2385 = scalar_lea.vmem [#allocation2], 0
    %2386 = vst [vmem:[%s2385] sm:$0xff] %v2383
    %v2387 = vsel %vm2379, %v2368, %v2366
    %v2388 = vsel %vm2380, %v2368, %v2366
    %v2389 = vsel %vm2358, %v2387, %v2388
    %s2391 = scalar_lea.vmem [#allocation6], 0
    %2392 = vst [vmem:[%s2391] sm:$0xff] %v2389
    %s2394 = scalar_lea.vmem [#allocation2], 8
    %v2395 = vld [vmem:[%s2394] sm:$0xff]
    %2396 = vperm.xlu0 %2354, %v2395
    %v2397 = vpop.permute.xlu0 %2396
    %s2399 = scalar_lea.vmem [#allocation6], 8
    %v2400 = vld [vmem:[%s2399] sm:$0xff]
    %2401 = vperm.xlu0 %2354, %v2400
    %v2402 = vpop.permute.xlu0 %2401
    %2403 = xla_tuple %v2397, %v2395
    %2404 = xla_tuple %2403
    %vm2405 = vcmp.gt.f32.partialorder %v2397, %v2395
    %v2406 = vsel %vm2405, 1, 0
    %2407 = xla_tuple %v2406
    %2408 = xla_tuple %v2395, %v2397
    %2409 = xla_tuple %2408
    %vm2410 = vcmp.gt.f32.partialorder %v2395, %v2397
    %v2411 = vsel %vm2410, 1, 0
    %2412 = xla_tuple %v2411
    %vm2413 = vcmp.ne.s32.totalorder %v2406, 0
    %vm2414 = vcmp.ne.s32.totalorder %v2411, 0
    %v2415 = vsel %vm2413, %v2397, %v2395
    %v2416 = vsel %vm2414, %v2397, %v2395
    %v2417 = vsel %vm2358, %v2415, %v2416
    %s2419 = scalar_lea.vmem [#allocation2], 8
    %2420 = vst [vmem:[%s2419] sm:$0xff] %v2417
    %v2421 = vsel %vm2413, %v2402, %v2400
    %v2422 = vsel %vm2414, %v2402, %v2400
    %v2423 = vsel %vm2358, %v2421, %v2422
    %s2425 = scalar_lea.vmem [#allocation6], 8
    %2426 = vst [vmem:[%s2425] sm:$0xff] %v2423
    %v2427 = vlaneseq
    %v2428 = vand.u32 %v2427, 127
    %v2429 = vxor.u32 %v2428, 16
    %2430 = vset.pattern.permute.xlu0 %v2429
    %v2431 = vlaneseq
    %v2432 = vand.u32 %v2431, 127
    %v2433 = vand.u32 %v2432, 16
    %vm2434 = vcmp.eq.s32.totalorder 0, %v2433
    %s2436 = scalar_lea.vmem [#allocation2], 0
    %v2437 = vld [vmem:[%s2436] sm:$0xff]
    %2438 = vperm.xlu0 %2430, %v2437
    %v2439 = vpop.permute.xlu0 %2438
    %s2441 = scalar_lea.vmem [#allocation6], 0
    %v2442 = vld [vmem:[%s2441] sm:$0xff]
    %2443 = vperm.xlu0 %2430, %v2442
    %v2444 = vpop.permute.xlu0 %2443
    %2445 = xla_tuple %v2439, %v2437
    %2446 = xla_tuple %2445
    %vm2447 = vcmp.gt.f32.partialorder %v2439, %v2437
    %v2448 = vsel %vm2447, 1, 0
    %2449 = xla_tuple %v2448
    %2450 = xla_tuple %v2437, %v2439
    %2451 = xla_tuple %2450
    %vm2452 = vcmp.gt.f32.partialorder %v2437, %v2439
    %v2453 = vsel %vm2452, 1, 0
    %2454 = xla_tuple %v2453
    %vm2455 = vcmp.ne.s32.totalorder %v2448, 0
    %vm2456 = vcmp.ne.s32.totalorder %v2453, 0
    %v2457 = vsel %vm2455, %v2439, %v2437
    %v2458 = vsel %vm2456, %v2439, %v2437
    %v2459 = vsel %vm2434, %v2457, %v2458
    %s2461 = scalar_lea.vmem [#allocation2], 0
    %2462 = vst [vmem:[%s2461] sm:$0xff] %v2459
    %v2463 = vsel %vm2455, %v2444, %v2442
    %v2464 = vsel %vm2456, %v2444, %v2442
    %v2465 = vsel %vm2434, %v2463, %v2464
    %s2467 = scalar_lea.vmem [#allocation6], 0
    %2468 = vst [vmem:[%s2467] sm:$0xff] %v2465
    %s2470 = scalar_lea.vmem [#allocation2], 8
    %v2471 = vld [vmem:[%s2470] sm:$0xff]
    %2472 = vperm.xlu0 %2430, %v2471
    %v2473 = vpop.permute.xlu0 %2472
    %s2475 = scalar_lea.vmem [#allocation6], 8
    %v2476 = vld [vmem:[%s2475] sm:$0xff]
    %2477 = vperm.xlu0 %2430, %v2476
    %v2478 = vpop.permute.xlu0 %2477
    %2479 = xla_tuple %v2473, %v2471
    %2480 = xla_tuple %2479
    %vm2481 = vcmp.gt.f32.partialorder %v2473, %v2471
    %v2482 = vsel %vm2481, 1, 0
    %2483 = xla_tuple %v2482
    %2484 = xla_tuple %v2471, %v2473
    %2485 = xla_tuple %2484
    %vm2486 = vcmp.gt.f32.partialorder %v2471, %v2473
    %v2487 = vsel %vm2486, 1, 0
    %2488 = xla_tuple %v2487
    %vm2489 = vcmp.ne.s32.totalorder %v2482, 0
    %vm2490 = vcmp.ne.s32.totalorder %v2487, 0
    %v2491 = vsel %vm2489, %v2473, %v2471
    %v2492 = vsel %vm2490, %v2473, %v2471
    %v2493 = vsel %vm2434, %v2491, %v2492
    %s2495 = scalar_lea.vmem [#allocation2], 8
    %2496 = vst [vmem:[%s2495] sm:$0xff] %v2493
    %v2497 = vsel %vm2489, %v2478, %v2476
    %v2498 = vsel %vm2490, %v2478, %v2476
    %v2499 = vsel %vm2434, %v2497, %v2498
    %s2501 = scalar_lea.vmem [#allocation6], 8
    %2502 = vst [vmem:[%s2501] sm:$0xff] %v2499
    %v2503 = vlaneseq
    %v2504 = vand.u32 %v2503, 127
    %v2505 = vxor.u32 %v2504, 8
    %2506 = vset.pattern.permute.xlu0 %v2505
    %v2507 = vlaneseq
    %v2508 = vand.u32 %v2507, 127
    %v2509 = vand.u32 %v2508, 8
    %vm2510 = vcmp.eq.s32.totalorder 0, %v2509
    %s2512 = scalar_lea.vmem [#allocation2], 0
    %v2513 = vld [vmem:[%s2512] sm:$0xff]
    %2514 = vperm.xlu0 %2506, %v2513
    %v2515 = vpop.permute.xlu0 %2514
    %s2517 = scalar_lea.vmem [#allocation6], 0
    %v2518 = vld [vmem:[%s2517] sm:$0xff]
    %2519 = vperm.xlu0 %2506, %v2518
    %v2520 = vpop.permute.xlu0 %2519
    %2521 = xla_tuple %v2515, %v2513
    %2522 = xla_tuple %2521
    %vm2523 = vcmp.gt.f32.partialorder %v2515, %v2513
    %v2524 = vsel %vm2523, 1, 0
    %2525 = xla_tuple %v2524
    %2526 = xla_tuple %v2513, %v2515
    %2527 = xla_tuple %2526
    %vm2528 = vcmp.gt.f32.partialorder %v2513, %v2515
    %v2529 = vsel %vm2528, 1, 0
    %2530 = xla_tuple %v2529
    %vm2531 = vcmp.ne.s32.totalorder %v2524, 0
    %vm2532 = vcmp.ne.s32.totalorder %v2529, 0
    %v2533 = vsel %vm2531, %v2515, %v2513
    %v2534 = vsel %vm2532, %v2515, %v2513
    %v2535 = vsel %vm2510, %v2533, %v2534
    %s2537 = scalar_lea.vmem [#allocation2], 0
    %2538 = vst [vmem:[%s2537] sm:$0xff] %v2535
    %v2539 = vsel %vm2531, %v2520, %v2518
    %v2540 = vsel %vm2532, %v2520, %v2518
    %v2541 = vsel %vm2510, %v2539, %v2540
    %s2543 = scalar_lea.vmem [#allocation6], 0
    %2544 = vst [vmem:[%s2543] sm:$0xff] %v2541
    %s2546 = scalar_lea.vmem [#allocation2], 8
    %v2547 = vld [vmem:[%s2546] sm:$0xff]
    %2548 = vperm.xlu0 %2506, %v2547
    %v2549 = vpop.permute.xlu0 %2548
    %s2551 = scalar_lea.vmem [#allocation6], 8
    %v2552 = vld [vmem:[%s2551] sm:$0xff]
    %2553 = vperm.xlu0 %2506, %v2552
    %v2554 = vpop.permute.xlu0 %2553
    %2555 = xla_tuple %v2549, %v2547
    %2556 = xla_tuple %2555
    %vm2557 = vcmp.gt.f32.partialorder %v2549, %v2547
    %v2558 = vsel %vm2557, 1, 0
    %2559 = xla_tuple %v2558
    %2560 = xla_tuple %v2547, %v2549
    %2561 = xla_tuple %2560
    %vm2562 = vcmp.gt.f32.partialorder %v2547, %v2549
    %v2563 = vsel %vm2562, 1, 0
    %2564 = xla_tuple %v2563
    %vm2565 = vcmp.ne.s32.totalorder %v2558, 0
    %vm2566 = vcmp.ne.s32.totalorder %v2563, 0
    %v2567 = vsel %vm2565, %v2549, %v2547
    %v2568 = vsel %vm2566, %v2549, %v2547
    %v2569 = vsel %vm2510, %v2567, %v2568
    %s2571 = scalar_lea.vmem [#allocation2], 8
    %2572 = vst [vmem:[%s2571] sm:$0xff] %v2569
    %v2573 = vsel %vm2565, %v2554, %v2552
    %v2574 = vsel %vm2566, %v2554, %v2552
    %v2575 = vsel %vm2510, %v2573, %v2574
    %s2577 = scalar_lea.vmem [#allocation6], 8
    %2578 = vst [vmem:[%s2577] sm:$0xff] %v2575
    %v2579 = vlaneseq
    %v2580 = vand.u32 %v2579, 127
    %v2581 = vxor.u32 %v2580, 4
    %2582 = vset.pattern.permute.xlu0 %v2581
    %v2583 = vlaneseq
    %v2584 = vand.u32 %v2583, 127
    %v2585 = vand.u32 %v2584, 4
    %vm2586 = vcmp.eq.s32.totalorder 0, %v2585
    %s2588 = scalar_lea.vmem [#allocation2], 0
    %v2589 = vld [vmem:[%s2588] sm:$0xff]
    %2590 = vperm.xlu0 %2582, %v2589
    %v2591 = vpop.permute.xlu0 %2590
    %s2593 = scalar_lea.vmem [#allocation6], 0
    %v2594 = vld [vmem:[%s2593] sm:$0xff]
    %2595 = vperm.xlu0 %2582, %v2594
    %v2596 = vpop.permute.xlu0 %2595
    %2597 = xla_tuple %v2591, %v2589
    %2598 = xla_tuple %2597
    %vm2599 = vcmp.gt.f32.partialorder %v2591, %v2589
    %v2600 = vsel %vm2599, 1, 0
    %2601 = xla_tuple %v2600
    %2602 = xla_tuple %v2589, %v2591
    %2603 = xla_tuple %2602
    %vm2604 = vcmp.gt.f32.partialorder %v2589, %v2591
    %v2605 = vsel %vm2604, 1, 0
    %2606 = xla_tuple %v2605
    %vm2607 = vcmp.ne.s32.totalorder %v2600, 0
    %vm2608 = vcmp.ne.s32.totalorder %v2605, 0
    %v2609 = vsel %vm2607, %v2591, %v2589
    %v2610 = vsel %vm2608, %v2591, %v2589
    %v2611 = vsel %vm2586, %v2609, %v2610
    %s2613 = scalar_lea.vmem [#allocation2], 0
    %2614 = vst [vmem:[%s2613] sm:$0xff] %v2611
    %v2615 = vsel %vm2607, %v2596, %v2594
    %v2616 = vsel %vm2608, %v2596, %v2594
    %v2617 = vsel %vm2586, %v2615, %v2616
    %s2619 = scalar_lea.vmem [#allocation6], 0
    %2620 = vst [vmem:[%s2619] sm:$0xff] %v2617
    %s2622 = scalar_lea.vmem [#allocation2], 8
    %v2623 = vld [vmem:[%s2622] sm:$0xff]
    %2624 = vperm.xlu0 %2582, %v2623
    %v2625 = vpop.permute.xlu0 %2624
    %s2627 = scalar_lea.vmem [#allocation6], 8
    %v2628 = vld [vmem:[%s2627] sm:$0xff]
    %2629 = vperm.xlu0 %2582, %v2628
    %v2630 = vpop.permute.xlu0 %2629
    %2631 = xla_tuple %v2625, %v2623
    %2632 = xla_tuple %2631
    %vm2633 = vcmp.gt.f32.partialorder %v2625, %v2623
    %v2634 = vsel %vm2633, 1, 0
    %2635 = xla_tuple %v2634
    %2636 = xla_tuple %v2623, %v2625
    %2637 = xla_tuple %2636
    %vm2638 = vcmp.gt.f32.partialorder %v2623, %v2625
    %v2639 = vsel %vm2638, 1, 0
    %2640 = xla_tuple %v2639
    %vm2641 = vcmp.ne.s32.totalorder %v2634, 0
    %vm2642 = vcmp.ne.s32.totalorder %v2639, 0
    %v2643 = vsel %vm2641, %v2625, %v2623
    %v2644 = vsel %vm2642, %v2625, %v2623
    %v2645 = vsel %vm2586, %v2643, %v2644
    %s2647 = scalar_lea.vmem [#allocation2], 8
    %2648 = vst [vmem:[%s2647] sm:$0xff] %v2645
    %v2649 = vsel %vm2641, %v2630, %v2628
    %v2650 = vsel %vm2642, %v2630, %v2628
    %v2651 = vsel %vm2586, %v2649, %v2650
    %s2653 = scalar_lea.vmem [#allocation6], 8
    %2654 = vst [vmem:[%s2653] sm:$0xff] %v2651
    %v2655 = vlaneseq
    %v2656 = vand.u32 %v2655, 127
    %v2657 = vxor.u32 %v2656, 2
    %2658 = vset.pattern.permute.xlu0 %v2657
    %v2659 = vlaneseq
    %v2660 = vand.u32 %v2659, 127
    %v2661 = vand.u32 %v2660, 2
    %vm2662 = vcmp.eq.s32.totalorder 0, %v2661
    %s2664 = scalar_lea.vmem [#allocation2], 0
    %v2665 = vld [vmem:[%s2664] sm:$0xff]
    %2666 = vperm.xlu0 %2658, %v2665
    %v2667 = vpop.permute.xlu0 %2666
    %s2669 = scalar_lea.vmem [#allocation6], 0
    %v2670 = vld [vmem:[%s2669] sm:$0xff]
    %2671 = vperm.xlu0 %2658, %v2670
    %v2672 = vpop.permute.xlu0 %2671
    %2673 = xla_tuple %v2667, %v2665
    %2674 = xla_tuple %2673
    %vm2675 = vcmp.gt.f32.partialorder %v2667, %v2665
    %v2676 = vsel %vm2675, 1, 0
    %2677 = xla_tuple %v2676
    %2678 = xla_tuple %v2665, %v2667
    %2679 = xla_tuple %2678
    %vm2680 = vcmp.gt.f32.partialorder %v2665, %v2667
    %v2681 = vsel %vm2680, 1, 0
    %2682 = xla_tuple %v2681
    %vm2683 = vcmp.ne.s32.totalorder %v2676, 0
    %vm2684 = vcmp.ne.s32.totalorder %v2681, 0
    %v2685 = vsel %vm2683, %v2667, %v2665
    %v2686 = vsel %vm2684, %v2667, %v2665
    %v2687 = vsel %vm2662, %v2685, %v2686
    %s2689 = scalar_lea.vmem [#allocation2], 0
    %2690 = vst [vmem:[%s2689] sm:$0xff] %v2687
    %v2691 = vsel %vm2683, %v2672, %v2670
    %v2692 = vsel %vm2684, %v2672, %v2670
    %v2693 = vsel %vm2662, %v2691, %v2692
    %s2695 = scalar_lea.vmem [#allocation6], 0
    %2696 = vst [vmem:[%s2695] sm:$0xff] %v2693
    %s2698 = scalar_lea.vmem [#allocation2], 8
    %v2699 = vld [vmem:[%s2698] sm:$0xff]
    %2700 = vperm.xlu0 %2658, %v2699
    %v2701 = vpop.permute.xlu0 %2700
    %s2703 = scalar_lea.vmem [#allocation6], 8
    %v2704 = vld [vmem:[%s2703] sm:$0xff]
    %2705 = vperm.xlu0 %2658, %v2704
    %v2706 = vpop.permute.xlu0 %2705
    %2707 = xla_tuple %v2701, %v2699
    %2708 = xla_tuple %2707
    %vm2709 = vcmp.gt.f32.partialorder %v2701, %v2699
    %v2710 = vsel %vm2709, 1, 0
    %2711 = xla_tuple %v2710
    %2712 = xla_tuple %v2699, %v2701
    %2713 = xla_tuple %2712
    %vm2714 = vcmp.gt.f32.partialorder %v2699, %v2701
    %v2715 = vsel %vm2714, 1, 0
    %2716 = xla_tuple %v2715
    %vm2717 = vcmp.ne.s32.totalorder %v2710, 0
    %vm2718 = vcmp.ne.s32.totalorder %v2715, 0
    %v2719 = vsel %vm2717, %v2701, %v2699
    %v2720 = vsel %vm2718, %v2701, %v2699
    %v2721 = vsel %vm2662, %v2719, %v2720
    %s2723 = scalar_lea.vmem [#allocation2], 8
    %2724 = vst [vmem:[%s2723] sm:$0xff] %v2721
    %v2725 = vsel %vm2717, %v2706, %v2704
    %v2726 = vsel %vm2718, %v2706, %v2704
    %v2727 = vsel %vm2662, %v2725, %v2726
    %s2729 = scalar_lea.vmem [#allocation6], 8
    %2730 = vst [vmem:[%s2729] sm:$0xff] %v2727
    %v2731 = vlaneseq
    %v2732 = vand.u32 %v2731, 127
    %v2733 = vxor.u32 %v2732, 1
    %2734 = vset.pattern.permute.xlu0 %v2733
    %v2735 = vlaneseq
    %v2736 = vand.u32 %v2735, 127
    %v2737 = vand.u32 %v2736, 1
    %vm2738 = vcmp.eq.s32.totalorder 0, %v2737
    %s2740 = scalar_lea.vmem [#allocation2], 0
    %v2741 = vld [vmem:[%s2740] sm:$0xff]
    %2742 = vperm.xlu0 %2734, %v2741
    %v2743 = vpop.permute.xlu0 %2742
    %s2745 = scalar_lea.vmem [#allocation6], 0
    %v2746 = vld [vmem:[%s2745] sm:$0xff]
    %2747 = vperm.xlu0 %2734, %v2746
    %v2748 = vpop.permute.xlu0 %2747
    %2749 = xla_tuple %v2743, %v2741
    %2750 = xla_tuple %2749
    %vm2751 = vcmp.gt.f32.partialorder %v2743, %v2741
    %v2752 = vsel %vm2751, 1, 0
    %2753 = xla_tuple %v2752
    %2754 = xla_tuple %v2741, %v2743
    %2755 = xla_tuple %2754
    %vm2756 = vcmp.gt.f32.partialorder %v2741, %v2743
    %v2757 = vsel %vm2756, 1, 0
    %2758 = xla_tuple %v2757
    %vm2759 = vcmp.ne.s32.totalorder %v2752, 0
    %vm2760 = vcmp.ne.s32.totalorder %v2757, 0
    %v2761 = vsel %vm2759, %v2743, %v2741
    %v2762 = vsel %vm2760, %v2743, %v2741
    %v2763 = vsel %vm2738, %v2761, %v2762
    %s2765 = scalar_lea.vmem [#allocation2], 0
    %2766 = vst [vmem:[%s2765] sm:$0xff] %v2763
    %v2767 = vsel %vm2759, %v2748, %v2746
    %v2768 = vsel %vm2760, %v2748, %v2746
    %v2769 = vsel %vm2738, %v2767, %v2768
    %s2771 = scalar_lea.vmem [#allocation6], 0
    %2772 = vst [vmem:[%s2771] sm:$0xff] %v2769
    %s2774 = scalar_lea.vmem [#allocation2], 8
    %v2775 = vld [vmem:[%s2774] sm:$0xff]
    %2776 = vperm.xlu0 %2734, %v2775
    %v2777 = vpop.permute.xlu0 %2776
    %s2779 = scalar_lea.vmem [#allocation6], 8
    %v2780 = vld [vmem:[%s2779] sm:$0xff]
    %2781 = vperm.xlu0 %2734, %v2780
    %v2782 = vpop.permute.xlu0 %2781
    %2783 = xla_tuple %v2777, %v2775
    %2784 = xla_tuple %2783
    %vm2785 = vcmp.gt.f32.partialorder %v2777, %v2775
    %v2786 = vsel %vm2785, 1, 0
    %2787 = xla_tuple %v2786
    %2788 = xla_tuple %v2775, %v2777
    %2789 = xla_tuple %2788
    %vm2790 = vcmp.gt.f32.partialorder %v2775, %v2777
    %v2791 = vsel %vm2790, 1, 0
    %2792 = xla_tuple %v2791
    %vm2793 = vcmp.ne.s32.totalorder %v2786, 0
    %vm2794 = vcmp.ne.s32.totalorder %v2791, 0
    %v2795 = vsel %vm2793, %v2777, %v2775
    %v2796 = vsel %vm2794, %v2777, %v2775
    %v2797 = vsel %vm2738, %v2795, %v2796
    %s2799 = scalar_lea.vmem [#allocation2], 8
    %2800 = vst [vmem:[%s2799] sm:$0xff] %v2797
    %v2801 = vsel %vm2793, %v2782, %v2780
    %v2802 = vsel %vm2794, %v2782, %v2780
    %v2803 = vsel %vm2738, %v2801, %v2802
    %s2805 = scalar_lea.vmem [#allocation6], 8
    %2806 = vst [vmem:[%s2805] sm:$0xff] %v2803
    %s2808 = sshllo.u32 0, 2
    %v2810 = vld [vmem:[#allocation2] sm:%s2808]
    %s2811 = sshllo.u32 0, 2
    %2812 = vst [vmem:[#allocation3] sm:%s2811] %v2810
    %s2813 = scalar_lea.vmem [#allocation2], 8
    %v2814 = vld [vmem:[%s2813] sm:%s2808]
    %s2815 = sshllo.u32 0, 2
    %s2816 = scalar_lea.vmem [#allocation3], 2
    %2817 = vst [vmem:[%s2816] sm:%s2815] %v2814
    %s2819 = sshllo.u32 0, 2
    %v2821 = vld [vmem:[#allocation6] sm:%s2819]
    %s2822 = sshllo.u32 0, 2
    %2823 = vst [vmem:[#allocation7] sm:%s2822] %v2821
    %s2824 = scalar_lea.vmem [#allocation6], 8
    %v2825 = vld [vmem:[%s2824] sm:%s2819]
    %s2826 = sshllo.u32 0, 2
    %s2827 = scalar_lea.vmem [#allocation7], 2
    %2828 = vst [vmem:[%s2827] sm:%s2826] %v2825
    // Predicated region
    $region62: #{approx_top_k.22} parent=1 // pred_check
      _
    $region63: #{approx_top_k.22} parent=1 // pred_check_branch
      %2830 = sbr.rel (0) target = $region65
    $region64: #{approx_top_k.22} parent=1 // pred_region
      // Predicated region
      $region66: #{approx_top_k.22} parent=64 // pred_check
        _
      $region67: #{approx_top_k.22} parent=64 // pred_check_branch
        %2832 = sbr.rel target = $region69
      $region68: #{approx_top_k.22} parent=64 // pred_region
        // Predicated region
        $region81: #{approx_top_k.22} parent=68 // pred_check
          _
        $region82: #{approx_top_k.22} parent=68 // pred_check_branch
          %2847 = sbr.rel (0) target = $region84
        $region83: #{approx_top_k.22} parent=68 // pred_region
          loop: start=0, step=1, limit=1
          $region85: #{approx_top_k.22} parent=83 // loop_pre_header
            _
          $region86: #{approx_top_k.22} parent=83 // loop_header
            %s2850 = sphi 0, %s2854
            %p2851 = scmp.ge.s32.totalorder %s2850, 1
            %s2855 = sphi [#allocation3], [#allocation3]
            %s2856 = sphi %s2, %s2
          $region87: #{approx_top_k.22} parent=83 // loop_header_branch
            %2853 = sbr.rel (%p2851) target = $region91
          $region88: #{approx_top_k.22} parent=83 // loop_body
            %v2857 = vld [vmem:[%s2855] sm:$0xf]
            %2858 = vst [vmem:[%s2856] sm:$0xf] %v2857
          $region89: #{approx_top_k.22} parent=83 // loop_footer
            %s2854 = sadd.s32 1, %s2850
          $region90: #{approx_top_k.22} parent=83 // loop_footer_branch
            %2849 = sbr.rel target = $region86
          $region91: #{approx_top_k.22} parent=83 // loop_exit
            _
        $region84: #{approx_top_k.22} parent=68 // pred_fallthru
          _
      $region69: #{approx_top_k.22} parent=64 // pred_fallthru
        _
      // Predicated region
      $region70: #{approx_top_k.22} parent=64 // pred_check
        _
      $region71: #{approx_top_k.22} parent=64 // pred_check_branch
        %2834 = sbr.rel (0) target = $region73
      $region72: #{approx_top_k.22} parent=64 // pred_region
        loop: start=0, step=1, limit=1
        $region74: #{approx_top_k.22} parent=72 // loop_pre_header
          _
        $region75: #{approx_top_k.22} parent=72 // loop_header
          %s2837 = sphi 0, %s2841
          %p2838 = scmp.ge.s32.totalorder %s2837, 1
          %s2842 = sphi [#allocation3], [#allocation3]
          %s2843 = sphi %s2, %s2
        $region76: #{approx_top_k.22} parent=72 // loop_header_branch
          %2840 = sbr.rel (%p2838) target = $region80
        $region77: #{approx_top_k.22} parent=72 // loop_body
          %v2844 = vld [vmem:[%s2842] sm:$0xf]
          %2845 = vst [vmem:[%s2843] sm:$0xf] %v2844
        $region78: #{approx_top_k.22} parent=72 // loop_footer
          %s2841 = sadd.s32 1, %s2837
        $region79: #{approx_top_k.22} parent=72 // loop_footer_branch
          %2836 = sbr.rel target = $region75
        $region80: #{approx_top_k.22} parent=72 // loop_exit
          _
      $region73: #{approx_top_k.22} parent=64 // pred_fallthru
        _
    $region65: #{approx_top_k.22} parent=1 // pred_fallthru
      _
    %2859 = vnop
    // Predicated region
    $region92: #{approx_top_k.22} parent=1 // pred_check
      _
    $region93: #{approx_top_k.22} parent=1 // pred_check_branch
      %2861 = sbr.rel (0) target = $region95
    $region94: #{approx_top_k.22} parent=1 // pred_region
      // Predicated region
      $region96: #{approx_top_k.22} parent=94 // pred_check
        _
      $region97: #{approx_top_k.22} parent=94 // pred_check_branch
        %2863 = sbr.rel target = $region99
      $region98: #{approx_top_k.22} parent=94 // pred_region
        // Predicated region
        $region111: #{approx_top_k.22} parent=98 // pred_check
          _
        $region112: #{approx_top_k.22} parent=98 // pred_check_branch
          %2878 = sbr.rel (0) target = $region114
        $region113: #{approx_top_k.22} parent=98 // pred_region
          loop: start=0, step=1, limit=1
          $region115: #{approx_top_k.22} parent=113 // loop_pre_header
            _
          $region116: #{approx_top_k.22} parent=113 // loop_header
            %s2881 = sphi 0, %s2885
            %p2882 = scmp.ge.s32.totalorder %s2881, 1
            %s2886 = sphi [#allocation7], [#allocation7]
            %s2887 = sphi %s3, %s3
          $region117: #{approx_top_k.22} parent=113 // loop_header_branch
            %2884 = sbr.rel (%p2882) target = $region121
          $region118: #{approx_top_k.22} parent=113 // loop_body
            %v2888 = vld [vmem:[%s2886] sm:$0xf]
            %2889 = vst [vmem:[%s2887] sm:$0xf] %v2888
          $region119: #{approx_top_k.22} parent=113 // loop_footer
            %s2885 = sadd.s32 1, %s2881
          $region120: #{approx_top_k.22} parent=113 // loop_footer_branch
            %2880 = sbr.rel target = $region116
          $region121: #{approx_top_k.22} parent=113 // loop_exit
            _
        $region114: #{approx_top_k.22} parent=98 // pred_fallthru
          _
      $region99: #{approx_top_k.22} parent=94 // pred_fallthru
        _
      // Predicated region
      $region100: #{approx_top_k.22} parent=94 // pred_check
        _
      $region101: #{approx_top_k.22} parent=94 // pred_check_branch
        %2865 = sbr.rel (0) target = $region103
      $region102: #{approx_top_k.22} parent=94 // pred_region
        loop: start=0, step=1, limit=1
        $region104: #{approx_top_k.22} parent=102 // loop_pre_header
          _
        $region105: #{approx_top_k.22} parent=102 // loop_header
          %s2868 = sphi 0, %s2872
          %p2869 = scmp.ge.s32.totalorder %s2868, 1
          %s2873 = sphi [#allocation7], [#allocation7]
          %s2874 = sphi %s3, %s3
        $region106: #{approx_top_k.22} parent=102 // loop_header_branch
          %2871 = sbr.rel (%p2869) target = $region110
        $region107: #{approx_top_k.22} parent=102 // loop_body
          %v2875 = vld [vmem:[%s2873] sm:$0xf]
          %2876 = vst [vmem:[%s2874] sm:$0xf] %v2875
        $region108: #{approx_top_k.22} parent=102 // loop_footer
          %s2872 = sadd.s32 1, %s2868
        $region109: #{approx_top_k.22} parent=102 // loop_footer_branch
          %2867 = sbr.rel target = $region105
        $region110: #{approx_top_k.22} parent=102 // loop_exit
          _
      $region103: #{approx_top_k.22} parent=94 // pred_fallthru
        _
    $region95: #{approx_top_k.22} parent=1 // pred_fallthru
      _
    %2890 = vnop

// kernel: detect_forward.2
$region0: #{detect_forward.2}
  #allocation0 [shape = 'u32[]', space=smem, size = 0x4, offset = 0x4, fixed_abs, tag = 'smem constant byte address 0x4 - core index']
  #allocation1 [shape = 'u32[144,128]{1,0:T(1,128)}', space=vmem, size = 0x12000, scoped, tag = 'internal scratch']
  %s0 = inlined_call_operand.vmem [shape: f32[2,8,128], index: 0, kind: input, shape index: {}]
  %s1 = inlined_call_operand.vmem [shape: f32[8,128], index: 1, kind: input, shape index: {}]
  %s2 = inlined_call_operand.vmem [shape: f32[8,128], index: 2, kind: input, shape index: {}]
  %s3 = inlined_call_operand.vmem [shape: f32[2,8,128], index: 3, kind: output, shape index: {}]
  %s4 = sld [smem:[#allocation0]]
  $region45: #{detect_forward.2} parent=0
    _
  %s6 = ssub.s32 1, %s4
  %s7 = scalar_select 0, %s6, %s4
  loop: start=0, step=1, limit=4
  $region2: #{detect_forward.2} parent=0 // loop_pre_header
    _
  $region3: #{detect_forward.2} parent=0 // loop_header
    %s9 = sphi 0, %s13
    %p10 = scmp.ge.s32.totalorder %s9, 4
    %s16 = sphi 0, %s28
    %s17 = sphi 0, %s24
    %s18 = sphi 0, %s16
    %s19 = sphi 0, %s17
    %s20 = sphi 0, %s18
    %s21 = sphi 0, %s19
    %s33 = sphi 0, %s35
    %s36 = sphi 0, %s33
    %s37 = sphi 0, %s36
    %s53 = sphi 0, %s37
    %s59 = sphi 0, %s61
    %s62 = sphi 0, %s59
    %s63 = sphi 0, %s62
    %s79 = sphi 0, %s63
    %s85 = sphi 0, %s87
    %s88 = sphi 0, %s85
    %s89 = sphi 0, %s88
    %s105 = sphi 0, %s89
    %s113 = sphi 0, %s115
    %s116 = sphi 0, %s113
    %s117 = sphi 0, %s116
    %s133 = sphi 0, %s117
  $region4: #{detect_forward.2} parent=0 // loop_header_branch
    %12 = sbr.rel (%p10) target = $region8
  $region5: #{detect_forward.2} parent=0 // loop_body
    %s14 = ssub.s32 %s9, 1
    %s15 = ssub.s32 %s9, 2
    %s22 = sadd.s32 1, %s17
    %p23 = scmp.ge.s32.totalorder %s22, 1
    %s24 = scalar_select %p23, 0, %s22
    %s25 = sadd.s32 1, %s16
    %s26 = scalar_select %p23, %s25, %s16
    %p27 = scmp.ge.s32.totalorder %s26, 2
    %s28 = scalar_select %p27, 0, %s26
    %s29 = ssub.s32 %s16, %s28
    %s30 = ssub.s32 %s17, %s24
    %s31 = sor.u32 %s29, %s30
    %p32 = scmp.eq.s32.totalorder %s31, 0
    %s34 = sadd.s32 %s33, 1
    %s35 = scalar_select %p32, %s33, %s34
    %p38 = pneg %p32
    %p39 = scmp.eq.s32.totalorder %s9, 1
    %p40 = por %p38, %p39
    %p41 = scmp.ne.s32.totalorder %s33, %s36
    %p42 = scmp.eq.s32.totalorder %s9, 0
    %p43 = por %p41, %p42
    %p44 = scmp.ne.s32.totalorder %s33, %s36
    %p45 = scmp.eq.s32.totalorder %s14, 1
    %p46 = por %p44, %p45
    %p47 = scmp.ne.s32.totalorder %s36, %s37
    %p48 = scmp.eq.s32.totalorder %s14, 0
    %p49 = por %p47, %p48
    %p50 = scmp.ne.s32.totalorder %s36, %s37
    %p51 = scmp.eq.s32.totalorder %s15, 1
    %p52 = por %p50, %p51
    %p54 = scmp.ne.s32.totalorder %s37, %s53
    %p55 = scmp.eq.s32.totalorder %s15, 0
    %p56 = por %p54, %p55
    %s57 = ssub.s32 %s17, %s24
    %p58 = scmp.eq.s32.totalorder %s57, 0
    %s60 = sadd.s32 %s59, 1
    %s61 = scalar_select %p58, %s59, %s60
    %p64 = pneg %p58
    %p65 = scmp.eq.s32.totalorder %s9, 1
    %p66 = por %p64, %p65
    %p67 = scmp.ne.s32.totalorder %s59, %s62
    %p68 = scmp.eq.s32.totalorder %s9, 0
    %p69 = por %p67, %p68
    %p70 = scmp.ne.s32.totalorder %s59, %s62
    %p71 = scmp.eq.s32.totalorder %s14, 1
    %p72 = por %p70, %p71
    %p73 = scmp.ne.s32.totalorder %s62, %s63
    %p74 = scmp.eq.s32.totalorder %s14, 0
    %p75 = por %p73, %p74
    %p76 = scmp.ne.s32.totalorder %s62, %s63
    %p77 = scmp.eq.s32.totalorder %s15, 1
    %p78 = por %p76, %p77
    %p80 = scmp.ne.s32.totalorder %s63, %s79
    %p81 = scmp.eq.s32.totalorder %s15, 0
    %p82 = por %p80, %p81
    %s83 = ssub.s32 %s17, %s24
    %p84 = scmp.eq.s32.totalorder %s83, 0
    %s86 = sadd.s32 %s85, 1
    %s87 = scalar_select %p84, %s85, %s86
    %p90 = pneg %p84
    %p91 = scmp.eq.s32.totalorder %s9, 1
    %p92 = por %p90, %p91
    %p93 = scmp.ne.s32.totalorder %s85, %s88
    %p94 = scmp.eq.s32.totalorder %s9, 0
    %p95 = por %p93, %p94
    %p96 = scmp.ne.s32.totalorder %s85, %s88
    %p97 = scmp.eq.s32.totalorder %s14, 1
    %p98 = por %p96, %p97
    %p99 = scmp.ne.s32.totalorder %s88, %s89
    %p100 = scmp.eq.s32.totalorder %s14, 0
    %p101 = por %p99, %p100
    %p102 = scmp.ne.s32.totalorder %s88, %s89
    %p103 = scmp.eq.s32.totalorder %s15, 1
    %p104 = por %p102, %p103
    %p106 = scmp.ne.s32.totalorder %s89, %s105
    %p107 = scmp.eq.s32.totalorder %s15, 0
    %p108 = por %p106, %p107
    %s109 = ssub.s32 %s16, %s28
    %s110 = ssub.s32 %s17, %s24
    %s111 = sor.u32 %s109, %s110
    %p112 = scmp.eq.s32.totalorder %s111, 0
    %s114 = sadd.s32 %s113, 1
    %s115 = scalar_select %p112, %s113, %s114
    %p118 = pneg %p112
    %p119 = scmp.eq.s32.totalorder %s9, 1
    %p120 = por %p118, %p119
    %p121 = scmp.ne.s32.totalorder %s113, %s116
    %p122 = scmp.eq.s32.totalorder %s9, 0
    %p123 = por %p121, %p122
    %p124 = scmp.ne.s32.totalorder %s113, %s116
    %p125 = scmp.eq.s32.totalorder %s14, 1
    %p126 = por %p124, %p125
    %p127 = scmp.ne.s32.totalorder %s116, %s117
    %p128 = scmp.eq.s32.totalorder %s14, 0
    %p129 = por %p127, %p128
    %p130 = scmp.ne.s32.totalorder %s116, %s117
    %p131 = scmp.eq.s32.totalorder %s15, 1
    %p132 = por %p130, %p131
    %p134 = scmp.ne.s32.totalorder %s117, %s133
    %p135 = scmp.eq.s32.totalorder %s15, 0
    %p136 = por %p134, %p135
    %p137 = scmp.le.s32.totalorder 1, %s9
    %p138 = scmp.lt.s32.totalorder %s9, 3
    %p139 = pnand %p137, %p138
    %p140 = pneg %p139
    // Predicated region
    $region9: #{detect_forward.2} parent=5 // pred_check
      _
    $region10: #{detect_forward.2} parent=5 // pred_check_branch
      %142 = sbr.rel (%p139) target = $region12
    $region11: #{detect_forward.2} parent=5 // pred_region
      %s143 = ssub.s32 %s9, 1
      // Predicated region
      $region13: #{detect_forward.2} parent=11 // pred_check
        %p144 = pneg %p75
      $region14: #{detect_forward.2} parent=11 // pred_check_branch
        %146 = sbr.rel (%p144) target = $region16
      $region15: #{detect_forward.2} parent=11 // pred_region
        %p147 = scmp.lt.s32.totalorder %s19, 0
        %s148 = scalar_select %p147, %s19, 0
        %s149 = smul.addr %s148, 8
        %s150 = scalar_lea.vmem %s1, %s149
      $region16: #{detect_forward.2} parent=11 // pred_fallthru
        _
      // Predicated region
      $region17: #{detect_forward.2} parent=11 // pred_check
        %p151 = pneg %p101
      $region18: #{detect_forward.2} parent=11 // pred_check_branch
        %153 = sbr.rel (%p151) target = $region20
      $region19: #{detect_forward.2} parent=11 // pred_region
        %p154 = scmp.lt.s32.totalorder %s19, 0
        %s155 = scalar_select %p154, %s19, 0
        %s156 = smul.addr %s155, 8
        %s157 = scalar_lea.vmem %s2, %s156
      $region20: #{detect_forward.2} parent=11 // pred_fallthru
        _
    $region12: #{detect_forward.2} parent=5 // pred_fallthru
      _
    %p158 = scmp.lt.s32.totalorder %s9, 2
    // Predicated region
    $region21: #{detect_forward.2} parent=5 // pred_check
      %p159 = pneg %p158
    $region22: #{detect_forward.2} parent=5 // pred_check_branch
      %161 = sbr.rel (%p159) target = $region24
    $region23: #{detect_forward.2} parent=5 // pred_region
      // Predicated region
      $region25: #{detect_forward.2} parent=23 // pred_check
        %p162 = pneg %p43
      $region26: #{detect_forward.2} parent=23 // pred_check_branch
        %164 = sbr.rel (%p162) target = $region28
      $region27: #{detect_forward.2} parent=23 // pred_region
        %p165 = scmp.lt.s32.totalorder %s16, 1
        %s166 = scalar_select %p165, %s16, 1
        %p167 = scmp.lt.s32.totalorder %s17, 0
        %s168 = scalar_select %p167, %s17, 0
        %s169 = sadd.s32 %s168, %s166
        %s170 = smul.addr %s169, 8
        %s171 = scalar_lea.vmem %s0, %s170
      $region28: #{detect_forward.2} parent=23 // pred_fallthru
        _
    $region24: #{detect_forward.2} parent=5 // pred_fallthru
      _
    %p172 = scmp.le.s32.totalorder 1, %s9
    %p173 = scmp.lt.s32.totalorder %s9, 3
    %p174 = pnand %p172, %p173
    %p175 = pneg %p174
    // Predicated region
    $region29: #{detect_forward.2} parent=5 // pred_check
      _
    $region30: #{detect_forward.2} parent=5 // pred_check_branch
      %177 = sbr.rel (%p174) target = $region32
    $region31: #{detect_forward.2} parent=5 // pred_region
      %s178 = ssub.s32 %s9, 1
      %p179 = scmp.lt.s32.totalorder %s18, 1
      %s180 = scalar_select %p179, %s18, 1
      %p181 = scmp.lt.s32.totalorder %s19, 0
      %s182 = scalar_select %p181, %s19, 0
      %s183 = sadd.s32 %s182, %s180
      %s184 = smul.addr %s183, 8
      %s185 = scalar_lea.vmem %s0, %s184
      %p186 = pneg %p49
      %p187 = pneg %p46
      %p188 = scmp.lt.s32.totalorder %s19, 0
      %s189 = scalar_select %p188, %s19, 0
      %s190 = smul.addr %s189, 8
      %s191 = scalar_lea.vmem %s1, %s190
      %p192 = pneg %p75
      %p193 = pneg %p72
      %p194 = scmp.lt.s32.totalorder %s19, 0
      %s195 = scalar_select %p194, %s19, 0
      %s196 = smul.addr %s195, 8
      %s197 = scalar_lea.vmem %s2, %s196
      %p198 = pneg %p101
      %p199 = pneg %p98
      %p200 = pneg %p129
      %p201 = pneg %p126
      %p202 = scmp.lt.s32.totalorder %s18, 1
      %s203 = scalar_select %p202, %s18, 1
      %p204 = scmp.lt.s32.totalorder %s19, 0
      %s205 = scalar_select %p204, %s19, 0
      %s206 = sadd.s32 %s205, %s203
      %s207 = smul.addr %s206, 8
      %s208 = scalar_lea.vmem %s3, %s207
      %p209 = scmp.lt.s32.totalorder %s18, 1
      %s210 = scalar_select %p209, %s18, 1
      %p211 = scmp.lt.s32.totalorder %s19, 0
      %s212 = scalar_select %p211, %s19, 0
      %s213 = sadd.s32 %s212, %s210
      %s214 = smul.addr %s213, 8
      %s215 = scalar_lea.vmem %s0, %s214
      %p216 = scmp.lt.s32.totalorder %s19, 0
      %s217 = scalar_select %p216, %s19, 0
      %s218 = smul.addr %s217, 8
      %s219 = scalar_lea.vmem %s1, %s218
      %p220 = scmp.lt.s32.totalorder %s19, 0
      %s221 = scalar_select %p220, %s19, 0
      %s222 = smul.addr %s221, 8
      %s223 = scalar_lea.vmem %s2, %s222
      %p224 = scmp.lt.s32.totalorder %s18, 1
      %s225 = scalar_select %p224, %s18, 1
      %p226 = scmp.lt.s32.totalorder %s19, 0
      %s227 = scalar_select %p226, %s19, 0
      %s228 = sadd.s32 %s227, %s225
      %s229 = smul.addr %s228, 8
      %s230 = scalar_lea.vmem %s3, %s229
      %v231 = vld [vmem:[%s215] sm:$0xff]
      %v232 = vld [vmem:[%s219] sm:$0xff]
      %v233 = vld [vmem:[%s223] sm:$0xff]
      %v234 = vlaneseq
      %v235 = vand.u32 %v234, 127
      %vm236 = vcmp.lt.s32.totalorder %v235, 0
      %v237 = vsub.s32 0, %v235
      %v238 = vsel %vm236, %v237, %v235
      %v239 = vshrl.u32 %v238, 2
      %v240 = vand.u32 %v238, 3
      %v241 = vsub.s32 0, %v240
      %v242 = vsel %vm236, %v241, %v240
      %vm243 = vcmp.ne.s32.totalorder %v242, 0
      %vm244 = vcmp.lt.s32.totalorder %v242, 0
      %vm245 = vmand %vm244, %vm243
      %v246 = vadd.s32 %v242, 4
      %v247 = vsel %vm245, %v246, %v242
      %vm248 = vcmp.lt.s32.totalorder %v247, 2
      %v249 = vmul.f32 %v231, %v233
      %v250 = vadd.f32 %v232, %v249
      %v251 = vmul.f32 %v249, 1.442695
      %v252 = vpow.pop %v251
      %v253 = vmul.f32 %v232, %v252
      %v254 = vsel %vm248, %v250, %v253
      %255 = vst [vmem:[%s230] sm:$0xff] %v254
      %p256 = scmp.lt.s32.totalorder %s18, 1
      %s257 = scalar_select %p256, %s18, 1
      %p258 = scmp.lt.s32.totalorder %s19, 0
      %s259 = scalar_select %p258, %s19, 0
      %s260 = sadd.s32 %s259, %s257
      %s261 = smul.addr %s260, 8
      %s262 = scalar_lea.vmem %s3, %s261
      // Predicated region
      $region33: #{detect_forward.2} parent=31 // pred_check
        %p263 = pneg %p126
      $region34: #{detect_forward.2} parent=31 // pred_check_branch
        %265 = sbr.rel (%p263) target = $region36
      $region35: #{detect_forward.2} parent=31 // pred_region
        _
      $region36: #{detect_forward.2} parent=31 // pred_fallthru
        _
    $region32: #{detect_forward.2} parent=5 // pred_fallthru
      _
    %p266 = scmp.le.s32.totalorder 2, %s9
    // Predicated region
    $region37: #{detect_forward.2} parent=5 // pred_check
      %p267 = pneg %p266
    $region38: #{detect_forward.2} parent=5 // pred_check_branch
      %269 = sbr.rel (%p267) target = $region40
    $region39: #{detect_forward.2} parent=5 // pred_region
      %s270 = ssub.s32 %s9, 2
      // Predicated region
      $region41: #{detect_forward.2} parent=39 // pred_check
        %p271 = pneg %p132
      $region42: #{detect_forward.2} parent=39 // pred_check_branch
        %273 = sbr.rel (%p271) target = $region44
      $region43: #{detect_forward.2} parent=39 // pred_region
        %p274 = scmp.lt.s32.totalorder %s20, 1
        %s275 = scalar_select %p274, %s20, 1
        %p276 = scmp.lt.s32.totalorder %s21, 0
        %s277 = scalar_select %p276, %s21, 0
        %s278 = sadd.s32 %s277, %s275
        %s279 = smul.addr %s278, 8
        %s280 = scalar_lea.vmem %s3, %s279
      $region44: #{detect_forward.2} parent=39 // pred_fallthru
        _
    $region40: #{detect_forward.2} parent=5 // pred_fallthru
      _
  $region6: #{detect_forward.2} parent=0 // loop_footer
    %s13 = sadd.s32 1, %s9
  $region7: #{detect_forward.2} parent=0 // loop_footer_branch
    %8 = sbr.rel target = $region3
  $region8: #{detect_forward.2} parent=0 // loop_exit
    _

// kernel: detect_forward.3
$region0: #{detect_forward.3}
  #allocation0 [shape = 'u32[]', space=smem, size = 0x4, offset = 0x4, fixed_abs, tag = 'smem constant byte address 0x4 - core index']
  #allocation1 [shape = 'u32[144,128]{1,0:T(1,128)}', space=vmem, size = 0x12000, scoped, tag = 'internal scratch']
  %s0 = inlined_call_operand.vmem [shape: f32[2,1,128], index: 0, kind: input, shape index: {}]
  %s1 = inlined_call_operand.vmem [shape: f32[2,4,128], index: 1, kind: input, shape index: {}]
  %s2 = inlined_call_operand.vmem [shape: f32[2,5,5], index: 2, kind: output, shape index: {}]
  %s3 = sld [smem:[#allocation0]]
  $region41: #{detect_forward.3} parent=0
    _
  %s5 = ssub.s32 1, %s3
  %s6 = scalar_select 0, %s5, %s3
  loop: start=0, step=1, limit=4
  $region2: #{detect_forward.3} parent=0 // loop_pre_header
    _
  $region3: #{detect_forward.3} parent=0 // loop_header
    %s8 = sphi 0, %s12
    %p9 = scmp.ge.s32.totalorder %s8, 4
    %s18 = sphi 0, %s20
    %s21 = sphi 0, %s18
    %s22 = sphi 0, %s21
    %s38 = sphi 0, %s22
    %s44 = sphi 0, %s46
    %s47 = sphi 0, %s44
    %s48 = sphi 0, %s47
    %s64 = sphi 0, %s48
    %s70 = sphi 0, %s72
    %s73 = sphi 0, %s70
    %s74 = sphi 0, %s73
    %s90 = sphi 0, %s74
  $region4: #{detect_forward.3} parent=0 // loop_header_branch
    %11 = sbr.rel (%p9) target = $region8
  $region5: #{detect_forward.3} parent=0 // loop_body
    %s13 = ssub.s32 %s8, 1
    %s14 = ssub.s32 %s8, 2
    %s15 = sadd.s32 %s8, 1
    %s16 = ssub.s32 %s8, %s15
    %p17 = scmp.eq.s32.totalorder %s16, 0
    %s19 = sadd.s32 %s18, 1
    %s20 = scalar_select %p17, %s18, %s19
    %p23 = pneg %p17
    %p24 = scmp.eq.s32.totalorder %s8, 1
    %p25 = por %p23, %p24
    %p26 = scmp.ne.s32.totalorder %s18, %s21
    %p27 = scmp.eq.s32.totalorder %s8, 0
    %p28 = por %p26, %p27
    %p29 = scmp.ne.s32.totalorder %s18, %s21
    %p30 = scmp.eq.s32.totalorder %s13, 1
    %p31 = por %p29, %p30
    %p32 = scmp.ne.s32.totalorder %s21, %s22
    %p33 = scmp.eq.s32.totalorder %s13, 0
    %p34 = por %p32, %p33
    %p35 = scmp.ne.s32.totalorder %s21, %s22
    %p36 = scmp.eq.s32.totalorder %s14, 1
    %p37 = por %p35, %p36
    %p39 = scmp.ne.s32.totalorder %s22, %s38
    %p40 = scmp.eq.s32.totalorder %s14, 0
    %p41 = por %p39, %p40
    %s42 = ssub.s32 %s8, %s15
    %p43 = scmp.eq.s32.totalorder %s42, 0
    %s45 = sadd.s32 %s44, 1
    %s46 = scalar_select %p43, %s44, %s45
    %p49 = pneg %p43
    %p50 = scmp.eq.s32.totalorder %s8, 1
    %p51 = por %p49, %p50
    %p52 = scmp.ne.s32.totalorder %s44, %s47
    %p53 = scmp.eq.s32.totalorder %s8, 0
    %p54 = por %p52, %p53
    %p55 = scmp.ne.s32.totalorder %s44, %s47
    %p56 = scmp.eq.s32.totalorder %s13, 1
    %p57 = por %p55, %p56
    %p58 = scmp.ne.s32.totalorder %s47, %s48
    %p59 = scmp.eq.s32.totalorder %s13, 0
    %p60 = por %p58, %p59
    %p61 = scmp.ne.s32.totalorder %s47, %s48
    %p62 = scmp.eq.s32.totalorder %s14, 1
    %p63 = por %p61, %p62
    %p65 = scmp.ne.s32.totalorder %s48, %s64
    %p66 = scmp.eq.s32.totalorder %s14, 0
    %p67 = por %p65, %p66
    %s68 = ssub.s32 %s8, %s15
    %p69 = scmp.eq.s32.totalorder %s68, 0
    %s71 = sadd.s32 %s70, 1
    %s72 = scalar_select %p69, %s70, %s71
    %p75 = pneg %p69
    %p76 = scmp.eq.s32.totalorder %s8, 1
    %p77 = por %p75, %p76
    %p78 = scmp.ne.s32.totalorder %s70, %s73
    %p79 = scmp.eq.s32.totalorder %s8, 0
    %p80 = por %p78, %p79
    %p81 = scmp.ne.s32.totalorder %s70, %s73
    %p82 = scmp.eq.s32.totalorder %s13, 1
    %p83 = por %p81, %p82
    %p84 = scmp.ne.s32.totalorder %s73, %s74
    %p85 = scmp.eq.s32.totalorder %s13, 0
    %p86 = por %p84, %p85
    %p87 = scmp.ne.s32.totalorder %s73, %s74
    %p88 = scmp.eq.s32.totalorder %s14, 1
    %p89 = por %p87, %p88
    %p91 = scmp.ne.s32.totalorder %s74, %s90
    %p92 = scmp.eq.s32.totalorder %s14, 0
    %p93 = por %p91, %p92
    %p94 = scmp.le.s32.totalorder 1, %s8
    %p95 = scmp.lt.s32.totalorder %s8, 3
    %p96 = pnand %p94, %p95
    %p97 = pneg %p96
    // Predicated region
    $region9: #{detect_forward.3} parent=5 // pred_check
      _
    $region10: #{detect_forward.3} parent=5 // pred_check_branch
      %99 = sbr.rel (%p96) target = $region12
    $region11: #{detect_forward.3} parent=5 // pred_region
      %s100 = ssub.s32 %s8, 1
    $region12: #{detect_forward.3} parent=5 // pred_fallthru
      _
    %p101 = scmp.lt.s32.totalorder %s8, 2
    // Predicated region
    $region13: #{detect_forward.3} parent=5 // pred_check
      %p102 = pneg %p101
    $region14: #{detect_forward.3} parent=5 // pred_check_branch
      %104 = sbr.rel (%p102) target = $region16
    $region15: #{detect_forward.3} parent=5 // pred_region
      // Predicated region
      $region17: #{detect_forward.3} parent=15 // pred_check
        %p105 = pneg %p28
      $region18: #{detect_forward.3} parent=15 // pred_check_branch
        %107 = sbr.rel (%p105) target = $region20
      $region19: #{detect_forward.3} parent=15 // pred_region
        %p108 = scmp.lt.s32.totalorder %s8, 1
        %s109 = scalar_select %p108, %s8, 1
        %s110 = scalar_lea.vmem %s0, %s109
      $region20: #{detect_forward.3} parent=15 // pred_fallthru
        _
      // Predicated region
      $region21: #{detect_forward.3} parent=15 // pred_check
        %p111 = pneg %p54
      $region22: #{detect_forward.3} parent=15 // pred_check_branch
        %113 = sbr.rel (%p111) target = $region24
      $region23: #{detect_forward.3} parent=15 // pred_region
        %p114 = scmp.lt.s32.totalorder %s8, 1
        %s115 = scalar_select %p114, %s8, 1
        %s116 = smul.addr %s115, 4
        %s117 = scalar_lea.vmem %s1, %s116
      $region24: #{detect_forward.3} parent=15 // pred_fallthru
        _
    $region16: #{detect_forward.3} parent=5 // pred_fallthru
      _
    %p118 = scmp.le.s32.totalorder 1, %s8
    %p119 = scmp.lt.s32.totalorder %s8, 3
    %p120 = pnand %p118, %p119
    %p121 = pneg %p120
    // Predicated region
    $region25: #{detect_forward.3} parent=5 // pred_check
      _
    $region26: #{detect_forward.3} parent=5 // pred_check_branch
      %123 = sbr.rel (%p120) target = $region28
    $region27: #{detect_forward.3} parent=5 // pred_region
      %s124 = ssub.s32 %s8, 1
      %p125 = scmp.lt.s32.totalorder %s13, 1
      %s126 = scalar_select %p125, %s13, 1
      %s127 = scalar_lea.vmem %s0, %s126
      %p128 = pneg %p34
      %p129 = pneg %p31
      %p130 = scmp.lt.s32.totalorder %s13, 1
      %s131 = scalar_select %p130, %s13, 1
      %s132 = smul.addr %s131, 4
      %s133 = scalar_lea.vmem %s1, %s132
      %p134 = pneg %p60
      %p135 = pneg %p57
      %p136 = pneg %p86
      %p137 = pneg %p83
      %p138 = scmp.lt.s32.totalorder %s13, 1
      %s139 = scalar_select %p138, %s13, 1
      %s140 = smul.addr %s139, 8
      %s141 = scalar_lea.vmem %s2, %s140
      %p142 = scmp.lt.s32.totalorder %s13, 1
      %s143 = scalar_select %p142, %s13, 1
      %s144 = scalar_lea.vmem %s0, %s143
      %p145 = scmp.lt.s32.totalorder %s13, 1
      %s146 = scalar_select %p145, %s13, 1
      %s147 = smul.addr %s146, 4
      %s148 = scalar_lea.vmem %s1, %s147
      %p149 = scmp.lt.s32.totalorder %s13, 1
      %s150 = scalar_select %p149, %s13, 1
      %s151 = smul.addr %s150, 8
      %s152 = scalar_lea.vmem %s2, %s151
      %v153 = vld [vmem:[%s144] sm:$0x1]
      %v154 = vld [vmem:[%s148] sm:$0x1]
      %v155 = vld [vmem:[%s148 + $0x1] sm:$0x1]
      %v156 = vld [vmem:[%s148 + $0x2] sm:$0x1]
      %v157 = vld [vmem:[%s148 + $0x3] sm:$0x1]
      %v158 = vmul.f32 %v156, 0.5
      %v159 = vsub.f32 %v154, %v158
      %v160 = vmul.f32 %v157, 0.5
      %v161 = vsub.f32 %v155, %v160
      %v162 = vadd.f32 %v159, %v156
      %v163 = vadd.f32 %v161, %v157
      %v164 = vsub.f32 %v162, %v159
      %v165 = vsub.f32 %v163, %v161
      %v166 = vmul.f32 %v164, %v165
      %v167 = vlaneseq
      %v168 = vand.u32 %v167, 127
      %v169 = vcvt.s32.f32 %v168
      %vm170 = vcmask 1040384
      %v171 = vsel %vm170, %v153, -inf
      %172 = vmax.xlane.f32.xlu0 %v171
      %v173 = vpop.xlane.xlu0 %172
      %vm174 = vcmp.ge.f32.partialorder %v153, %v173
      %v175 = vsel %vm174, %v169, 128.0
      %v176 = vsel %vm170, %v175, inf
      %177 = vmin.xlane.f32.xlu0 %v176
      %v178 = vpop.xlane.xlu0 %177
      %vm179 = vcmp.eq.f32.partialorder %v169, %v178
      %v180 = vsel %vm179, %v159, 0.0
      %v181 = vsel %vm170, %v180, 0.0
      %182 = vadd.xlane.f32.xlu0 %v181
      %v183 = vpop.xlane.xlu0 %182
      %v184 = vsel %vm179, %v161, 0.0
      %v185 = vsel %vm170, %v184, 0.0
      %186 = vadd.xlane.f32.xlu0 %v185
      %v187 = vpop.xlane.xlu0 %186
      %v188 = vsel %vm179, %v162, 0.0
      %v189 = vsel %vm170, %v188, 0.0
      %190 = vadd.xlane.f32.xlu0 %v189
      %v191 = vpop.xlane.xlu0 %190
      %v192 = vsel %vm179, %v163, 0.0
      %v193 = vsel %vm170, %v192, 0.0
      %194 = vadd.xlane.f32.xlu0 %v193
      %v195 = vpop.xlane.xlu0 %194
      %v196 = vsub.f32 %v191, %v183
      %v197 = vsub.f32 %v195, %v187
      %v198 = vmul.f32 %v196, %v197
      %v199 = vmin.f32 %v162, %v191
      %v200 = vmax.f32 %v159, %v183
      %v201 = vsub.f32 %v199, %v200
      %v202 = vmax.f32 %v201, 0.0
      %v203 = vmin.f32 %v163, %v195
      %v204 = vmax.f32 %v161, %v187
      %v205 = vsub.f32 %v203, %v204
      %v206 = vmax.f32 %v205, 0.0
      %v207 = vmul.f32 %v202, %v206
      %v208 = vadd.f32 %v166, %v198
      %v209 = vsub.f32 %v208, %v207
      %v210 = vmax.f32 %v209, 1e-12
      %v211 = vrcp.pop %v210
      %v212 = vmul.f32 %v207, %v211
      %vm213 = vcmp.gt.f32.partialorder %v173, 0.05
      %vm214 = vcmp.eq.s32.totalorder %v168, 0
      %v215 = vsel %vm214, %v173, 0.0
      %vm216 = vcmp.eq.s32.totalorder %v168, 1
      %v217 = vsel %vm216, %v183, 0.0
      %v218 = vadd.f32 %v215, %v217
      %vm219 = vcmp.eq.s32.totalorder %v168, 2
      %v220 = vsel %vm219, %v187, 0.0
      %v221 = vadd.f32 %v218, %v220
      %vm222 = vcmp.eq.s32.totalorder %v168, 3
      %v223 = vsel %vm222, %v191, 0.0
      %v224 = vadd.f32 %v221, %v223
      %vm225 = vcmp.eq.s32.totalorder %v168, 4
      %v226 = vsel %vm225, %v195, 0.0
      %v227 = vadd.f32 %v224, %v226
      %v228 = vsel %vm213, 1, 0
      %vm229 = vcmp.eq.s32.totalorder %v228, 1
      %v230 = vsel %vm229, %v227, 0.0
      %vm231 = vcmask 32768
      %232 = vst.msk [vmem:[%s152] sm:$0x1] %vm231, %v230
      %vm233 = vcmp.gt.f32.partialorder %v212, 0.3
      %vm234 = vmor %vm179, %vm233
      %vm235 = vmand %vm229, %vm234
      %v236 = vsel %vm235, 0.0, %v153
      %v237 = vsel %vm170, %v236, -inf
      %238 = vmax.xlane.f32.xlu0 %v237
      %v239 = vpop.xlane.xlu0 %238
      %vm240 = vcmp.ge.f32.partialorder %v236, %v239
      %v241 = vsel %vm240, %v169, 128.0
      %v242 = vsel %vm170, %v241, inf
      %243 = vmin.xlane.f32.xlu0 %v242
      %v244 = vpop.xlane.xlu0 %243
      %vm245 = vcmp.eq.f32.partialorder %v169, %v244
      %v246 = vsel %vm245, %v159, 0.0
      %v247 = vsel %vm170, %v246, 0.0
      %248 = vadd.xlane.f32.xlu0 %v247
      %v249 = vpop.xlane.xlu0 %248
      %v250 = vsel %vm245, %v161, 0.0
      %v251 = vsel %vm170, %v250, 0.0
      %252 = vadd.xlane.f32.xlu0 %v251
      %v253 = vpop.xlane.xlu0 %252
      %v254 = vsel %vm245, %v162, 0.0
      %v255 = vsel %vm170, %v254, 0.0
      %256 = vadd.xlane.f32.xlu0 %v255
      %v257 = vpop.xlane.xlu0 %256
      %v258 = vsel %vm245, %v163, 0.0
      %v259 = vsel %vm170, %v258, 0.0
      %260 = vadd.xlane.f32.xlu0 %v259
      %v261 = vpop.xlane.xlu0 %260
      %v262 = vsub.f32 %v257, %v249
      %v263 = vsub.f32 %v261, %v253
      %v264 = vmul.f32 %v262, %v263
      %v265 = vmin.f32 %v162, %v257
      %v266 = vmax.f32 %v159, %v249
      %v267 = vsub.f32 %v265, %v266
      %v268 = vmax.f32 %v267, 0.0
      %v269 = vmin.f32 %v163, %v261
      %v270 = vmax.f32 %v161, %v253
      %v271 = vsub.f32 %v269, %v270
      %v272 = vmax.f32 %v271, 0.0
      %v273 = vmul.f32 %v268, %v272
      %v274 = vadd.f32 %v166, %v264
      %v275 = vsub.f32 %v274, %v273
      %v276 = vmax.f32 %v275, 1e-12
      %v277 = vrcp.pop %v276
      %v278 = vmul.f32 %v273, %v277
      %vm279 = vcmp.gt.f32.partialorder %v239, 0.05
      %v280 = vsel %vm214, %v239, 0.0
      %v281 = vsel %vm216, %v249, 0.0
      %v282 = vadd.f32 %v280, %v281
      %v283 = vsel %vm219, %v253, 0.0
      %v284 = vadd.f32 %v282, %v283
      %v285 = vsel %vm222, %v257, 0.0
      %v286 = vadd.f32 %v284, %v285
      %v287 = vsel %vm225, %v261, 0.0
      %v288 = vadd.f32 %v286, %v287
      %v289 = vsel %vm279, 1, 0
      %vm290 = vcmp.eq.s32.totalorder %v289, 1
      %v291 = vsel %vm290, %v288, 0.0
      %292 = vst.msk [vmem:[%s152 + $0x1] sm:$0x1] %vm231, %v291
      %vm293 = vcmp.gt.f32.partialorder %v278, 0.3
      %vm294 = vmor %vm245, %vm293
      %vm295 = vmand %vm290, %vm294
      %v296 = vsel %vm295, 0.0, %v236
      %v297 = vsel %vm170, %v296, -inf
      %298 = vmax.xlane.f32.xlu0 %v297
      %v299 = vpop.xlane.xlu0 %298
      %vm300 = vcmp.ge.f32.partialorder %v296, %v299
      %v301 = vsel %vm300, %v169, 128.0
      %v302 = vsel %vm170, %v301, inf
      %303 = vmin.xlane.f32.xlu0 %v302
      %v304 = vpop.xlane.xlu0 %303
      %vm305 = vcmp.eq.f32.partialorder %v169, %v304
      %v306 = vsel %vm305, %v159, 0.0
      %v307 = vsel %vm170, %v306, 0.0
      %308 = vadd.xlane.f32.xlu0 %v307
      %v309 = vpop.xlane.xlu0 %308
      %v310 = vsel %vm305, %v161, 0.0
      %v311 = vsel %vm170, %v310, 0.0
      %312 = vadd.xlane.f32.xlu0 %v311
      %v313 = vpop.xlane.xlu0 %312
      %v314 = vsel %vm305, %v162, 0.0
      %v315 = vsel %vm170, %v314, 0.0
      %316 = vadd.xlane.f32.xlu0 %v315
      %v317 = vpop.xlane.xlu0 %316
      %v318 = vsel %vm305, %v163, 0.0
      %v319 = vsel %vm170, %v318, 0.0
      %320 = vadd.xlane.f32.xlu0 %v319
      %v321 = vpop.xlane.xlu0 %320
      %v322 = vsub.f32 %v317, %v309
      %v323 = vsub.f32 %v321, %v313
      %v324 = vmul.f32 %v322, %v323
      %v325 = vmin.f32 %v162, %v317
      %v326 = vmax.f32 %v159, %v309
      %v327 = vsub.f32 %v325, %v326
      %v328 = vmax.f32 %v327, 0.0
      %v329 = vmin.f32 %v163, %v321
      %v330 = vmax.f32 %v161, %v313
      %v331 = vsub.f32 %v329, %v330
      %v332 = vmax.f32 %v331, 0.0
      %v333 = vmul.f32 %v328, %v332
      %v334 = vadd.f32 %v166, %v324
      %v335 = vsub.f32 %v334, %v333
      %v336 = vmax.f32 %v335, 1e-12
      %v337 = vrcp.pop %v336
      %v338 = vmul.f32 %v333, %v337
      %vm339 = vcmp.gt.f32.partialorder %v299, 0.05
      %v340 = vsel %vm214, %v299, 0.0
      %v341 = vsel %vm216, %v309, 0.0
      %v342 = vadd.f32 %v340, %v341
      %v343 = vsel %vm219, %v313, 0.0
      %v344 = vadd.f32 %v342, %v343
      %v345 = vsel %vm222, %v317, 0.0
      %v346 = vadd.f32 %v344, %v345
      %v347 = vsel %vm225, %v321, 0.0
      %v348 = vadd.f32 %v346, %v347
      %v349 = vsel %vm339, 1, 0
      %vm350 = vcmp.eq.s32.totalorder %v349, 1
      %v351 = vsel %vm350, %v348, 0.0
      %352 = vst.msk [vmem:[%s152 + $0x2] sm:$0x1] %vm231, %v351
      %vm353 = vcmp.gt.f32.partialorder %v338, 0.3
      %vm354 = vmor %vm305, %vm353
      %vm355 = vmand %vm350, %vm354
      %v356 = vsel %vm355, 0.0, %v296
      %v357 = vsel %vm170, %v356, -inf
      %358 = vmax.xlane.f32.xlu0 %v357
      %v359 = vpop.xlane.xlu0 %358
      %vm360 = vcmp.ge.f32.partialorder %v356, %v359
      %v361 = vsel %vm360, %v169, 128.0
      %v362 = vsel %vm170, %v361, inf
      %363 = vmin.xlane.f32.xlu0 %v362
      %v364 = vpop.xlane.xlu0 %363
      %vm365 = vcmp.eq.f32.partialorder %v169, %v364
      %v366 = vsel %vm365, %v159, 0.0
      %v367 = vsel %vm170, %v366, 0.0
      %368 = vadd.xlane.f32.xlu0 %v367
      %v369 = vpop.xlane.xlu0 %368
      %v370 = vsel %vm365, %v161, 0.0
      %v371 = vsel %vm170, %v370, 0.0
      %372 = vadd.xlane.f32.xlu0 %v371
      %v373 = vpop.xlane.xlu0 %372
      %v374 = vsel %vm365, %v162, 0.0
      %v375 = vsel %vm170, %v374, 0.0
      %376 = vadd.xlane.f32.xlu0 %v375
      %v377 = vpop.xlane.xlu0 %376
      %v378 = vsel %vm365, %v163, 0.0
      %v379 = vsel %vm170, %v378, 0.0
      %380 = vadd.xlane.f32.xlu0 %v379
      %v381 = vpop.xlane.xlu0 %380
      %v382 = vsub.f32 %v377, %v369
      %v383 = vsub.f32 %v381, %v373
      %v384 = vmul.f32 %v382, %v383
      %v385 = vmin.f32 %v162, %v377
      %v386 = vmax.f32 %v159, %v369
      %v387 = vsub.f32 %v385, %v386
      %v388 = vmax.f32 %v387, 0.0
      %v389 = vmin.f32 %v163, %v381
      %v390 = vmax.f32 %v161, %v373
      %v391 = vsub.f32 %v389, %v390
      %v392 = vmax.f32 %v391, 0.0
      %v393 = vmul.f32 %v388, %v392
      %v394 = vadd.f32 %v166, %v384
      %v395 = vsub.f32 %v394, %v393
      %v396 = vmax.f32 %v395, 1e-12
      %v397 = vrcp.pop %v396
      %v398 = vmul.f32 %v393, %v397
      %vm399 = vcmp.gt.f32.partialorder %v359, 0.05
      %v400 = vsel %vm214, %v359, 0.0
      %v401 = vsel %vm216, %v369, 0.0
      %v402 = vadd.f32 %v400, %v401
      %v403 = vsel %vm219, %v373, 0.0
      %v404 = vadd.f32 %v402, %v403
      %v405 = vsel %vm222, %v377, 0.0
      %v406 = vadd.f32 %v404, %v405
      %v407 = vsel %vm225, %v381, 0.0
      %v408 = vadd.f32 %v406, %v407
      %v409 = vsel %vm399, 1, 0
      %vm410 = vcmp.eq.s32.totalorder %v409, 1
      %v411 = vsel %vm410, %v408, 0.0
      %412 = vst.msk [vmem:[%s152 + $0x3] sm:$0x1] %vm231, %v411
      %vm413 = vcmp.gt.f32.partialorder %v398, 0.3
      %vm414 = vmor %vm365, %vm413
      %vm415 = vmand %vm410, %vm414
      %v416 = vsel %vm415, 0.0, %v356
      %v417 = vsel %vm170, %v416, -inf
      %418 = vmax.xlane.f32.xlu0 %v417
      %v419 = vpop.xlane.xlu0 %418
      %vm420 = vcmp.ge.f32.partialorder %v416, %v419
      %v421 = vsel %vm420, %v169, 128.0
      %v422 = vsel %vm170, %v421, inf
      %423 = vmin.xlane.f32.xlu0 %v422
      %v424 = vpop.xlane.xlu0 %423
      %vm425 = vcmp.eq.f32.partialorder %v169, %v424
      %v426 = vsel %vm425, %v159, 0.0
      %v427 = vsel %vm170, %v426, 0.0
      %428 = vadd.xlane.f32.xlu0 %v427
      %v429 = vpop.xlane.xlu0 %428
      %v430 = vsel %vm425, %v161, 0.0
      %v431 = vsel %vm170, %v430, 0.0
      %432 = vadd.xlane.f32.xlu0 %v431
      %v433 = vpop.xlane.xlu0 %432
      %v434 = vsel %vm425, %v162, 0.0
      %v435 = vsel %vm170, %v434, 0.0
      %436 = vadd.xlane.f32.xlu0 %v435
      %v437 = vpop.xlane.xlu0 %436
      %v438 = vsel %vm425, %v163, 0.0
      %v439 = vsel %vm170, %v438, 0.0
      %440 = vadd.xlane.f32.xlu0 %v439
      %v441 = vpop.xlane.xlu0 %440
      %vm442 = vcmp.gt.f32.partialorder %v419, 0.05
      %v443 = vsel %vm214, %v419, 0.0
      %v444 = vsel %vm216, %v429, 0.0
      %v445 = vadd.f32 %v443, %v444
      %v446 = vsel %vm219, %v433, 0.0
      %v447 = vadd.f32 %v445, %v446
      %v448 = vsel %vm222, %v437, 0.0
      %v449 = vadd.f32 %v447, %v448
      %v450 = vsel %vm225, %v441, 0.0
      %v451 = vadd.f32 %v449, %v450
      %v452 = vsel %vm442, 1, 0
      %vm453 = vcmp.eq.s32.totalorder %v452, 1
      %v454 = vsel %vm453, %v451, 0.0
      %455 = vst.msk [vmem:[%s152 + $0x4] sm:$0x1] %vm231, %v454
      %p456 = scmp.lt.s32.totalorder %s13, 1
      %s457 = scalar_select %p456, %s13, 1
      %s458 = smul.addr %s457, 8
      %s459 = scalar_lea.vmem %s2, %s458
      // Predicated region
      $region29: #{detect_forward.3} parent=27 // pred_check
        %p460 = pneg %p83
      $region30: #{detect_forward.3} parent=27 // pred_check_branch
        %462 = sbr.rel (%p460) target = $region32
      $region31: #{detect_forward.3} parent=27 // pred_region
        _
      $region32: #{detect_forward.3} parent=27 // pred_fallthru
        _
    $region28: #{detect_forward.3} parent=5 // pred_fallthru
      _
    %p463 = scmp.le.s32.totalorder 2, %s8
    // Predicated region
    $region33: #{detect_forward.3} parent=5 // pred_check
      %p464 = pneg %p463
    $region34: #{detect_forward.3} parent=5 // pred_check_branch
      %466 = sbr.rel (%p464) target = $region36
    $region35: #{detect_forward.3} parent=5 // pred_region
      %s467 = ssub.s32 %s8, 2
      // Predicated region
      $region37: #{detect_forward.3} parent=35 // pred_check
        %p468 = pneg %p89
      $region38: #{detect_forward.3} parent=35 // pred_check_branch
        %470 = sbr.rel (%p468) target = $region40
      $region39: #{detect_forward.3} parent=35 // pred_region
        %p471 = scmp.lt.s32.totalorder %s14, 1
        %s472 = scalar_select %p471, %s14, 1
        %s473 = smul.addr %s472, 8
        %s474 = scalar_lea.vmem %s2, %s473
      $region40: #{detect_forward.3} parent=35 // pred_fallthru
        _
    $region36: #{detect_forward.3} parent=5 // pred_fallthru
      _
  $region6: #{detect_forward.3} parent=0 // loop_footer
    %s12 = sadd.s32 1, %s8
  $region7: #{detect_forward.3} parent=0 // loop_footer_branch
    %7 = sbr.rel target = $region3
  $region8: #{detect_forward.3} parent=0 // loop_exit
    _

</llo_original>
